<compile_context>
chip_gen: v5e
topology: v5e:2x2
jax: 0.10.0
libtpu: 0.0.40
codegen_flags: <defaults>
</compile_context>

<pallas_src>
import functools

import jax
import jax.numpy as jnp
from jax.experimental import pallas as pl
from jax.experimental.pallas import tpu as pltpu

LANE = 128          # TPU lane width; all channel dims are padded to a multiple of this.
OUT_LANES = 128     # packed output slab width (pred + aux share one lane-dense slab)
AUX_LANE_OFF = 64   # aux classes start at this lane inside the packed slab
F1_LEFT_HALO = 16   # bf16 sublane tile: left halo so the feat1 interior store is aligned


def _round_up(n, m):
    return ((n + m - 1) // m) * m


# ---------------------------------------------------------------------------
# Fused Pallas kernel: whole ModelBuilder forward for one batch element.
# ---------------------------------------------------------------------------
def _model_fwd_kernel(patches_ref, w1_ref, b1_ref, w2a_ref, b2a_ref,
                      whead_ref, bhead_ref, out_ref, f1_ref, *, H, W):
    HW = H * W
    C1P = f1_ref.shape[-1]
    WL = F1_LEFT_HALO

    # Zero the feat1 halo scratch.  Deliberately done EVERY step (not gated on
    # program_id == 0): with the batch grid axis marked "parallel" each TensorCore
    # gets its own scratch instance and may start at a nonzero program_id, so a
    # pid==0-gated init is unsafe.  The scratch is bf16 (~150 KiB) -> ~40 stores.
    f1_ref[...] = jnp.zeros(f1_ref.shape, f1_ref.dtype)

    # ---- encoder stage 1: single K = 9*CIN matmul over wrapper-built patches --------
    # BN scale is folded into w1; epilogue is bias + ReLU only.
    acc1 = jnp.dot(patches_ref[0], w1_ref[...], preferred_element_type=jnp.float32)
    feat1 = jnp.maximum(acc1 + b1_ref[...], 0.0)                     # (HW, C1P) f32
    # Aligned interior store: sublane offset WL (= bf16 tile), width W (full tile).
    f1_ref[1:H + 1, WL:WL + W, :] = feat1.astype(f1_ref.dtype).reshape(H, W, C1P)

    # ---- fused encoder-stage-2 + aux 3x3 conv --------------------------------------
    # In-VMEM im2col of feat1: nine shifted bf16 windows (each 128 lanes -> aligned
    # lane-concat), then ONE dot with the concatenated (9*C1P, C2P+AUXP) weight.
    wins = []
    for k in range(9):
        dy, dx = divmod(k, 3)
        c0 = WL - 1 + dx
        wins.append(f1_ref[dy:dy + H, c0:c0 + W, :].reshape(HW, C1P))
    lhs2 = jnp.concatenate(wins, axis=-1)                            # (HW, 9*C1P) bf16
    acc2a = jnp.dot(lhs2, w2a_ref[...], preferred_element_type=jnp.float32)
    feat2a = jnp.maximum(acc2a + b2a_ref[...], 0.0).astype(jnp.bfloat16)   # (HW, 256)

    # ---- packed 1x1 heads: block-diagonal weight, one lane-dense (HW, 128) store ----
    # pred occupies lanes [0, AUX_LANE_OFF), aux occupies [AUX_LANE_OFF, OUT_LANES).
    out = jnp.dot(feat2a, whead_ref[...], preferred_element_type=jnp.float32) + bhead_ref[...]
    out_ref[0] = out


def _full_spec(arr):
    n = arr.ndim
    return pl.BlockSpec(arr.shape, lambda b, _n=n: (0,) * _n)


def _pallas_forward(patches, p, *, H, W):
    B = patches.shape[0]
    KP = patches.shape[-1]
    HW = H * W
    C1P = p["w1"].shape[-1]

    grid_spec = pltpu.PrefetchScalarGridSpec(
        num_scalar_prefetch=0,
        grid=(B,),
        in_specs=[
            pl.BlockSpec((1, HW, KP), lambda b: (b, 0, 0)),
            _full_spec(p["w1"]), _full_spec(p["b1"]),
            _full_spec(p["w2a"]), _full_spec(p["b2a"]),
            _full_spec(p["whead"]), _full_spec(p["bhead"]),
        ],
        out_specs=pl.BlockSpec((1, HW, OUT_LANES), lambda b: (b, 0, 0)),
        scratch_shapes=[pltpu.VMEM((H + 2, F1_LEFT_HALO + W + 1, C1P), jnp.bfloat16)],
    )

    kernel = functools.partial(_model_fwd_kernel, H=H, W=W)
    return pl.pallas_call(
        kernel,
        out_shape=jax.ShapeDtypeStruct((B, HW, OUT_LANES), jnp.float32),
        grid_spec=grid_spec,
        compiler_params=pltpu.CompilerParams(
            dimension_semantics=("parallel",),     # batch axis shards across v7x TensorCores
            vmem_limit_bytes=32 * 1024 * 1024,     # explicit (raises v5e's 16 MiB default)
        ),
    )(patches, p["w1"], p["b1"], p["w2a"], p["b2a"], p["whead"], p["bhead"])


# ---------------------------------------------------------------------------
# Wrapper: ModelBuilder.forward (aux_loss=True, fpn=False branch)
# ---------------------------------------------------------------------------
def _im2col_first_layer(x_nchw):
    """NCHW -> bf16 NHWC 3x3 patches, flattened to (B, H*W, KP) with KP = ceil128(9*CIN)."""
    B, CIN, H, W = x_nchw.shape
    x = jnp.transpose(x_nchw, (0, 2, 3, 1)).astype(jnp.bfloat16)
    xp = jnp.pad(x, ((0, 0), (1, 1), (1, 1), (0, 0)))
    wins = [xp[:, dy:dy + H, dx:dx + W, :] for dy in range(3) for dx in range(3)]
    patches = jnp.concatenate(wins, axis=-1).reshape(B, H * W, 9 * CIN)
    kp = _round_up(9 * CIN, LANE)
    return jnp.pad(patches, ((0, 0), (0, 0), (0, kp - 9 * CIN)))


def model_builder_forward(params, x_nchw, *, num_classes):
    B, _, H, W = x_nchw.shape
    patches = _im2col_first_layer(x_nchw)
    slab = _pallas_forward(patches, params, H=H, W=W)      # (B, H*W, 128) packed pred||aux

    def to_nchw(lane_off):
        y = slab[:, :, lane_off:lane_off + num_classes]
        return jnp.transpose(y.reshape(B, H, W, num_classes), (0, 3, 1, 2))

    return {"pred": to_nchw(0), "aux": to_nchw(AUX_LANE_OFF)}


# ---------------------------------------------------------------------------
# Parameter construction (PyTorch-like logical shapes) + folding/packing.
# ---------------------------------------------------------------------------
def make_params(key, cin, c1, c2, aux_mid, num_classes):
    ks = jax.random.split(key, 8)

    def nrm(k, shape, fan_in):
        return jax.random.normal(k, shape, jnp.float32) * (1.0 / jnp.sqrt(fan_in))

    return {
        "enc1_w": nrm(ks[0], (3, 3, cin, c1), 9 * cin),
        "enc1_scale": jnp.ones((c1,), jnp.float32),
        "enc1_bias": jnp.zeros((c1,), jnp.float32),
        "enc2_w": nrm(ks[1], (3, 3, c1, c2), 9 * c1),
        "enc2_scale": jnp.ones((c2,), jnp.float32),
        "enc2_bias": jnp.zeros((c2,), jnp.float32),
        "dec_w": nrm(ks[2], (c2, num_classes), c2),
        "dec_b": jnp.zeros((num_classes,), jnp.float32),
        "aux_conv_w": nrm(ks[3], (3, 3, c1, aux_mid), 9 * c1),
        "aux_scale": jnp.ones((aux_mid,), jnp.float32),
        "aux_bias": jnp.zeros((aux_mid,), jnp.float32),
        "aux_cls_w": nrm(ks[4], (aux_mid, num_classes), aux_mid),
        "aux_cls_b": jnp.zeros((num_classes,), jnp.float32),
    }


def prepare_params(raw, *, lane=LANE):
    """Fold BN scales into the conv weights, fuse stage-2 || aux and the two 1x1 heads,
    pad every channel dim to the 128-lane width, cast matmul weights to bf16."""
    # TODO(synk): real BatchNorm running stats must be pre-folded into (scale, bias)
    #             before calling this; validate against a real checkpoint.
    def pad_to(a, axis, target):
        extra = target - a.shape[axis]
        if extra <= 0:
            return a
        widths = [(0, 0)] * a.ndim
        widths[axis] = (0, extra)
        return jnp.pad(a, widths)

    cin = raw["enc1_w"].shape[2]
    c1 = raw["enc1_w"].shape[3]
    c2 = raw["enc2_w"].shape[3]
    aux_mid = raw["aux_conv_w"].shape[3]
    nc = raw["dec_b"].shape[0]
    assert nc <= AUX_LANE_OFF and AUX_LANE_OFF + nc <= OUT_LANES
    assert c2 <= _round_up(c2, lane) and aux_mid <= _round_up(aux_mid, lane)

    c1p = _round_up(c1, lane)
    c2p = _round_up(c2, lane)
    auxp = _round_up(aux_mid, lane)
    kp = _round_up(9 * cin, lane)

    # Stage-1: fold BN scale, flatten the 9 taps into the contraction dim -> (KP, C1P).
    w1 = (raw["enc1_w"] * raw["enc1_scale"]).reshape(9 * cin, c1)
    w1 = pad_to(pad_to(w1, 0, kp), 1, c1p).astype(jnp.bfloat16)
    b1 = pad_to(raw["enc1_bias"], 0, c1p).reshape(1, -1).astype(jnp.float32)

    # Fused stage-2 + aux 3x3 conv: concat along Cout, fold scales -> (9*C1P, C2P+AUXP).
    w2 = pad_to(pad_to(raw["enc2_w"] * raw["enc2_scale"], 2, c1p), 3, c2p)
    wa = pad_to(pad_to(raw["aux_conv_w"] * raw["aux_scale"], 2, c1p), 3, auxp)
    w2a = jnp.concatenate([w2, wa], axis=3).reshape(9 * c1p, c2p + auxp).astype(jnp.bfloat16)
    b2a = jnp.concatenate([pad_to(raw["enc2_bias"], 0, c2p),
                           pad_to(raw["aux_bias"], 0, auxp)]).reshape(1, -1).astype(jnp.float32)

    # Packed 1x1 heads: block-diagonal (C2P+AUXP, 128); pred -> lanes [0, 64), aux -> [64, 128).
    wh = jnp.zeros((c2p + auxp, OUT_LANES), jnp.float32)
    wh = wh.at[:c2, :nc].set(raw["dec_w"])
    wh = wh.at[c2p:c2p + aux_mid, AUX_LANE_OFF:AUX_LANE_OFF + nc].set(raw["aux_cls_w"])
    bh = jnp.zeros((1, OUT_LANES), jnp.float32)
    bh = bh.at[0, :nc].set(raw["dec_b"])
    bh = bh.at[0, AUX_LANE_OFF:AUX_LANE_OFF + nc].set(raw["aux_cls_b"])

    return {"w1": w1, "b1": b1, "w2a": w2a, "b2a": b2a,
            "whead": wh.astype(jnp.bfloat16), "bhead": bh}


# ---------------------------------------------------------------------------
# Pure-JAX reference (mirrors the kernel's bf16-matmul / f32-epilogue math).
# ---------------------------------------------------------------------------
def reference_forward(raw, x_nchw):
    x = jnp.transpose(x_nchw, (0, 2, 3, 1)).astype(jnp.float32)

    def conv3x3_bn_relu(x, w, s, b):
        N, H, W, C = x.shape
        xp = jnp.pad(x.astype(jnp.bfloat16), ((0, 0), (1, 1), (1, 1), (0, 0)))
        wb = w.astype(jnp.bfloat16)
        acc = jnp.zeros((N, H, W, w.shape[-1]), jnp.float32)
        for dy in range(3):
            for dx in range(3):
                acc = acc + jnp.einsum("nhwc,co->nhwo",
                                       xp[:, dy:dy + H, dx:dx + W, :], wb[dy, dx],
                                       preferred_element_type=jnp.float32)
        return jnp.maximum(acc * s + b, 0.0)

    def conv1x1(x, w, b):
        return jnp.einsum("nhwc,co->nhwo", x.astype(jnp.bfloat16),
                          w.astype(jnp.bfloat16),
                          preferred_element_type=jnp.float32) + b

    feat1 = conv3x3_bn_relu(x, raw["enc1_w"], raw["enc1_scale"], raw["enc1_bias"])
    feat2 = conv3x3_bn_relu(feat1, raw["enc2_w"], raw["enc2_scale"], raw["enc2_bias"])
    pred = conv1x1(feat2, raw["dec_w"], raw["dec_b"])
    aux_feat = conv3x3_bn_relu(feat1, raw["aux_conv_w"], raw["aux_scale"], raw["aux_bias"])
    pred_aux = conv1x1(aux_feat, raw["aux_cls_w"], raw["aux_cls_b"])
    return {"pred": jnp.transpose(pred, (0, 3, 1, 2)),
            "aux": jnp.transpose(pred_aux, (0, 3, 1, 2))}


if __name__ == "__main__":
    key = jax.random.PRNGKey(0)
    k_x, k_p = jax.random.split(key)

    # small shapes: batch=2, in_channels=4, H=W=16
    B, CIN, H, W = 2, 4, 16, 16
    C1, C2, AUX_MID, NUM_CLASSES = 8, 16, 32, 4

    x = jax.random.normal(k_x, (B, CIN, H, W), jnp.float32)   # NCHW like PyTorch
    raw = make_params(k_p, CIN, C1, C2, AUX_MID, NUM_CLASSES)
    params = prepare_params(raw)

    fwd = jax.jit(functools.partial(model_builder_forward, num_classes=NUM_CLASSES))
    outs = fwd(params, x)
    jax.block_until_ready(outs)

    assert outs["pred"].shape == (B, NUM_CLASSES, H, W)
    assert outs["aux"].shape == (B, NUM_CLASSES, H, W)
    assert jnp.all(jnp.isfinite(outs["pred"])) and jnp.all(jnp.isfinite(outs["aux"]))

    ref = jax.jit(reference_forward)(raw, x)
    assert jnp.allclose(outs["pred"], ref["pred"], rtol=2e-2, atol=2e-2)
    assert jnp.allclose(outs["aux"], ref["aux"], rtol=2e-2, atol=2e-2)

    print("KERNEL_OK")
</pallas_src>

<mosaic_0001>
module attributes {stable_mosaic.version = 11 : i64} {
  func.func @_model_fwd_kernel(%arg0: i32, %arg1: memref<1x256x128xbf16, #tpu.memory_space<vmem>>, %arg2: memref<128x128xbf16, #tpu.memory_space<vmem>>, %arg3: memref<1x128xf32, #tpu.memory_space<vmem>>, %arg4: memref<1152x256xbf16, #tpu.memory_space<vmem>>, %arg5: memref<1x256xf32, #tpu.memory_space<vmem>>, %arg6: memref<256x128xbf16, #tpu.memory_space<vmem>>, %arg7: memref<1x128xf32, #tpu.memory_space<vmem>>, %arg8: memref<1x256x128xf32, #tpu.memory_space<vmem>>, %arg9: memref<18x33x128xbf16, #tpu.memory_space<vmem>>) attributes {dimension_semantics = [#tpu.dimension_semantics<parallel>], iteration_bounds = array<i64: 2>, scalar_prefetch = 0 : i64, scratch_operands = 1 : i64, tpu.core_type = #tpu.core_type<tc>, window_params = [{transform_indices = @transform_0, window_bounds = array<i64: 1, 256, 128>}, {pipeline_mode = #tpu.pipeline_mode<synchronous>, transform_indices = @transform_1, window_bounds = array<i64: 128, 128>}, {pipeline_mode = #tpu.pipeline_mode<synchronous>, transform_indices = @transform_2, window_bounds = array<i64: 1, 128>}, {pipeline_mode = #tpu.pipeline_mode<synchronous>, transform_indices = @transform_3, window_bounds = array<i64: 1152, 256>}, {pipeline_mode = #tpu.pipeline_mode<synchronous>, transform_indices = @transform_4, window_bounds = array<i64: 1, 256>}, {pipeline_mode = #tpu.pipeline_mode<synchronous>, transform_indices = @transform_5, window_bounds = array<i64: 256, 128>}, {pipeline_mode = #tpu.pipeline_mode<synchronous>, transform_indices = @transform_6, window_bounds = array<i64: 1, 128>}, {transform_indices = @transform_7, window_bounds = array<i64: 1, 256, 128>}]} {
    %cst = arith.constant 0.000000e+00 : bf16
    %0 = vector.broadcast %cst : bf16 to vector<18x33x128xbf16>
    %c0 = arith.constant 0 : index
    %c0_0 = arith.constant 0 : index
    %c0_1 = arith.constant 0 : index
    %1 = vector.load %arg9[%c0, %c0_0, %c0_1] : memref<18x33x128xbf16, #tpu.memory_space<vmem>>, vector<18x33x128xbf16>
    tpu.vector_store %arg9[%c0, %c0_0, %c0_1], %0 {strides = array<i32>} : memref<18x33x128xbf16, #tpu.memory_space<vmem>>, vector<18x33x128xbf16>,
    %c0_2 = arith.constant 0 : index
    %c0_3 = arith.constant 0 : index
    %c0_4 = arith.constant 0 : index
    %2 = vector.load %arg1[%c0_2, %c0_3, %c0_4] : memref<1x256x128xbf16, #tpu.memory_space<vmem>>, vector<1x256x128xbf16>
    %3 = vector.shape_cast %2 : vector<1x256x128xbf16> to vector<256x128xbf16>
    %c0_5 = arith.constant 0 : index
    %c0_6 = arith.constant 0 : index
    %4 = vector.load %arg2[%c0_5, %c0_6] : memref<128x128xbf16, #tpu.memory_space<vmem>>, vector<128x128xbf16>
    %cst_7 = arith.constant dense<0.000000e+00> : vector<256x128xf32>
    %5 = tpu.matmul %3, %4, %cst_7 {dimension_numbers = #tpu.dot_dimension_numbers<[1], [0], [0], [1], [0, 0, 1, 1], [], []>} : vector<256x128xbf16>, vector<128x128xbf16>, vector<256x128xf32> -> vector<256x128xf32>
    %c0_8 = arith.constant 0 : index
    %c0_9 = arith.constant 0 : index
    %6 = vector.load %arg3[%c0_8, %c0_9] : memref<1x128xf32, #tpu.memory_space<vmem>>, vector<1x128xf32>
    %7 = vector.broadcast %6 : vector<1x128xf32> to vector<256x128xf32>
    %8 = arith.addf %5, %7 : vector<256x128xf32>
    %cst_10 = arith.constant 0.000000e+00 : f32
    %9 = vector.broadcast %cst_10 : f32 to vector<256x128xf32>
    %10 = arith.maximumf %8, %9 : vector<256x128xf32>
    %11 = arith.truncf %10 : vector<256x128xf32> to vector<256x128xbf16>
    %12 = vector.shape_cast %11 : vector<256x128xbf16> to vector<16x16x128xbf16>
    %c1 = arith.constant 1 : index
    %c16 = arith.constant 16 : index
    %c0_11 = arith.constant 0 : index
    %13 = vector.load %arg9[%c1, %c16, %c0_11] : memref<18x33x128xbf16, #tpu.memory_space<vmem>>, vector<16x16x128xbf16>
    tpu.vector_store %arg9[%c1, %c16, %c0_11], %12 {strides = array<i32>} : memref<18x33x128xbf16, #tpu.memory_space<vmem>>, vector<16x16x128xbf16>,
    %c0_12 = arith.constant 0 : index
    %c15 = arith.constant 15 : index
    %c0_13 = arith.constant 0 : index
    %14 = vector.load %arg9[%c0_12, %c15, %c0_13] : memref<18x33x128xbf16, #tpu.memory_space<vmem>>, vector<16x16x128xbf16>
    %15 = vector.shape_cast %14 : vector<16x16x128xbf16> to vector<256x128xbf16>
    %c0_14 = arith.constant 0 : index
    %c16_15 = arith.constant 16 : index
    %c0_16 = arith.constant 0 : index
    %16 = vector.load %arg9[%c0_14, %c16_15, %c0_16] : memref<18x33x128xbf16, #tpu.memory_space<vmem>>, vector<16x16x128xbf16>
    %17 = vector.shape_cast %16 : vector<16x16x128xbf16> to vector<256x128xbf16>
    %c0_17 = arith.constant 0 : index
    %c17 = arith.constant 17 : index
    %c0_18 = arith.constant 0 : index
    %18 = vector.load %arg9[%c0_17, %c17, %c0_18] : memref<18x33x128xbf16, #tpu.memory_space<vmem>>, vector<16x16x128xbf16>
    %19 = vector.shape_cast %18 : vector<16x16x128xbf16> to vector<256x128xbf16>
    %c1_19 = arith.constant 1 : index
    %c15_20 = arith.constant 15 : index
    %c0_21 = arith.constant 0 : index
    %20 = vector.load %arg9[%c1_19, %c15_20, %c0_21] : memref<18x33x128xbf16, #tpu.memory_space<vmem>>, vector<16x16x128xbf16>
    %21 = vector.shape_cast %20 : vector<16x16x128xbf16> to vector<256x128xbf16>
    %c1_22 = arith.constant 1 : index
    %c16_23 = arith.constant 16 : index
    %c0_24 = arith.constant 0 : index
    %22 = vector.load %arg9[%c1_22, %c16_23, %c0_24] : memref<18x33x128xbf16, #tpu.memory_space<vmem>>, vector<16x16x128xbf16>
    %23 = vector.shape_cast %22 : vector<16x16x128xbf16> to vector<256x128xbf16>
    %c1_25 = arith.constant 1 : index
    %c17_26 = arith.constant 17 : index
    %c0_27 = arith.constant 0 : index
    %24 = vector.load %arg9[%c1_25, %c17_26, %c0_27] : memref<18x33x128xbf16, #tpu.memory_space<vmem>>, vector<16x16x128xbf16>
    %25 = vector.shape_cast %24 : vector<16x16x128xbf16> to vector<256x128xbf16>
    %c2 = arith.constant 2 : index
    %c15_28 = arith.constant 15 : index
    %c0_29 = arith.constant 0 : index
    %26 = vector.load %arg9[%c2, %c15_28, %c0_29] : memref<18x33x128xbf16, #tpu.memory_space<vmem>>, vector<16x16x128xbf16>
    %27 = vector.shape_cast %26 : vector<16x16x128xbf16> to vector<256x128xbf16>
    %c2_30 = arith.constant 2 : index
    %c16_31 = arith.constant 16 : index
    %c0_32 = arith.constant 0 : index
    %28 = vector.load %arg9[%c2_30, %c16_31, %c0_32] : memref<18x33x128xbf16, #tpu.memory_space<vmem>>, vector<16x16x128xbf16>
    %29 = vector.shape_cast %28 : vector<16x16x128xbf16> to vector<256x128xbf16>
    %c2_33 = arith.constant 2 : index
    %c17_34 = arith.constant 17 : index
    %c0_35 = arith.constant 0 : index
    %30 = vector.load %arg9[%c2_33, %c17_34, %c0_35] : memref<18x33x128xbf16, #tpu.memory_space<vmem>>, vector<16x16x128xbf16>
    %31 = vector.shape_cast %30 : vector<16x16x128xbf16> to vector<256x128xbf16>
    %32 = tpu.concatenate %15, %17, %19, %21, %23, %25, %27, %29, %31 in 1 : vector<256x128xbf16>, vector<256x128xbf16>, vector<256x128xbf16>, vector<256x128xbf16>, vector<256x128xbf16>, vector<256x128xbf16>, vector<256x128xbf16>, vector<256x128xbf16>, vector<256x128xbf16> -> vector<256x1152xbf16>
    %c0_36 = arith.constant 0 : index
    %c0_37 = arith.constant 0 : index
    %33 = vector.load %arg4[%c0_36, %c0_37] : memref<1152x256xbf16, #tpu.memory_space<vmem>>, vector<1152x256xbf16>
    %cst_38 = arith.constant dense<0.000000e+00> : vector<256x256xf32>
    %34 = tpu.matmul %32, %33, %cst_38 {dimension_numbers = #tpu.dot_dimension_numbers<[1], [0], [0], [1], [0, 0, 1, 1], [], []>} : vector<256x1152xbf16>, vector<1152x256xbf16>, vector<256x256xf32> -> vector<256x256xf32>
    %c0_39 = arith.constant 0 : index
    %c0_40 = arith.constant 0 : index
    %35 = vector.load %arg5[%c0_39, %c0_40] : memref<1x256xf32, #tpu.memory_space<vmem>>, vector<1x256xf32>
    %36 = vector.broadcast %35 : vector<1x256xf32> to vector<256x256xf32>
    %37 = arith.addf %34, %36 : vector<256x256xf32>
    %cst_41 = arith.constant 0.000000e+00 : f32
    %38 = vector.broadcast %cst_41 : f32 to vector<256x256xf32>
    %39 = arith.maximumf %37, %38 : vector<256x256xf32>
    %40 = arith.truncf %39 : vector<256x256xf32> to vector<256x256xbf16>
    %c0_42 = arith.constant 0 : index
    %c0_43 = arith.constant 0 : index
    %41 = vector.load %arg6[%c0_42, %c0_43] : memref<256x128xbf16, #tpu.memory_space<vmem>>, vector<256x128xbf16>
    %cst_44 = arith.constant dense<0.000000e+00> : vector<256x128xf32>
    %42 = tpu.matmul %40, %41, %cst_44 {dimension_numbers = #tpu.dot_dimension_numbers<[1], [0], [0], [1], [0, 0, 1, 1], [], []>} : vector<256x256xbf16>, vector<256x128xbf16>, vector<256x128xf32> -> vector<256x128xf32>
    %c0_45 = arith.constant 0 : index
    %c0_46 = arith.constant 0 : index
    %43 = vector.load %arg7[%c0_45, %c0_46] : memref<1x128xf32, #tpu.memory_space<vmem>>, vector<1x128xf32>
    %44 = vector.broadcast %43 : vector<1x128xf32> to vector<256x128xf32>
    %45 = arith.addf %42, %44 : vector<256x128xf32>
    %c0_47 = arith.constant 0 : index
    %c0_48 = arith.constant 0 : index
    %c0_49 = arith.constant 0 : index
    %46 = vector.load %arg8[%c0_47, %c0_48, %c0_49] : memref<1x256x128xf32, #tpu.memory_space<vmem>>, vector<1x256x128xf32>
    %47 = vector.shape_cast %46 : vector<1x256x128xf32> to vector<256x128xf32>
    %48 = vector.shape_cast %45 : vector<256x128xf32> to vector<1x256x128xf32>
    tpu.vector_store %arg8[%c0_47, %c0_48, %c0_49], %48 {strides = array<i32>} : memref<1x256x128xf32, #tpu.memory_space<vmem>>, vector<1x256x128xf32>,
    return
  }
  func.func @transform_0(%arg0: i32) -> (i32, i32, i32) {
    %c0_i32 = arith.constant 0 : i32
    %c0_i32_0 = arith.constant 0 : i32
    %c0_i32_1 = arith.constant 0 : i32
    return %arg0, %c0_i32, %c0_i32_0 : i32, i32, i32
  }
  func.func @transform_1(%arg0: i32) -> (i32, i32) {
    %c0_i32 = arith.constant 0 : i32
    %c0_i32_0 = arith.constant 0 : i32
    %c0_i32_1 = arith.constant 0 : i32
    return %c0_i32, %c0_i32_0 : i32, i32
  }
  func.func @transform_2(%arg0: i32) -> (i32, i32) {
    %c0_i32 = arith.constant 0 : i32
    %c0_i32_0 = arith.constant 0 : i32
    %c0_i32_1 = arith.constant 0 : i32
    return %c0_i32, %c0_i32_0 : i32, i32
  }
  func.func @transform_3(%arg0: i32) -> (i32, i32) {
    %c0_i32 = arith.constant 0 : i32
    %c0_i32_0 = arith.constant 0 : i32
    %c0_i32_1 = arith.constant 0 : i32
    return %c0_i32, %c0_i32_0 : i32, i32
  }
  func.func @transform_4(%arg0: i32) -> (i32, i32) {
    %c0_i32 = arith.constant 0 : i32
    %c0_i32_0 = arith.constant 0 : i32
    %c0_i32_1 = arith.constant 0 : i32
    return %c0_i32, %c0_i32_0 : i32, i32
  }
  func.func @transform_5(%arg0: i32) -> (i32, i32) {
    %c0_i32 = arith.constant 0 : i32
    %c0_i32_0 = arith.constant 0 : i32
    %c0_i32_1 = arith.constant 0 : i32
    return %c0_i32, %c0_i32_0 : i32, i32
  }
  func.func @transform_6(%arg0: i32) -> (i32, i32) {
    %c0_i32 = arith.constant 0 : i32
    %c0_i32_0 = arith.constant 0 : i32
    %c0_i32_1 = arith.constant 0 : i32
    return %c0_i32, %c0_i32_0 : i32, i32
  }
  func.func @transform_7(%arg0: i32) -> (i32, i32, i32) {
    %c0_i32 = arith.constant 0 : i32
    %c0_i32_0 = arith.constant 0 : i32
    %c0_i32_1 = arith.constant 0 : i32
    return %arg0, %c0_i32, %c0_i32_0 : i32, i32, i32
  }
}

</mosaic_0001>

<llo_original>
// kernel: model_builder_forward.1
$region0: #{model_builder_forward.1}
  #allocation0 [shape = 'u32[]', space=smem, size = 0x4, offset = 0x4, fixed_abs, tag = 'smem constant byte address 0x4 - core index']
  #allocation1 [shape = 'u32[72,128]{1,0:T(1,128)}', space=vmem, size = 0x9000, scoped, tag = 'internal scratch']
  #allocation2 [shape = 'bf16[18,33,128]{2,1,0:T(8,128)(2,1)}', space=vmem, size = 0x2d000, scoped, tag = 'scratch operand']
  %s0 = inlined_call_operand.vmem [shape: bf16[2,256,128], index: 0, kind: input, shape index: {}]
  %s1 = inlined_call_operand.vmem [shape: bf16[128,128], index: 1, kind: input, shape index: {}]
  %s2 = inlined_call_operand.vmem [shape: f32[1,128], index: 2, kind: input, shape index: {}]
  %s3 = inlined_call_operand.vmem [shape: bf16[1152,256], index: 3, kind: input, shape index: {}]
  %s4 = inlined_call_operand.vmem [shape: f32[1,256], index: 4, kind: input, shape index: {}]
  %s5 = inlined_call_operand.vmem [shape: bf16[256,128], index: 5, kind: input, shape index: {}]
  %s6 = inlined_call_operand.vmem [shape: f32[1,128], index: 6, kind: input, shape index: {}]
  %s7 = inlined_call_operand.vmem [shape: f32[2,256,128], index: 7, kind: output, shape index: {}]
  %s8 = sld [smem:[#allocation0]]
  $region61: #{model_builder_forward.1} parent=0
    _
  %s10 = ssub.s32 1, %s8
  %s11 = scalar_select 0, %s10, %s8
  loop: start=0, step=1, limit=4
  $region2: #{model_builder_forward.1} parent=0 // loop_pre_header
    _
  $region3: #{model_builder_forward.1} parent=0 // loop_header
    %s13 = sphi 0, %s17
    %p14 = scmp.ge.s32.totalorder %s13, 4
    %s23 = sphi 0, %s25
    %s26 = sphi 0, %s23
    %s27 = sphi 0, %s26
    %s43 = sphi 0, %s27
    %s47 = sphi 0, %s47
    %s49 = sphi 0, %s47
    %s50 = sphi 0, %s49
    %s64 = sphi 0, %s50
    %s68 = sphi 0, %s68
    %s70 = sphi 0, %s68
    %s71 = sphi 0, %s70
    %s85 = sphi 0, %s71
    %s89 = sphi 0, %s89
    %s91 = sphi 0, %s89
    %s92 = sphi 0, %s91
    %s106 = sphi 0, %s92
    %s110 = sphi 0, %s110
    %s112 = sphi 0, %s110
    %s113 = sphi 0, %s112
    %s127 = sphi 0, %s113
    %s131 = sphi 0, %s131
    %s133 = sphi 0, %s131
    %s134 = sphi 0, %s133
    %s148 = sphi 0, %s134
    %s152 = sphi 0, %s152
    %s154 = sphi 0, %s152
    %s155 = sphi 0, %s154
    %s169 = sphi 0, %s155
    %s175 = sphi 0, %s177
    %s178 = sphi 0, %s175
    %s179 = sphi 0, %s178
    %s195 = sphi 0, %s179
  $region4: #{model_builder_forward.1} parent=0 // loop_header_branch
    %16 = sbr.rel (%p14) target = $region8
  $region5: #{model_builder_forward.1} parent=0 // loop_body
    %s18 = ssub.s32 %s13, 1
    %s19 = ssub.s32 %s13, 2
    %s20 = sadd.s32 %s13, 1
    %s21 = ssub.s32 %s13, %s20
    %p22 = scmp.eq.s32.totalorder %s21, 0
    %s24 = sadd.s32 %s23, 1
    %s25 = scalar_select %p22, %s23, %s24
    %p28 = pneg %p22
    %p29 = scmp.eq.s32.totalorder %s13, 1
    %p30 = por %p28, %p29
    %p31 = scmp.ne.s32.totalorder %s23, %s26
    %p32 = scmp.eq.s32.totalorder %s13, 0
    %p33 = por %p31, %p32
    %p34 = scmp.ne.s32.totalorder %s23, %s26
    %p35 = scmp.eq.s32.totalorder %s18, 1
    %p36 = por %p34, %p35
    %p37 = scmp.ne.s32.totalorder %s26, %s27
    %p38 = scmp.eq.s32.totalorder %s18, 0
    %p39 = por %p37, %p38
    %p40 = scmp.ne.s32.totalorder %s26, %s27
    %p41 = scmp.eq.s32.totalorder %s19, 1
    %p42 = por %p40, %p41
    %p44 = scmp.ne.s32.totalorder %s27, %s43
    %p45 = scmp.eq.s32.totalorder %s19, 0
    %p46 = por %p44, %p45
    %s48 = sadd.s32 %s47, 1
    %p51 = scmp.eq.s32.totalorder %s13, 1
    %p52 = scmp.ne.s32.totalorder %s47, %s49
    %p53 = scmp.eq.s32.totalorder %s13, 0
    %p54 = por %p52, %p53
    %p55 = scmp.ne.s32.totalorder %s47, %s49
    %p56 = scmp.eq.s32.totalorder %s18, 1
    %p57 = por %p55, %p56
    %p58 = scmp.ne.s32.totalorder %s49, %s50
    %p59 = scmp.eq.s32.totalorder %s18, 0
    %p60 = por %p58, %p59
    %p61 = scmp.ne.s32.totalorder %s49, %s50
    %p62 = scmp.eq.s32.totalorder %s19, 1
    %p63 = por %p61, %p62
    %p65 = scmp.ne.s32.totalorder %s50, %s64
    %p66 = scmp.eq.s32.totalorder %s19, 0
    %p67 = por %p65, %p66
    %s69 = sadd.s32 %s68, 1
    %p72 = scmp.eq.s32.totalorder %s13, 1
    %p73 = scmp.ne.s32.totalorder %s68, %s70
    %p74 = scmp.eq.s32.totalorder %s13, 0
    %p75 = por %p73, %p74
    %p76 = scmp.ne.s32.totalorder %s68, %s70
    %p77 = scmp.eq.s32.totalorder %s18, 1
    %p78 = por %p76, %p77
    %p79 = scmp.ne.s32.totalorder %s70, %s71
    %p80 = scmp.eq.s32.totalorder %s18, 0
    %p81 = por %p79, %p80
    %p82 = scmp.ne.s32.totalorder %s70, %s71
    %p83 = scmp.eq.s32.totalorder %s19, 1
    %p84 = por %p82, %p83
    %p86 = scmp.ne.s32.totalorder %s71, %s85
    %p87 = scmp.eq.s32.totalorder %s19, 0
    %p88 = por %p86, %p87
    %s90 = sadd.s32 %s89, 1
    %p93 = scmp.eq.s32.totalorder %s13, 1
    %p94 = scmp.ne.s32.totalorder %s89, %s91
    %p95 = scmp.eq.s32.totalorder %s13, 0
    %p96 = por %p94, %p95
    %p97 = scmp.ne.s32.totalorder %s89, %s91
    %p98 = scmp.eq.s32.totalorder %s18, 1
    %p99 = por %p97, %p98
    %p100 = scmp.ne.s32.totalorder %s91, %s92
    %p101 = scmp.eq.s32.totalorder %s18, 0
    %p102 = por %p100, %p101
    %p103 = scmp.ne.s32.totalorder %s91, %s92
    %p104 = scmp.eq.s32.totalorder %s19, 1
    %p105 = por %p103, %p104
    %p107 = scmp.ne.s32.totalorder %s92, %s106
    %p108 = scmp.eq.s32.totalorder %s19, 0
    %p109 = por %p107, %p108
    %s111 = sadd.s32 %s110, 1
    %p114 = scmp.eq.s32.totalorder %s13, 1
    %p115 = scmp.ne.s32.totalorder %s110, %s112
    %p116 = scmp.eq.s32.totalorder %s13, 0
    %p117 = por %p115, %p116
    %p118 = scmp.ne.s32.totalorder %s110, %s112
    %p119 = scmp.eq.s32.totalorder %s18, 1
    %p120 = por %p118, %p119
    %p121 = scmp.ne.s32.totalorder %s112, %s113
    %p122 = scmp.eq.s32.totalorder %s18, 0
    %p123 = por %p121, %p122
    %p124 = scmp.ne.s32.totalorder %s112, %s113
    %p125 = scmp.eq.s32.totalorder %s19, 1
    %p126 = por %p124, %p125
    %p128 = scmp.ne.s32.totalorder %s113, %s127
    %p129 = scmp.eq.s32.totalorder %s19, 0
    %p130 = por %p128, %p129
    %s132 = sadd.s32 %s131, 1
    %p135 = scmp.eq.s32.totalorder %s13, 1
    %p136 = scmp.ne.s32.totalorder %s131, %s133
    %p137 = scmp.eq.s32.totalorder %s13, 0
    %p138 = por %p136, %p137
    %p139 = scmp.ne.s32.totalorder %s131, %s133
    %p140 = scmp.eq.s32.totalorder %s18, 1
    %p141 = por %p139, %p140
    %p142 = scmp.ne.s32.totalorder %s133, %s134
    %p143 = scmp.eq.s32.totalorder %s18, 0
    %p144 = por %p142, %p143
    %p145 = scmp.ne.s32.totalorder %s133, %s134
    %p146 = scmp.eq.s32.totalorder %s19, 1
    %p147 = por %p145, %p146
    %p149 = scmp.ne.s32.totalorder %s134, %s148
    %p150 = scmp.eq.s32.totalorder %s19, 0
    %p151 = por %p149, %p150
    %s153 = sadd.s32 %s152, 1
    %p156 = scmp.eq.s32.totalorder %s13, 1
    %p157 = scmp.ne.s32.totalorder %s152, %s154
    %p158 = scmp.eq.s32.totalorder %s13, 0
    %p159 = por %p157, %p158
    %p160 = scmp.ne.s32.totalorder %s152, %s154
    %p161 = scmp.eq.s32.totalorder %s18, 1
    %p162 = por %p160, %p161
    %p163 = scmp.ne.s32.totalorder %s154, %s155
    %p164 = scmp.eq.s32.totalorder %s18, 0
    %p165 = por %p163, %p164
    %p166 = scmp.ne.s32.totalorder %s154, %s155
    %p167 = scmp.eq.s32.totalorder %s19, 1
    %p168 = por %p166, %p167
    %p170 = scmp.ne.s32.totalorder %s155, %s169
    %p171 = scmp.eq.s32.totalorder %s19, 0
    %p172 = por %p170, %p171
    %s173 = ssub.s32 %s13, %s20
    %p174 = scmp.eq.s32.totalorder %s173, 0
    %s176 = sadd.s32 %s175, 1
    %s177 = scalar_select %p174, %s175, %s176
    %p180 = pneg %p174
    %p181 = scmp.eq.s32.totalorder %s13, 1
    %p182 = por %p180, %p181
    %p183 = scmp.ne.s32.totalorder %s175, %s178
    %p184 = scmp.eq.s32.totalorder %s13, 0
    %p185 = por %p183, %p184
    %p186 = scmp.ne.s32.totalorder %s175, %s178
    %p187 = scmp.eq.s32.totalorder %s18, 1
    %p188 = por %p186, %p187
    %p189 = scmp.ne.s32.totalorder %s178, %s179
    %p190 = scmp.eq.s32.totalorder %s18, 0
    %p191 = por %p189, %p190
    %p192 = scmp.ne.s32.totalorder %s178, %s179
    %p193 = scmp.eq.s32.totalorder %s19, 1
    %p194 = por %p192, %p193
    %p196 = scmp.ne.s32.totalorder %s179, %s195
    %p197 = scmp.eq.s32.totalorder %s19, 0
    %p198 = por %p196, %p197
    %p199 = scmp.le.s32.totalorder 1, %s13
    %p200 = scmp.lt.s32.totalorder %s13, 3
    %p201 = pnand %p199, %p200
    %p202 = pneg %p201
    // Predicated region
    $region9: #{model_builder_forward.1} parent=5 // pred_check
      _
    $region10: #{model_builder_forward.1} parent=5 // pred_check_branch
      %204 = sbr.rel (%p201) target = $region12
    $region11: #{model_builder_forward.1} parent=5 // pred_region
      %s205 = ssub.s32 %s13, 1
      // Predicated region
      $region13: #{model_builder_forward.1} parent=11 // pred_check
        %p206 = pneg %p60
      $region14: #{model_builder_forward.1} parent=11 // pred_check_branch
        %208 = sbr.rel (%p206) target = $region16
      $region15: #{model_builder_forward.1} parent=11 // pred_region
        _
      $region16: #{model_builder_forward.1} parent=11 // pred_fallthru
        _
      // Predicated region
      $region17: #{model_builder_forward.1} parent=11 // pred_check
        %p209 = pneg %p81
      $region18: #{model_builder_forward.1} parent=11 // pred_check_branch
        %211 = sbr.rel (%p209) target = $region20
      $region19: #{model_builder_forward.1} parent=11 // pred_region
        _
      $region20: #{model_builder_forward.1} parent=11 // pred_fallthru
        _
      // Predicated region
      $region21: #{model_builder_forward.1} parent=11 // pred_check
        %p212 = pneg %p102
      $region22: #{model_builder_forward.1} parent=11 // pred_check_branch
        %214 = sbr.rel (%p212) target = $region24
      $region23: #{model_builder_forward.1} parent=11 // pred_region
        _
      $region24: #{model_builder_forward.1} parent=11 // pred_fallthru
        _
      // Predicated region
      $region25: #{model_builder_forward.1} parent=11 // pred_check
        %p215 = pneg %p123
      $region26: #{model_builder_forward.1} parent=11 // pred_check_branch
        %217 = sbr.rel (%p215) target = $region28
      $region27: #{model_builder_forward.1} parent=11 // pred_region
        _
      $region28: #{model_builder_forward.1} parent=11 // pred_fallthru
        _
      // Predicated region
      $region29: #{model_builder_forward.1} parent=11 // pred_check
        %p218 = pneg %p144
      $region30: #{model_builder_forward.1} parent=11 // pred_check_branch
        %220 = sbr.rel (%p218) target = $region32
      $region31: #{model_builder_forward.1} parent=11 // pred_region
        _
      $region32: #{model_builder_forward.1} parent=11 // pred_fallthru
        _
      // Predicated region
      $region33: #{model_builder_forward.1} parent=11 // pred_check
        %p221 = pneg %p165
      $region34: #{model_builder_forward.1} parent=11 // pred_check_branch
        %223 = sbr.rel (%p221) target = $region36
      $region35: #{model_builder_forward.1} parent=11 // pred_region
        _
      $region36: #{model_builder_forward.1} parent=11 // pred_fallthru
        _
    $region12: #{model_builder_forward.1} parent=5 // pred_fallthru
      _
    %p224 = scmp.lt.s32.totalorder %s13, 2
    // Predicated region
    $region37: #{model_builder_forward.1} parent=5 // pred_check
      %p225 = pneg %p224
    $region38: #{model_builder_forward.1} parent=5 // pred_check_branch
      %227 = sbr.rel (%p225) target = $region40
    $region39: #{model_builder_forward.1} parent=5 // pred_region
      // Predicated region
      $region41: #{model_builder_forward.1} parent=39 // pred_check
        %p228 = pneg %p33
      $region42: #{model_builder_forward.1} parent=39 // pred_check_branch
        %230 = sbr.rel (%p228) target = $region44
      $region43: #{model_builder_forward.1} parent=39 // pred_region
        %p231 = scmp.lt.s32.totalorder %s13, 1
        %s232 = scalar_select %p231, %s13, 1
        %s233 = smul.addr %s232, 32
        %s234 = smul.addr %s233, 4
        %s235 = scalar_lea.vmem %s0, %s234
      $region44: #{model_builder_forward.1} parent=39 // pred_fallthru
        _
    $region40: #{model_builder_forward.1} parent=5 // pred_fallthru
      _
    %p236 = scmp.le.s32.totalorder 1, %s13
    %p237 = scmp.lt.s32.totalorder %s13, 3
    %p238 = pnand %p236, %p237
    %p239 = pneg %p238
    // Predicated region
    $region45: #{model_builder_forward.1} parent=5 // pred_check
      _
    $region46: #{model_builder_forward.1} parent=5 // pred_check_branch
      %241 = sbr.rel (%p238) target = $region48
    $region47: #{model_builder_forward.1} parent=5 // pred_region
      %s242 = ssub.s32 %s13, 1
      %p243 = scmp.lt.s32.totalorder %s18, 1
      %s244 = scalar_select %p243, %s18, 1
      %s245 = smul.addr %s244, 32
      %s246 = smul.addr %s245, 4
      %s247 = scalar_lea.vmem %s0, %s246
      %p248 = pneg %p39
      %p249 = pneg %p36
      %p250 = pneg %p60
      %p251 = pneg %p57
      %p252 = pneg %p81
      %p253 = pneg %p78
      %p254 = pneg %p102
      %p255 = pneg %p99
      %p256 = pneg %p123
      %p257 = pneg %p120
      %p258 = pneg %p144
      %p259 = pneg %p141
      %p260 = pneg %p165
      %p261 = pneg %p162
      %p262 = pneg %p191
      %p263 = pneg %p188
      %p264 = scmp.lt.s32.totalorder %s18, 1
      %s265 = scalar_select %p264, %s18, 1
      %s266 = smul.addr %s265, 32
      %s267 = smul.addr %s266, 8
      %s268 = scalar_lea.vmem %s7, %s267
      %p269 = scmp.lt.s32.totalorder %s18, 1
      %s270 = scalar_select %p269, %s18, 1
      %s271 = smul.addr %s270, 32
      %s272 = smul.addr %s271, 4
      %s273 = scalar_lea.vmem %s0, %s272
      %p274 = scmp.lt.s32.totalorder %s18, 1
      %s275 = scalar_select %p274, %s18, 1
      %s276 = smul.addr %s275, 32
      %s277 = smul.addr %s276, 8
      %s278 = scalar_lea.vmem %s7, %s277
      %280 = vst [vmem:[#allocation2] sm:$0xf] 0
      %281 = vst [vmem:[#allocation2 + $0x4] sm:$0xf] 0
      %282 = vst [vmem:[#allocation2 + $0x8] sm:$0xf] 0
      %283 = vst [vmem:[#allocation2 + $0xc] sm:$0xf] 0
      %vm284 = vcmask 1040384
      %vm285 = vsmask.f32 256
      %vm286 = vmand %vm284, %vm285
      %v287 = vld [vmem:[#allocation2 + $0x10] sm:$0x1]
      %v288 = vsel %vm286, 0, %v287
      %289 = vst [vmem:[#allocation2 + $0x10] sm:$0x1] %v288
      %290 = vst [vmem:[#allocation2 + $0x14] sm:$0xf] 0
      %291 = vst [vmem:[#allocation2 + $0x18] sm:$0xf] 0
      %292 = vst [vmem:[#allocation2 + $0x1c] sm:$0xf] 0
      %293 = vst [vmem:[#allocation2 + $0x20] sm:$0xf] 0
      %v294 = vld [vmem:[#allocation2 + $0x24] sm:$0x1]
      %v295 = vsel %vm286, 0, %v294
      %296 = vst [vmem:[#allocation2 + $0x24] sm:$0x1] %v295
      %297 = vst [vmem:[#allocation2 + $0x28] sm:$0xf] 0
      %298 = vst [vmem:[#allocation2 + $0x2c] sm:$0xf] 0
      %299 = vst [vmem:[#allocation2 + $0x30] sm:$0xf] 0
      %300 = vst [vmem:[#allocation2 + $0x34] sm:$0xf] 0
      %v301 = vld [vmem:[#allocation2 + $0x38] sm:$0x1]
      %v302 = vsel %vm286, 0, %v301
      %303 = vst [vmem:[#allocation2 + $0x38] sm:$0x1] %v302
      %304 = vst [vmem:[#allocation2 + $0x3c] sm:$0xf] 0
      %305 = vst [vmem:[#allocation2 + $0x40] sm:$0xf] 0
      %306 = vst [vmem:[#allocation2 + $0x44] sm:$0xf] 0
      %307 = vst [vmem:[#allocation2 + $0x48] sm:$0xf] 0
      %v308 = vld [vmem:[#allocation2 + $0x4c] sm:$0x1]
      %v309 = vsel %vm286, 0, %v308
      %310 = vst [vmem:[#allocation2 + $0x4c] sm:$0x1] %v309
      %311 = vst [vmem:[#allocation2 + $0x50] sm:$0xf] 0
      %312 = vst [vmem:[#allocation2 + $0x54] sm:$0xf] 0
      %313 = vst [vmem:[#allocation2 + $0x58] sm:$0xf] 0
      %314 = vst [vmem:[#allocation2 + $0x5c] sm:$0xf] 0
      %v315 = vld [vmem:[#allocation2 + $0x60] sm:$0x1]
      %v316 = vsel %vm286, 0, %v315
      %317 = vst [vmem:[#allocation2 + $0x60] sm:$0x1] %v316
      %318 = vst [vmem:[#allocation2 + $0x64] sm:$0xf] 0
      %319 = vst [vmem:[#allocation2 + $0x68] sm:$0xf] 0
      %320 = vst [vmem:[#allocation2 + $0x6c] sm:$0xf] 0
      %321 = vst [vmem:[#allocation2 + $0x70] sm:$0xf] 0
      %v322 = vld [vmem:[#allocation2 + $0x74] sm:$0x1]
      %v323 = vsel %vm286, 0, %v322
      %324 = vst [vmem:[#allocation2 + $0x74] sm:$0x1] %v323
      %325 = vst [vmem:[#allocation2 + $0x78] sm:$0xf] 0
      %326 = vst [vmem:[#allocation2 + $0x7c] sm:$0xf] 0
      %327 = vst [vmem:[#allocation2 + $0x80] sm:$0xf] 0
      %328 = vst [vmem:[#allocation2 + $0x84] sm:$0xf] 0
      %v329 = vld [vmem:[#allocation2 + $0x88] sm:$0x1]
      %v330 = vsel %vm286, 0, %v329
      %331 = vst [vmem:[#allocation2 + $0x88] sm:$0x1] %v330
      %332 = vst [vmem:[#allocation2 + $0x8c] sm:$0xf] 0
      %333 = vst [vmem:[#allocation2 + $0x90] sm:$0xf] 0
      %334 = vst [vmem:[#allocation2 + $0x94] sm:$0xf] 0
      %335 = vst [vmem:[#allocation2 + $0x98] sm:$0xf] 0
      %v336 = vld [vmem:[#allocation2 + $0x9c] sm:$0x1]
      %v337 = vsel %vm286, 0, %v336
      %338 = vst [vmem:[#allocation2 + $0x9c] sm:$0x1] %v337
      %339 = vst [vmem:[#allocation2 + $0xa0] sm:$0xf] 0
      %340 = vst [vmem:[#allocation2 + $0xa4] sm:$0xf] 0
      %341 = vst [vmem:[#allocation2 + $0xa8] sm:$0xf] 0
      %342 = vst [vmem:[#allocation2 + $0xac] sm:$0xf] 0
      %v343 = vld [vmem:[#allocation2 + $0xb0] sm:$0x1]
      %v344 = vsel %vm286, 0, %v343
      %345 = vst [vmem:[#allocation2 + $0xb0] sm:$0x1] %v344
      %346 = vst [vmem:[#allocation2 + $0xb4] sm:$0xf] 0
      %347 = vst [vmem:[#allocation2 + $0xb8] sm:$0xf] 0
      %348 = vst [vmem:[#allocation2 + $0xbc] sm:$0xf] 0
      %349 = vst [vmem:[#allocation2 + $0xc0] sm:$0xf] 0
      %v350 = vld [vmem:[#allocation2 + $0xc4] sm:$0x1]
      %v351 = vsel %vm286, 0, %v350
      %352 = vst [vmem:[#allocation2 + $0xc4] sm:$0x1] %v351
      %353 = vst [vmem:[#allocation2 + $0xc8] sm:$0xf] 0
      %354 = vst [vmem:[#allocation2 + $0xcc] sm:$0xf] 0
      %355 = vst [vmem:[#allocation2 + $0xd0] sm:$0xf] 0
      %356 = vst [vmem:[#allocation2 + $0xd4] sm:$0xf] 0
      %v357 = vld [vmem:[#allocation2 + $0xd8] sm:$0x1]
      %v358 = vsel %vm286, 0, %v357
      %359 = vst [vmem:[#allocation2 + $0xd8] sm:$0x1] %v358
      %360 = vst [vmem:[#allocation2 + $0xdc] sm:$0xf] 0
      %361 = vst [vmem:[#allocation2 + $0xe0] sm:$0xf] 0
      %362 = vst [vmem:[#allocation2 + $0xe4] sm:$0xf] 0
      %363 = vst [vmem:[#allocation2 + $0xe8] sm:$0xf] 0
      %v364 = vld [vmem:[#allocation2 + $0xec] sm:$0x1]
      %v365 = vsel %vm286, 0, %v364
      %366 = vst [vmem:[#allocation2 + $0xec] sm:$0x1] %v365
      %367 = vst [vmem:[#allocation2 + $0xf0] sm:$0xf] 0
      %368 = vst [vmem:[#allocation2 + $0xf4] sm:$0xf] 0
      %369 = vst [vmem:[#allocation2 + $0xf8] sm:$0xf] 0
      %370 = vst [vmem:[#allocation2 + $0xfc] sm:$0xf] 0
      %v371 = vld [vmem:[#allocation2 + $0x100] sm:$0x1]
      %v372 = vsel %vm286, 0, %v371
      %373 = vst [vmem:[#allocation2 + $0x100] sm:$0x1] %v372
      %374 = vst [vmem:[#allocation2 + $0x104] sm:$0xf] 0
      %375 = vst [vmem:[#allocation2 + $0x108] sm:$0xf] 0
      %376 = vst [vmem:[#allocation2 + $0x10c] sm:$0xf] 0
      %377 = vst [vmem:[#allocation2 + $0x110] sm:$0xf] 0
      %v378 = vld [vmem:[#allocation2 + $0x114] sm:$0x1]
      %v379 = vsel %vm286, 0, %v378
      %380 = vst [vmem:[#allocation2 + $0x114] sm:$0x1] %v379
      %381 = vst [vmem:[#allocation2 + $0x118] sm:$0xf] 0
      %382 = vst [vmem:[#allocation2 + $0x11c] sm:$0xf] 0
      %383 = vst [vmem:[#allocation2 + $0x120] sm:$0xf] 0
      %384 = vst [vmem:[#allocation2 + $0x124] sm:$0xf] 0
      %v385 = vld [vmem:[#allocation2 + $0x128] sm:$0x1]
      %v386 = vsel %vm286, 0, %v385
      %387 = vst [vmem:[#allocation2 + $0x128] sm:$0x1] %v386
      %388 = vst [vmem:[#allocation2 + $0x12c] sm:$0xf] 0
      %389 = vst [vmem:[#allocation2 + $0x130] sm:$0xf] 0
      %390 = vst [vmem:[#allocation2 + $0x134] sm:$0xf] 0
      %391 = vst [vmem:[#allocation2 + $0x138] sm:$0xf] 0
      %v392 = vld [vmem:[#allocation2 + $0x13c] sm:$0x1]
      %v393 = vsel %vm286, 0, %v392
      %394 = vst [vmem:[#allocation2 + $0x13c] sm:$0x1] %v393
      %395 = vst [vmem:[#allocation2 + $0x140] sm:$0xf] 0
      %396 = vst [vmem:[#allocation2 + $0x144] sm:$0xf] 0
      %397 = vst [vmem:[#allocation2 + $0x148] sm:$0xf] 0
      %398 = vst [vmem:[#allocation2 + $0x14c] sm:$0xf] 0
      %v399 = vld [vmem:[#allocation2 + $0x150] sm:$0x1]
      %v400 = vsel %vm286, 0, %v399
      %401 = vst [vmem:[#allocation2 + $0x150] sm:$0x1] %v400
      %402 = vst [vmem:[#allocation2 + $0x154] sm:$0xf] 0
      %403 = vst [vmem:[#allocation2 + $0x158] sm:$0xf] 0
      %404 = vst [vmem:[#allocation2 + $0x15c] sm:$0xf] 0
      %405 = vst [vmem:[#allocation2 + $0x160] sm:$0xf] 0
      %v406 = vld [vmem:[#allocation2 + $0x164] sm:$0x1]
      %v407 = vsel %vm286, 0, %v406
      %408 = vst [vmem:[#allocation2 + $0x164] sm:$0x1] %v407
      %v409 = vld [vmem:[%s273] sm:$0xf]
      %v410 = vld [vmem:[%s273 + $0x4] sm:$0xf]
      %v411 = vld [vmem:[%s273 + $0x8] sm:$0xf]
      %v412 = vld [vmem:[%s273 + $0xc] sm:$0xf]
      %v413 = vld [vmem:[%s273 + $0x10] sm:$0xf]
      %v414 = vld [vmem:[%s273 + $0x14] sm:$0xf]
      %v415 = vld [vmem:[%s273 + $0x18] sm:$0xf]
      %v416 = vld [vmem:[%s273 + $0x1c] sm:$0xf]
      %v417 = vld [vmem:[%s273 + $0x20] sm:$0xf]
      %v418 = vld [vmem:[%s273 + $0x24] sm:$0xf]
      %v419 = vld [vmem:[%s273 + $0x28] sm:$0xf]
      %v420 = vld [vmem:[%s273 + $0x2c] sm:$0xf]
      %v421 = vld [vmem:[%s273 + $0x30] sm:$0xf]
      %v422 = vld [vmem:[%s273 + $0x34] sm:$0xf]
      %v423 = vld [vmem:[%s273 + $0x38] sm:$0xf]
      %v424 = vld [vmem:[%s273 + $0x3c] sm:$0xf]
      %v425 = vld [vmem:[%s273 + $0x40] sm:$0xf]
      %v426 = vld [vmem:[%s273 + $0x44] sm:$0xf]
      %v427 = vld [vmem:[%s273 + $0x48] sm:$0xf]
      %v428 = vld [vmem:[%s273 + $0x4c] sm:$0xf]
      %v429 = vld [vmem:[%s273 + $0x50] sm:$0xf]
      %v430 = vld [vmem:[%s273 + $0x54] sm:$0xf]
      %v431 = vld [vmem:[%s273 + $0x58] sm:$0xf]
      %v432 = vld [vmem:[%s273 + $0x5c] sm:$0xf]
      %v433 = vld [vmem:[%s273 + $0x60] sm:$0xf]
      %v434 = vld [vmem:[%s273 + $0x64] sm:$0xf]
      %v435 = vld [vmem:[%s273 + $0x68] sm:$0xf]
      %v436 = vld [vmem:[%s273 + $0x6c] sm:$0xf]
      %v437 = vld [vmem:[%s273 + $0x70] sm:$0xf]
      %v438 = vld [vmem:[%s273 + $0x74] sm:$0xf]
      %v439 = vld [vmem:[%s273 + $0x78] sm:$0xf]
      %v440 = vld [vmem:[%s273 + $0x7c] sm:$0xf]
      %v441 = vld [vmem:[%s1] sm:$0xf]
      %v442 = vld [vmem:[%s1 + $0x4] sm:$0xf]
      %v443 = vld [vmem:[%s1 + $0x8] sm:$0xf]
      %v444 = vld [vmem:[%s1 + $0xc] sm:$0xf]
      %v445 = vld [vmem:[%s1 + $0x10] sm:$0xf]
      %v446 = vld [vmem:[%s1 + $0x14] sm:$0xf]
      %v447 = vld [vmem:[%s1 + $0x18] sm:$0xf]
      %v448 = vld [vmem:[%s1 + $0x1c] sm:$0xf]
      %v449 = vld [vmem:[%s1 + $0x20] sm:$0xf]
      %v450 = vld [vmem:[%s1 + $0x24] sm:$0xf]
      %v451 = vld [vmem:[%s1 + $0x28] sm:$0xf]
      %v452 = vld [vmem:[%s1 + $0x2c] sm:$0xf]
      %v453 = vld [vmem:[%s1 + $0x30] sm:$0xf]
      %v454 = vld [vmem:[%s1 + $0x34] sm:$0xf]
      %v455 = vld [vmem:[%s1 + $0x38] sm:$0xf]
      %v456 = vld [vmem:[%s1 + $0x3c] sm:$0xf]
      %v457 = vld [vmem:[%s2] sm:$0x1]
      %v459 = vperm.slane %v457, 0
      %v493 = vunpack.c.l.b16 %v409
      %v494 = vunpack.c.l.b16 %v410
      %v495 = vunpack.c.l.b16 %v411
      %v496 = vunpack.c.l.b16 %v412
      %v497 = vunpack.c.l.b16 %v413
      %v498 = vunpack.c.l.b16 %v414
      %v499 = vunpack.c.l.b16 %v415
      %v500 = vunpack.c.l.b16 %v416
      %v501 = vunpack.c.l.b16 %v417
      %v502 = vunpack.c.l.b16 %v418
      %v503 = vunpack.c.l.b16 %v419
      %v504 = vunpack.c.l.b16 %v420
      %v505 = vunpack.c.l.b16 %v421
      %v506 = vunpack.c.l.b16 %v422
      %v507 = vunpack.c.l.b16 %v423
      %v508 = vunpack.c.l.b16 %v424
      %v509 = vunpack.c.l.b16 %v425
      %v510 = vunpack.c.l.b16 %v426
      %v511 = vunpack.c.l.b16 %v427
      %v512 = vunpack.c.l.b16 %v428
      %v513 = vunpack.c.l.b16 %v429
      %v514 = vunpack.c.l.b16 %v430
      %v515 = vunpack.c.l.b16 %v431
      %v516 = vunpack.c.l.b16 %v432
      %v517 = vunpack.c.l.b16 %v433
      %v518 = vunpack.c.l.b16 %v434
      %v519 = vunpack.c.l.b16 %v435
      %v520 = vunpack.c.l.b16 %v436
      %v521 = vunpack.c.l.b16 %v437
      %v522 = vunpack.c.l.b16 %v438
      %v523 = vunpack.c.l.b16 %v439
      %v524 = vunpack.c.l.b16 %v440
      %v525 = vpack.c.b16 %v494, %v493
      %v526 = vpack.c.b16 %v496, %v495
      %v527 = vpack.c.b16 %v498, %v497
      %v528 = vpack.c.b16 %v500, %v499
      %v529 = vpack.c.b16 %v502, %v501
      %v530 = vpack.c.b16 %v504, %v503
      %v531 = vpack.c.b16 %v506, %v505
      %v532 = vpack.c.b16 %v508, %v507
      %v533 = vpack.c.b16 %v510, %v509
      %v534 = vpack.c.b16 %v512, %v511
      %v535 = vpack.c.b16 %v514, %v513
      %v536 = vpack.c.b16 %v516, %v515
      %v537 = vpack.c.b16 %v518, %v517
      %v538 = vpack.c.b16 %v520, %v519
      %v539 = vpack.c.b16 %v522, %v521
      %v540 = vpack.c.b16 %v524, %v523
      %v573 = vunpack.c.l.b16 %v441
      %v574 = vunpack.c.l.b16 %v442
      %v575 = vunpack.c.l.b16 %v443
      %v576 = vunpack.c.l.b16 %v444
      %v577 = vunpack.c.l.b16 %v445
      %v578 = vunpack.c.l.b16 %v446
      %v579 = vunpack.c.l.b16 %v447
      %v580 = vunpack.c.l.b16 %v448
      %v581 = vunpack.c.l.b16 %v449
      %v582 = vunpack.c.l.b16 %v450
      %v583 = vunpack.c.l.b16 %v451
      %v584 = vunpack.c.l.b16 %v452
      %v585 = vunpack.c.l.b16 %v453
      %v586 = vunpack.c.l.b16 %v454
      %v587 = vunpack.c.l.b16 %v455
      %v588 = vunpack.c.l.b16 %v456
      %v589 = vpack.c.b16 %v574, %v573
      %v590 = vpack.c.b16 %v576, %v575
      %v591 = vpack.c.b16 %v578, %v577
      %v592 = vpack.c.b16 %v580, %v579
      %v593 = vpack.c.b16 %v582, %v581
      %v594 = vpack.c.b16 %v584, %v583
      %v595 = vpack.c.b16 %v586, %v585
      %v596 = vpack.c.b16 %v588, %v587
      %605 = vmatpush.bf16.msra.mxu0 %v596
      %606 = vmatpush.bf16.msra.mxu0 %v595
      %607 = vmatpush.bf16.msra.mxu0 %v594
      %608 = vmatpush.bf16.msra.mxu0 %v593
      %609 = vmatpush.bf16.msra.mxu0 %v592
      %610 = vmatpush.bf16.msra.mxu0 %v591
      %611 = vmatpush.bf16.msra.mxu0 %v590
      %612 = vmatpush.bf16.msra.mxu0 %v589
      %613 = vmatmul.bf16.gmra.mxu0 %v525
      %v614 = vpop.f32.mrf.mxu0
      %v615 = vadd.f32 %v459, %v614
      %v616 = vpop.f32.mrf.mxu0
      %v617 = vadd.f32 %v459, %v616
      %618 = vmatmul.bf16.gmra.mxu0 %v526
      %v619 = vpop.f32.mrf.mxu0
      %v620 = vadd.f32 %v459, %v619
      %v621 = vpop.f32.mrf.mxu0
      %v622 = vadd.f32 %v459, %v621
      %623 = vmatmul.bf16.gmra.mxu0 %v527
      %v624 = vpop.f32.mrf.mxu0
      %v625 = vadd.f32 %v459, %v624
      %v626 = vpop.f32.mrf.mxu0
      %v627 = vadd.f32 %v459, %v626
      %628 = vmatmul.bf16.gmra.mxu0 %v528
      %v629 = vpop.f32.mrf.mxu0
      %v630 = vadd.f32 %v459, %v629
      %v631 = vpop.f32.mrf.mxu0
      %v632 = vadd.f32 %v459, %v631
      %633 = vmatmul.bf16.gmra.mxu0 %v529
      %v634 = vpop.f32.mrf.mxu0
      %v635 = vadd.f32 %v459, %v634
      %v636 = vpop.f32.mrf.mxu0
      %v637 = vadd.f32 %v459, %v636
      %638 = vmatmul.bf16.gmra.mxu0 %v530
      %v639 = vpop.f32.mrf.mxu0
      %v640 = vadd.f32 %v459, %v639
      %v641 = vpop.f32.mrf.mxu0
      %v642 = vadd.f32 %v459, %v641
      %643 = vmatmul.bf16.gmra.mxu0 %v531
      %v644 = vpop.f32.mrf.mxu0
      %v645 = vadd.f32 %v459, %v644
      %v646 = vpop.f32.mrf.mxu0
      %v647 = vadd.f32 %v459, %v646
      %648 = vmatmul.bf16.gmra.mxu0 %v532
      %v649 = vpop.f32.mrf.mxu0
      %v650 = vadd.f32 %v459, %v649
      %v651 = vpop.f32.mrf.mxu0
      %v652 = vadd.f32 %v459, %v651
      %653 = vmatmul.bf16.gmra.mxu0 %v533
      %v654 = vpop.f32.mrf.mxu0
      %v655 = vadd.f32 %v459, %v654
      %v656 = vpop.f32.mrf.mxu0
      %v657 = vadd.f32 %v459, %v656
      %658 = vmatmul.bf16.gmra.mxu0 %v534
      %v659 = vpop.f32.mrf.mxu0
      %v660 = vadd.f32 %v459, %v659
      %v661 = vpop.f32.mrf.mxu0
      %v662 = vadd.f32 %v459, %v661
      %663 = vmatmul.bf16.gmra.mxu0 %v535
      %v664 = vpop.f32.mrf.mxu0
      %v665 = vadd.f32 %v459, %v664
      %v666 = vpop.f32.mrf.mxu0
      %v667 = vadd.f32 %v459, %v666
      %668 = vmatmul.bf16.gmra.mxu0 %v536
      %v669 = vpop.f32.mrf.mxu0
      %v670 = vadd.f32 %v459, %v669
      %v671 = vpop.f32.mrf.mxu0
      %v672 = vadd.f32 %v459, %v671
      %673 = vmatmul.bf16.gmra.mxu0 %v537
      %v674 = vpop.f32.mrf.mxu0
      %v675 = vadd.f32 %v459, %v674
      %v676 = vpop.f32.mrf.mxu0
      %v677 = vadd.f32 %v459, %v676
      %678 = vmatmul.bf16.gmra.mxu0 %v538
      %v679 = vpop.f32.mrf.mxu0
      %v680 = vadd.f32 %v459, %v679
      %v681 = vpop.f32.mrf.mxu0
      %v682 = vadd.f32 %v459, %v681
      %683 = vmatmul.bf16.gmra.mxu0 %v539
      %v684 = vpop.f32.mrf.mxu0
      %v685 = vadd.f32 %v459, %v684
      %v686 = vpop.f32.mrf.mxu0
      %v687 = vadd.f32 %v459, %v686
      %688 = vmatmul.bf16.gmra.mxu0 %v540
      %v689 = vpop.f32.mrf.mxu0
      %v690 = vadd.f32 %v459, %v689
      %v691 = vpop.f32.mrf.mxu0
      %v692 = vadd.f32 %v459, %v691
      %693 = vdwg.mxu0
      %v694 = vmax.f32 %v615, 0.0
      %v695 = vmax.f32 %v617, 0.0
      %v696 = vmax.f32 %v620, 0.0
      %v697 = vmax.f32 %v622, 0.0
      %v698 = vmax.f32 %v625, 0.0
      %v699 = vmax.f32 %v627, 0.0
      %v700 = vmax.f32 %v630, 0.0
      %v701 = vmax.f32 %v632, 0.0
      %v702 = vmax.f32 %v635, 0.0
      %v703 = vmax.f32 %v637, 0.0
      %v704 = vmax.f32 %v640, 0.0
      %v705 = vmax.f32 %v642, 0.0
      %v706 = vmax.f32 %v645, 0.0
      %v707 = vmax.f32 %v647, 0.0
      %v708 = vmax.f32 %v650, 0.0
      %v709 = vmax.f32 %v652, 0.0
      %v710 = vmax.f32 %v655, 0.0
      %v711 = vmax.f32 %v657, 0.0
      %v712 = vmax.f32 %v660, 0.0
      %v713 = vmax.f32 %v662, 0.0
      %v714 = vmax.f32 %v665, 0.0
      %v715 = vmax.f32 %v667, 0.0
      %v716 = vmax.f32 %v670, 0.0
      %v717 = vmax.f32 %v672, 0.0
      %v718 = vmax.f32 %v675, 0.0
      %v719 = vmax.f32 %v677, 0.0
      %v720 = vmax.f32 %v680, 0.0
      %v721 = vmax.f32 %v682, 0.0
      %v722 = vmax.f32 %v685, 0.0
      %v723 = vmax.f32 %v687, 0.0
      %v724 = vmax.f32 %v690, 0.0
      %v725 = vmax.f32 %v692, 0.0
      %v726 = vpack.c.bf16 %v694, %v694
      %v727 = vpack.c.bf16 %v695, %v695
      %v728 = vpack.c.bf16 %v696, %v696
      %v729 = vpack.c.bf16 %v697, %v697
      %v730 = vpack.c.bf16 %v698, %v698
      %v731 = vpack.c.bf16 %v699, %v699
      %v732 = vpack.c.bf16 %v700, %v700
      %v733 = vpack.c.bf16 %v701, %v701
      %v734 = vpack.c.bf16 %v702, %v702
      %v735 = vpack.c.bf16 %v703, %v703
      %v736 = vpack.c.bf16 %v704, %v704
      %v737 = vpack.c.bf16 %v705, %v705
      %v738 = vpack.c.bf16 %v706, %v706
      %v739 = vpack.c.bf16 %v707, %v707
      %v740 = vpack.c.bf16 %v708, %v708
      %v741 = vpack.c.bf16 %v709, %v709
      %v742 = vpack.c.bf16 %v710, %v710
      %v743 = vpack.c.bf16 %v711, %v711
      %v744 = vpack.c.bf16 %v712, %v712
      %v745 = vpack.c.bf16 %v713, %v713
      %v746 = vpack.c.bf16 %v714, %v714
      %v747 = vpack.c.bf16 %v715, %v715
      %v748 = vpack.c.bf16 %v716, %v716
      %v749 = vpack.c.bf16 %v717, %v717
      %v750 = vpack.c.bf16 %v718, %v718
      %v751 = vpack.c.bf16 %v719, %v719
      %v752 = vpack.c.bf16 %v720, %v720
      %v753 = vpack.c.bf16 %v721, %v721
      %v754 = vpack.c.bf16 %v722, %v722
      %v755 = vpack.c.bf16 %v723, %v723
      %v756 = vpack.c.bf16 %v724, %v724
      %v757 = vpack.c.bf16 %v725, %v725
      %s758 = scalar_lea.vmem [#allocation2], 20
      %759 = vst [vmem:[%s758 + $0x8] sm:$0xf] %v726
      %760 = vst [vmem:[%s758 + $0xc] sm:$0xf] %v727
      %761 = vst [vmem:[%s758 + $0x1c] sm:$0xf] %v728
      %762 = vst [vmem:[%s758 + $0x20] sm:$0xf] %v729
      %763 = vst [vmem:[%s758 + $0x30] sm:$0xf] %v730
      %764 = vst [vmem:[%s758 + $0x34] sm:$0xf] %v731
      %765 = vst [vmem:[%s758 + $0x44] sm:$0xf] %v732
      %766 = vst [vmem:[%s758 + $0x48] sm:$0xf] %v733
      %767 = vst [vmem:[%s758 + $0x58] sm:$0xf] %v734
      %768 = vst [vmem:[%s758 + $0x5c] sm:$0xf] %v735
      %769 = vst [vmem:[%s758 + $0x6c] sm:$0xf] %v736
      %770 = vst [vmem:[%s758 + $0x70] sm:$0xf] %v737
      %771 = vst [vmem:[%s758 + $0x80] sm:$0xf] %v738
      %772 = vst [vmem:[%s758 + $0x84] sm:$0xf] %v739
      %773 = vst [vmem:[%s758 + $0x94] sm:$0xf] %v740
      %774 = vst [vmem:[%s758 + $0x98] sm:$0xf] %v741
      %775 = vst [vmem:[%s758 + $0xa8] sm:$0xf] %v742
      %776 = vst [vmem:[%s758 + $0xac] sm:$0xf] %v743
      %777 = vst [vmem:[%s758 + $0xbc] sm:$0xf] %v744
      %778 = vst [vmem:[%s758 + $0xc0] sm:$0xf] %v745
      %779 = vst [vmem:[%s758 + $0xd0] sm:$0xf] %v746
      %780 = vst [vmem:[%s758 + $0xd4] sm:$0xf] %v747
      %781 = vst [vmem:[%s758 + $0xe4] sm:$0xf] %v748
      %782 = vst [vmem:[%s758 + $0xe8] sm:$0xf] %v749
      %783 = vst [vmem:[%s758 + $0xf8] sm:$0xf] %v750
      %784 = vst [vmem:[%s758 + $0xfc] sm:$0xf] %v751
      %785 = vst [vmem:[%s758 + $0x10c] sm:$0xf] %v752
      %786 = vst [vmem:[%s758 + $0x110] sm:$0xf] %v753
      %787 = vst [vmem:[%s758 + $0x120] sm:$0xf] %v754
      %788 = vst [vmem:[%s758 + $0x124] sm:$0xf] %v755
      %789 = vst [vmem:[%s758 + $0x134] sm:$0xf] %v756
      %790 = vst [vmem:[%s758 + $0x138] sm:$0xf] %v757
      %v791 = vld [vmem:[#allocation2 + $0x4] sm:$0x8]
      %v792 = vld [vmem:[#allocation2 + $0x8] sm:$0xf]
      %v793 = vld [vmem:[#allocation2 + $0xc] sm:$0xf]
      %v794 = vld [vmem:[#allocation2 + $0x18] sm:$0x8]
      %v795 = vld [vmem:[#allocation2 + $0x1c] sm:$0xf]
      %v796 = vld [vmem:[#allocation2 + $0x20] sm:$0xf]
      %v797 = vld [vmem:[#allocation2 + $0x2c] sm:$0x8]
      %v798 = vld [vmem:[#allocation2 + $0x30] sm:$0xf]
      %v799 = vld [vmem:[#allocation2 + $0x34] sm:$0xf]
      %v800 = vld [vmem:[#allocation2 + $0x40] sm:$0x8]
      %v801 = vld [vmem:[#allocation2 + $0x44] sm:$0xf]
      %v802 = vld [vmem:[#allocation2 + $0x48] sm:$0xf]
      %v803 = vld [vmem:[#allocation2 + $0x54] sm:$0x8]
      %v804 = vld [vmem:[#allocation2 + $0x58] sm:$0xf]
      %v805 = vld [vmem:[#allocation2 + $0x5c] sm:$0xf]
      %v806 = vld [vmem:[#allocation2 + $0x68] sm:$0x8]
      %v807 = vld [vmem:[#allocation2 + $0x6c] sm:$0xf]
      %v808 = vld [vmem:[#allocation2 + $0x70] sm:$0xf]
      %v809 = vld [vmem:[#allocation2 + $0x7c] sm:$0x8]
      %v810 = vld [vmem:[#allocation2 + $0x80] sm:$0xf]
      %v811 = vld [vmem:[#allocation2 + $0x84] sm:$0xf]
      %v812 = vld [vmem:[#allocation2 + $0x90] sm:$0x8]
      %v813 = vld [vmem:[#allocation2 + $0x94] sm:$0xf]
      %v814 = vld [vmem:[#allocation2 + $0x98] sm:$0xf]
      %v815 = vld [vmem:[#allocation2 + $0xa4] sm:$0x8]
      %v816 = vld [vmem:[#allocation2 + $0xa8] sm:$0xf]
      %v817 = vld [vmem:[#allocation2 + $0xac] sm:$0xf]
      %v818 = vld [vmem:[#allocation2 + $0xb8] sm:$0x8]
      %v819 = vld [vmem:[#allocation2 + $0xbc] sm:$0xf]
      %v820 = vld [vmem:[#allocation2 + $0xc0] sm:$0xf]
      %v821 = vld [vmem:[#allocation2 + $0xcc] sm:$0x8]
      %v822 = vld [vmem:[#allocation2 + $0xd0] sm:$0xf]
      %v823 = vld [vmem:[#allocation2 + $0xd4] sm:$0xf]
      %v824 = vld [vmem:[#allocation2 + $0xe0] sm:$0x8]
      %v825 = vld [vmem:[#allocation2 + $0xe4] sm:$0xf]
      %v826 = vld [vmem:[#allocation2 + $0xe8] sm:$0xf]
      %v827 = vld [vmem:[#allocation2 + $0xf4] sm:$0x8]
      %v828 = vld [vmem:[#allocation2 + $0xf8] sm:$0xf]
      %v829 = vld [vmem:[#allocation2 + $0xfc] sm:$0xf]
      %v830 = vld [vmem:[#allocation2 + $0x108] sm:$0x8]
      %v831 = vld [vmem:[#allocation2 + $0x10c] sm:$0xf]
      %v832 = vld [vmem:[#allocation2 + $0x110] sm:$0xf]
      %v833 = vld [vmem:[#allocation2 + $0x11c] sm:$0x8]
      %v834 = vld [vmem:[#allocation2 + $0x120] sm:$0xf]
      %v835 = vld [vmem:[#allocation2 + $0x124] sm:$0xf]
      %v836 = vld [vmem:[#allocation2 + $0x130] sm:$0x8]
      %v837 = vld [vmem:[#allocation2 + $0x134] sm:$0xf]
      %v838 = vld [vmem:[#allocation2 + $0x138] sm:$0xf]
      %vm839 = vsmask.f32 4368
      %vm840 = vmor %vm285, %vm839
      %v842 = vshrl.u32 %v791, 16
      %v844 = vrot.slane %v842, 7
      %v845 = vrot.slane %v844, 4
      %v847 = vshrl.u32 %v792, 16
      %v849 = vrot.slane %v847, 7
      %v850 = vshll.u32 %v792, 16
      %v852 = vor.u32 %v849, %v850
      %v853 = vsel %vm840, %v845, %v852
      %v854 = vrot.slane %v849, 4
      %v856 = vshrl.u32 %v793, 16
      %v858 = vrot.slane %v856, 7
      %v859 = vshll.u32 %v793, 16
      %v861 = vor.u32 %v858, %v859
      %v862 = vsel %vm840, %v854, %v861
      %v864 = vshrl.u32 %v794, 16
      %v866 = vrot.slane %v864, 7
      %v867 = vrot.slane %v866, 4
      %v869 = vshrl.u32 %v795, 16
      %v871 = vrot.slane %v869, 7
      %v872 = vshll.u32 %v795, 16
      %v874 = vor.u32 %v871, %v872
      %v875 = vsel %vm840, %v867, %v874
      %v876 = vrot.slane %v871, 4
      %v878 = vshrl.u32 %v796, 16
      %v880 = vrot.slane %v878, 7
      %v881 = vshll.u32 %v796, 16
      %v883 = vor.u32 %v880, %v881
      %v884 = vsel %vm840, %v876, %v883
      %v886 = vshrl.u32 %v797, 16
      %v888 = vrot.slane %v886, 7
      %v889 = vrot.slane %v888, 4
      %v891 = vshrl.u32 %v798, 16
      %v893 = vrot.slane %v891, 7
      %v894 = vshll.u32 %v798, 16
      %v896 = vor.u32 %v893, %v894
      %v897 = vsel %vm840, %v889, %v896
      %v898 = vrot.slane %v893, 4
      %v900 = vshrl.u32 %v799, 16
      %v902 = vrot.slane %v900, 7
      %v903 = vshll.u32 %v799, 16
      %v905 = vor.u32 %v902, %v903
      %v906 = vsel %vm840, %v898, %v905
      %v908 = vshrl.u32 %v800, 16
      %v910 = vrot.slane %v908, 7
      %v911 = vrot.slane %v910, 4
      %v913 = vshrl.u32 %v801, 16
      %v915 = vrot.slane %v913, 7
      %v916 = vshll.u32 %v801, 16
      %v918 = vor.u32 %v915, %v916
      %v919 = vsel %vm840, %v911, %v918
      %v920 = vrot.slane %v915, 4
      %v922 = vshrl.u32 %v802, 16
      %v924 = vrot.slane %v922, 7
      %v925 = vshll.u32 %v802, 16
      %v927 = vor.u32 %v924, %v925
      %v928 = vsel %vm840, %v920, %v927
      %v930 = vshrl.u32 %v803, 16
      %v932 = vrot.slane %v930, 7
      %v933 = vrot.slane %v932, 4
      %v935 = vshrl.u32 %v804, 16
      %v937 = vrot.slane %v935, 7
      %v938 = vshll.u32 %v804, 16
      %v940 = vor.u32 %v937, %v938
      %v941 = vsel %vm840, %v933, %v940
      %v942 = vrot.slane %v937, 4
      %v944 = vshrl.u32 %v805, 16
      %v946 = vrot.slane %v944, 7
      %v947 = vshll.u32 %v805, 16
      %v949 = vor.u32 %v946, %v947
      %v950 = vsel %vm840, %v942, %v949
      %v952 = vshrl.u32 %v806, 16
      %v954 = vrot.slane %v952, 7
      %v955 = vrot.slane %v954, 4
      %v957 = vshrl.u32 %v807, 16
      %v959 = vrot.slane %v957, 7
      %v960 = vshll.u32 %v807, 16
      %v962 = vor.u32 %v959, %v960
      %v963 = vsel %vm840, %v955, %v962
      %v964 = vrot.slane %v959, 4
      %v966 = vshrl.u32 %v808, 16
      %v968 = vrot.slane %v966, 7
      %v969 = vshll.u32 %v808, 16
      %v971 = vor.u32 %v968, %v969
      %v972 = vsel %vm840, %v964, %v971
      %v974 = vshrl.u32 %v809, 16
      %v976 = vrot.slane %v974, 7
      %v977 = vrot.slane %v976, 4
      %v979 = vshrl.u32 %v810, 16
      %v981 = vrot.slane %v979, 7
      %v982 = vshll.u32 %v810, 16
      %v984 = vor.u32 %v981, %v982
      %v985 = vsel %vm840, %v977, %v984
      %v986 = vrot.slane %v981, 4
      %v988 = vshrl.u32 %v811, 16
      %v990 = vrot.slane %v988, 7
      %v991 = vshll.u32 %v811, 16
      %v993 = vor.u32 %v990, %v991
      %v994 = vsel %vm840, %v986, %v993
      %v996 = vshrl.u32 %v812, 16
      %v998 = vrot.slane %v996, 7
      %v999 = vrot.slane %v998, 4
      %v1001 = vshrl.u32 %v813, 16
      %v1003 = vrot.slane %v1001, 7
      %v1004 = vshll.u32 %v813, 16
      %v1006 = vor.u32 %v1003, %v1004
      %v1007 = vsel %vm840, %v999, %v1006
      %v1008 = vrot.slane %v1003, 4
      %v1010 = vshrl.u32 %v814, 16
      %v1012 = vrot.slane %v1010, 7
      %v1013 = vshll.u32 %v814, 16
      %v1015 = vor.u32 %v1012, %v1013
      %v1016 = vsel %vm840, %v1008, %v1015
      %v1018 = vshrl.u32 %v815, 16
      %v1020 = vrot.slane %v1018, 7
      %v1021 = vrot.slane %v1020, 4
      %v1023 = vshrl.u32 %v816, 16
      %v1025 = vrot.slane %v1023, 7
      %v1026 = vshll.u32 %v816, 16
      %v1028 = vor.u32 %v1025, %v1026
      %v1029 = vsel %vm840, %v1021, %v1028
      %v1030 = vrot.slane %v1025, 4
      %v1032 = vshrl.u32 %v817, 16
      %v1034 = vrot.slane %v1032, 7
      %v1035 = vshll.u32 %v817, 16
      %v1037 = vor.u32 %v1034, %v1035
      %v1038 = vsel %vm840, %v1030, %v1037
      %v1040 = vshrl.u32 %v818, 16
      %v1042 = vrot.slane %v1040, 7
      %v1043 = vrot.slane %v1042, 4
      %v1045 = vshrl.u32 %v819, 16
      %v1047 = vrot.slane %v1045, 7
      %v1048 = vshll.u32 %v819, 16
      %v1050 = vor.u32 %v1047, %v1048
      %v1051 = vsel %vm840, %v1043, %v1050
      %v1052 = vrot.slane %v1047, 4
      %v1054 = vshrl.u32 %v820, 16
      %v1056 = vrot.slane %v1054, 7
      %v1057 = vshll.u32 %v820, 16
      %v1059 = vor.u32 %v1056, %v1057
      %v1060 = vsel %vm840, %v1052, %v1059
      %v1062 = vshrl.u32 %v821, 16
      %v1064 = vrot.slane %v1062, 7
      %v1065 = vrot.slane %v1064, 4
      %v1067 = vshrl.u32 %v822, 16
      %v1069 = vrot.slane %v1067, 7
      %v1070 = vshll.u32 %v822, 16
      %v1072 = vor.u32 %v1069, %v1070
      %v1073 = vsel %vm840, %v1065, %v1072
      %v1074 = vrot.slane %v1069, 4
      %v1076 = vshrl.u32 %v823, 16
      %v1078 = vrot.slane %v1076, 7
      %v1079 = vshll.u32 %v823, 16
      %v1081 = vor.u32 %v1078, %v1079
      %v1082 = vsel %vm840, %v1074, %v1081
      %v1084 = vshrl.u32 %v824, 16
      %v1086 = vrot.slane %v1084, 7
      %v1087 = vrot.slane %v1086, 4
      %v1089 = vshrl.u32 %v825, 16
      %v1091 = vrot.slane %v1089, 7
      %v1092 = vshll.u32 %v825, 16
      %v1094 = vor.u32 %v1091, %v1092
      %v1095 = vsel %vm840, %v1087, %v1094
      %v1096 = vrot.slane %v1091, 4
      %v1098 = vshrl.u32 %v826, 16
      %v1100 = vrot.slane %v1098, 7
      %v1101 = vshll.u32 %v826, 16
      %v1103 = vor.u32 %v1100, %v1101
      %v1104 = vsel %vm840, %v1096, %v1103
      %v1106 = vshrl.u32 %v827, 16
      %v1108 = vrot.slane %v1106, 7
      %v1109 = vrot.slane %v1108, 4
      %v1111 = vshrl.u32 %v828, 16
      %v1113 = vrot.slane %v1111, 7
      %v1114 = vshll.u32 %v828, 16
      %v1116 = vor.u32 %v1113, %v1114
      %v1117 = vsel %vm840, %v1109, %v1116
      %v1118 = vrot.slane %v1113, 4
      %v1120 = vshrl.u32 %v829, 16
      %v1122 = vrot.slane %v1120, 7
      %v1123 = vshll.u32 %v829, 16
      %v1125 = vor.u32 %v1122, %v1123
      %v1126 = vsel %vm840, %v1118, %v1125
      %v1128 = vshrl.u32 %v830, 16
      %v1130 = vrot.slane %v1128, 7
      %v1131 = vrot.slane %v1130, 4
      %v1133 = vshrl.u32 %v831, 16
      %v1135 = vrot.slane %v1133, 7
      %v1136 = vshll.u32 %v831, 16
      %v1138 = vor.u32 %v1135, %v1136
      %v1139 = vsel %vm840, %v1131, %v1138
      %v1140 = vrot.slane %v1135, 4
      %v1142 = vshrl.u32 %v832, 16
      %v1144 = vrot.slane %v1142, 7
      %v1145 = vshll.u32 %v832, 16
      %v1147 = vor.u32 %v1144, %v1145
      %v1148 = vsel %vm840, %v1140, %v1147
      %v1150 = vshrl.u32 %v833, 16
      %v1152 = vrot.slane %v1150, 7
      %v1153 = vrot.slane %v1152, 4
      %v1155 = vshrl.u32 %v834, 16
      %v1157 = vrot.slane %v1155, 7
      %v1158 = vshll.u32 %v834, 16
      %v1160 = vor.u32 %v1157, %v1158
      %v1161 = vsel %vm840, %v1153, %v1160
      %v1162 = vrot.slane %v1157, 4
      %v1164 = vshrl.u32 %v835, 16
      %v1166 = vrot.slane %v1164, 7
      %v1167 = vshll.u32 %v835, 16
      %v1169 = vor.u32 %v1166, %v1167
      %v1170 = vsel %vm840, %v1162, %v1169
      %v1172 = vshrl.u32 %v836, 16
      %v1174 = vrot.slane %v1172, 7
      %v1175 = vrot.slane %v1174, 4
      %v1177 = vshrl.u32 %v837, 16
      %v1179 = vrot.slane %v1177, 7
      %v1180 = vshll.u32 %v837, 16
      %v1182 = vor.u32 %v1179, %v1180
      %v1183 = vsel %vm840, %v1175, %v1182
      %v1184 = vrot.slane %v1179, 4
      %v1186 = vshrl.u32 %v838, 16
      %v1188 = vrot.slane %v1186, 7
      %v1189 = vshll.u32 %v838, 16
      %v1191 = vor.u32 %v1188, %v1189
      %v1192 = vsel %vm840, %v1184, %v1191
      %v1193 = vld [vmem:[#allocation2 + $0x10] sm:$0x1]
      %v1194 = vld [vmem:[#allocation2 + $0x24] sm:$0x1]
      %v1195 = vld [vmem:[#allocation2 + $0x38] sm:$0x1]
      %v1196 = vld [vmem:[#allocation2 + $0x4c] sm:$0x1]
      %v1197 = vld [vmem:[#allocation2 + $0x60] sm:$0x1]
      %v1198 = vld [vmem:[#allocation2 + $0x74] sm:$0x1]
      %v1199 = vld [vmem:[#allocation2 + $0x88] sm:$0x1]
      %v1200 = vld [vmem:[#allocation2 + $0x9c] sm:$0x1]
      %v1201 = vld [vmem:[#allocation2 + $0xb0] sm:$0x1]
      %v1202 = vld [vmem:[#allocation2 + $0xc4] sm:$0x1]
      %v1203 = vld [vmem:[#allocation2 + $0xd8] sm:$0x1]
      %v1204 = vld [vmem:[#allocation2 + $0xec] sm:$0x1]
      %v1205 = vld [vmem:[#allocation2 + $0x100] sm:$0x1]
      %v1206 = vld [vmem:[#allocation2 + $0x114] sm:$0x1]
      %v1207 = vld [vmem:[#allocation2 + $0x128] sm:$0x1]
      %v1208 = vld [vmem:[#allocation2 + $0x13c] sm:$0x1]
      %vm1209 = vsmask.f32 3328
      %vm1210 = vsmask.f32 7440
      %vm1211 = vmor %vm1209, %vm1210
      %v1212 = vrot.slane %v847, 4
      %v1213 = vrot.slane %v850, 5
      %v1214 = vor.u32 %v1212, %v1213
      %v1215 = vrot.slane %v1214, 4
      %v1216 = vrot.slane %v859, 5
      %v1217 = vsel %vm1211, %v1215, %v1216
      %v1218 = vrot.slane %v856, 4
      %v1219 = vor.u32 %v1218, %v1216
      %v1220 = vrot.slane %v1219, 4
      %v1222 = vshll.u32 %v1193, 16
      %v1224 = vrot.slane %v1222, 5
      %v1225 = vsel %vm1211, %v1220, %v1224
      %v1226 = vrot.slane %v869, 4
      %v1227 = vrot.slane %v872, 5
      %v1228 = vor.u32 %v1226, %v1227
      %v1229 = vrot.slane %v1228, 4
      %v1230 = vrot.slane %v881, 5
      %v1231 = vsel %vm1211, %v1229, %v1230
      %v1232 = vrot.slane %v878, 4
      %v1233 = vor.u32 %v1232, %v1230
      %v1234 = vrot.slane %v1233, 4
      %v1236 = vshll.u32 %v1194, 16
      %v1238 = vrot.slane %v1236, 5
      %v1239 = vsel %vm1211, %v1234, %v1238
      %v1240 = vrot.slane %v891, 4
      %v1241 = vrot.slane %v894, 5
      %v1242 = vor.u32 %v1240, %v1241
      %v1243 = vrot.slane %v1242, 4
      %v1244 = vrot.slane %v903, 5
      %v1245 = vsel %vm1211, %v1243, %v1244
      %v1246 = vrot.slane %v900, 4
      %v1247 = vor.u32 %v1246, %v1244
      %v1248 = vrot.slane %v1247, 4
      %v1250 = vshll.u32 %v1195, 16
      %v1252 = vrot.slane %v1250, 5
      %v1253 = vsel %vm1211, %v1248, %v1252
      %v1254 = vrot.slane %v913, 4
      %v1255 = vrot.slane %v916, 5
      %v1256 = vor.u32 %v1254, %v1255
      %v1257 = vrot.slane %v1256, 4
      %v1258 = vrot.slane %v925, 5
      %v1259 = vsel %vm1211, %v1257, %v1258
      %v1260 = vrot.slane %v922, 4
      %v1261 = vor.u32 %v1260, %v1258
      %v1262 = vrot.slane %v1261, 4
      %v1264 = vshll.u32 %v1196, 16
      %v1266 = vrot.slane %v1264, 5
      %v1267 = vsel %vm1211, %v1262, %v1266
      %v1268 = vrot.slane %v935, 4
      %v1269 = vrot.slane %v938, 5
      %v1270 = vor.u32 %v1268, %v1269
      %v1271 = vrot.slane %v1270, 4
      %v1272 = vrot.slane %v947, 5
      %v1273 = vsel %vm1211, %v1271, %v1272
      %v1274 = vrot.slane %v944, 4
      %v1275 = vor.u32 %v1274, %v1272
      %v1276 = vrot.slane %v1275, 4
      %v1278 = vshll.u32 %v1197, 16
      %v1280 = vrot.slane %v1278, 5
      %v1281 = vsel %vm1211, %v1276, %v1280
      %v1282 = vrot.slane %v957, 4
      %v1283 = vrot.slane %v960, 5
      %v1284 = vor.u32 %v1282, %v1283
      %v1285 = vrot.slane %v1284, 4
      %v1286 = vrot.slane %v969, 5
      %v1287 = vsel %vm1211, %v1285, %v1286
      %v1288 = vrot.slane %v966, 4
      %v1289 = vor.u32 %v1288, %v1286
      %v1290 = vrot.slane %v1289, 4
      %v1292 = vshll.u32 %v1198, 16
      %v1294 = vrot.slane %v1292, 5
      %v1295 = vsel %vm1211, %v1290, %v1294
      %v1296 = vrot.slane %v979, 4
      %v1297 = vrot.slane %v982, 5
      %v1298 = vor.u32 %v1296, %v1297
      %v1299 = vrot.slane %v1298, 4
      %v1300 = vrot.slane %v991, 5
      %v1301 = vsel %vm1211, %v1299, %v1300
      %v1302 = vrot.slane %v988, 4
      %v1303 = vor.u32 %v1302, %v1300
      %v1304 = vrot.slane %v1303, 4
      %v1306 = vshll.u32 %v1199, 16
      %v1308 = vrot.slane %v1306, 5
      %v1309 = vsel %vm1211, %v1304, %v1308
      %v1310 = vrot.slane %v1001, 4
      %v1311 = vrot.slane %v1004, 5
      %v1312 = vor.u32 %v1310, %v1311
      %v1313 = vrot.slane %v1312, 4
      %v1314 = vrot.slane %v1013, 5
      %v1315 = vsel %vm1211, %v1313, %v1314
      %v1316 = vrot.slane %v1010, 4
      %v1317 = vor.u32 %v1316, %v1314
      %v1318 = vrot.slane %v1317, 4
      %v1320 = vshll.u32 %v1200, 16
      %v1322 = vrot.slane %v1320, 5
      %v1323 = vsel %vm1211, %v1318, %v1322
      %v1324 = vrot.slane %v1023, 4
      %v1325 = vrot.slane %v1026, 5
      %v1326 = vor.u32 %v1324, %v1325
      %v1327 = vrot.slane %v1326, 4
      %v1328 = vrot.slane %v1035, 5
      %v1329 = vsel %vm1211, %v1327, %v1328
      %v1330 = vrot.slane %v1032, 4
      %v1331 = vor.u32 %v1330, %v1328
      %v1332 = vrot.slane %v1331, 4
      %v1334 = vshll.u32 %v1201, 16
      %v1336 = vrot.slane %v1334, 5
      %v1337 = vsel %vm1211, %v1332, %v1336
      %v1338 = vrot.slane %v1045, 4
      %v1339 = vrot.slane %v1048, 5
      %v1340 = vor.u32 %v1338, %v1339
      %v1341 = vrot.slane %v1340, 4
      %v1342 = vrot.slane %v1057, 5
      %v1343 = vsel %vm1211, %v1341, %v1342
      %v1344 = vrot.slane %v1054, 4
      %v1345 = vor.u32 %v1344, %v1342
      %v1346 = vrot.slane %v1345, 4
      %v1348 = vshll.u32 %v1202, 16
      %v1350 = vrot.slane %v1348, 5
      %v1351 = vsel %vm1211, %v1346, %v1350
      %v1352 = vrot.slane %v1067, 4
      %v1353 = vrot.slane %v1070, 5
      %v1354 = vor.u32 %v1352, %v1353
      %v1355 = vrot.slane %v1354, 4
      %v1356 = vrot.slane %v1079, 5
      %v1357 = vsel %vm1211, %v1355, %v1356
      %v1358 = vrot.slane %v1076, 4
      %v1359 = vor.u32 %v1358, %v1356
      %v1360 = vrot.slane %v1359, 4
      %v1362 = vshll.u32 %v1203, 16
      %v1364 = vrot.slane %v1362, 5
      %v1365 = vsel %vm1211, %v1360, %v1364
      %v1366 = vrot.slane %v1089, 4
      %v1367 = vrot.slane %v1092, 5
      %v1368 = vor.u32 %v1366, %v1367
      %v1369 = vrot.slane %v1368, 4
      %v1370 = vrot.slane %v1101, 5
      %v1371 = vsel %vm1211, %v1369, %v1370
      %v1372 = vrot.slane %v1098, 4
      %v1373 = vor.u32 %v1372, %v1370
      %v1374 = vrot.slane %v1373, 4
      %v1376 = vshll.u32 %v1204, 16
      %v1378 = vrot.slane %v1376, 5
      %v1379 = vsel %vm1211, %v1374, %v1378
      %v1380 = vrot.slane %v1111, 4
      %v1381 = vrot.slane %v1114, 5
      %v1382 = vor.u32 %v1380, %v1381
      %v1383 = vrot.slane %v1382, 4
      %v1384 = vrot.slane %v1123, 5
      %v1385 = vsel %vm1211, %v1383, %v1384
      %v1386 = vrot.slane %v1120, 4
      %v1387 = vor.u32 %v1386, %v1384
      %v1388 = vrot.slane %v1387, 4
      %v1390 = vshll.u32 %v1205, 16
      %v1392 = vrot.slane %v1390, 5
      %v1393 = vsel %vm1211, %v1388, %v1392
      %v1394 = vrot.slane %v1133, 4
      %v1395 = vrot.slane %v1136, 5
      %v1396 = vor.u32 %v1394, %v1395
      %v1397 = vrot.slane %v1396, 4
      %v1398 = vrot.slane %v1145, 5
      %v1399 = vsel %vm1211, %v1397, %v1398
      %v1400 = vrot.slane %v1142, 4
      %v1401 = vor.u32 %v1400, %v1398
      %v1402 = vrot.slane %v1401, 4
      %v1404 = vshll.u32 %v1206, 16
      %v1406 = vrot.slane %v1404, 5
      %v1407 = vsel %vm1211, %v1402, %v1406
      %v1408 = vrot.slane %v1155, 4
      %v1409 = vrot.slane %v1158, 5
      %v1410 = vor.u32 %v1408, %v1409
      %v1411 = vrot.slane %v1410, 4
      %v1412 = vrot.slane %v1167, 5
      %v1413 = vsel %vm1211, %v1411, %v1412
      %v1414 = vrot.slane %v1164, 4
      %v1415 = vor.u32 %v1414, %v1412
      %v1416 = vrot.slane %v1415, 4
      %v1418 = vshll.u32 %v1207, 16
      %v1420 = vrot.slane %v1418, 5
      %v1421 = vsel %vm1211, %v1416, %v1420
      %v1422 = vrot.slane %v1177, 4
      %v1423 = vrot.slane %v1180, 5
      %v1424 = vor.u32 %v1422, %v1423
      %v1425 = vrot.slane %v1424, 4
      %v1426 = vrot.slane %v1189, 5
      %v1427 = vsel %vm1211, %v1425, %v1426
      %v1428 = vrot.slane %v1186, 4
      %v1429 = vor.u32 %v1428, %v1426
      %v1430 = vrot.slane %v1429, 4
      %v1432 = vshll.u32 %v1208, 16
      %v1434 = vrot.slane %v1432, 5
      %v1435 = vsel %vm1211, %v1430, %v1434
      %v1436 = vld [vmem:[%s758 + $0x4] sm:$0x8]
      %v1437 = vld [vmem:[%s758 + $0x8] sm:$0xf]
      %v1438 = vld [vmem:[%s758 + $0xc] sm:$0xf]
      %v1439 = vld [vmem:[%s758 + $0x18] sm:$0x8]
      %v1440 = vld [vmem:[%s758 + $0x1c] sm:$0xf]
      %v1441 = vld [vmem:[%s758 + $0x20] sm:$0xf]
      %v1442 = vld [vmem:[%s758 + $0x2c] sm:$0x8]
      %v1443 = vld [vmem:[%s758 + $0x30] sm:$0xf]
      %v1444 = vld [vmem:[%s758 + $0x34] sm:$0xf]
      %v1445 = vld [vmem:[%s758 + $0x40] sm:$0x8]
      %v1446 = vld [vmem:[%s758 + $0x44] sm:$0xf]
      %v1447 = vld [vmem:[%s758 + $0x48] sm:$0xf]
      %v1448 = vld [vmem:[%s758 + $0x54] sm:$0x8]
      %v1449 = vld [vmem:[%s758 + $0x58] sm:$0xf]
      %v1450 = vld [vmem:[%s758 + $0x5c] sm:$0xf]
      %v1451 = vld [vmem:[%s758 + $0x68] sm:$0x8]
      %v1452 = vld [vmem:[%s758 + $0x6c] sm:$0xf]
      %v1453 = vld [vmem:[%s758 + $0x70] sm:$0xf]
      %v1454 = vld [vmem:[%s758 + $0x7c] sm:$0x8]
      %v1455 = vld [vmem:[%s758 + $0x80] sm:$0xf]
      %v1456 = vld [vmem:[%s758 + $0x84] sm:$0xf]
      %v1457 = vld [vmem:[%s758 + $0x90] sm:$0x8]
      %v1458 = vld [vmem:[%s758 + $0x94] sm:$0xf]
      %v1459 = vld [vmem:[%s758 + $0x98] sm:$0xf]
      %v1460 = vld [vmem:[%s758 + $0xa4] sm:$0x8]
      %v1461 = vld [vmem:[%s758 + $0xa8] sm:$0xf]
      %v1462 = vld [vmem:[%s758 + $0xac] sm:$0xf]
      %v1463 = vld [vmem:[%s758 + $0xb8] sm:$0x8]
      %v1464 = vld [vmem:[%s758 + $0xbc] sm:$0xf]
      %v1465 = vld [vmem:[%s758 + $0xc0] sm:$0xf]
      %v1466 = vld [vmem:[%s758 + $0xcc] sm:$0x8]
      %v1467 = vld [vmem:[%s758 + $0xd0] sm:$0xf]
      %v1468 = vld [vmem:[%s758 + $0xd4] sm:$0xf]
      %v1469 = vld [vmem:[%s758 + $0xe0] sm:$0x8]
      %v1470 = vld [vmem:[%s758 + $0xe4] sm:$0xf]
      %v1471 = vld [vmem:[%s758 + $0xe8] sm:$0xf]
      %v1472 = vld [vmem:[%s758 + $0xf4] sm:$0x8]
      %v1473 = vld [vmem:[%s758 + $0xf8] sm:$0xf]
      %v1474 = vld [vmem:[%s758 + $0xfc] sm:$0xf]
      %v1475 = vld [vmem:[%s758 + $0x108] sm:$0x8]
      %v1476 = vld [vmem:[%s758 + $0x10c] sm:$0xf]
      %v1477 = vld [vmem:[%s758 + $0x110] sm:$0xf]
      %v1478 = vld [vmem:[%s758 + $0x11c] sm:$0x8]
      %v1479 = vld [vmem:[%s758 + $0x120] sm:$0xf]
      %v1480 = vld [vmem:[%s758 + $0x124] sm:$0xf]
      %v1481 = vld [vmem:[%s758 + $0x130] sm:$0x8]
      %v1482 = vld [vmem:[%s758 + $0x134] sm:$0xf]
      %v1483 = vld [vmem:[%s758 + $0x138] sm:$0xf]
      %v1485 = vshrl.u32 %v1436, 16
      %v1487 = vrot.slane %v1485, 7
      %v1488 = vrot.slane %v1487, 4
      %v1490 = vshrl.u32 %v1437, 16
      %v1492 = vrot.slane %v1490, 7
      %v1493 = vshll.u32 %v1437, 16
      %v1495 = vor.u32 %v1492, %v1493
      %v1496 = vsel %vm840, %v1488, %v1495
      %v1497 = vrot.slane %v1492, 4
      %v1499 = vshrl.u32 %v1438, 16
      %v1501 = vrot.slane %v1499, 7
      %v1502 = vshll.u32 %v1438, 16
      %v1504 = vor.u32 %v1501, %v1502
      %v1505 = vsel %vm840, %v1497, %v1504
      %v1507 = vshrl.u32 %v1439, 16
      %v1509 = vrot.slane %v1507, 7
      %v1510 = vrot.slane %v1509, 4
      %v1512 = vshrl.u32 %v1440, 16
      %v1514 = vrot.slane %v1512, 7
      %v1515 = vshll.u32 %v1440, 16
      %v1517 = vor.u32 %v1514, %v1515
      %v1518 = vsel %vm840, %v1510, %v1517
      %v1519 = vrot.slane %v1514, 4
      %v1521 = vshrl.u32 %v1441, 16
      %v1523 = vrot.slane %v1521, 7
      %v1524 = vshll.u32 %v1441, 16
      %v1526 = vor.u32 %v1523, %v1524
      %v1527 = vsel %vm840, %v1519, %v1526
      %v1529 = vshrl.u32 %v1442, 16
      %v1531 = vrot.slane %v1529, 7
      %v1532 = vrot.slane %v1531, 4
      %v1534 = vshrl.u32 %v1443, 16
      %v1536 = vrot.slane %v1534, 7
      %v1537 = vshll.u32 %v1443, 16
      %v1539 = vor.u32 %v1536, %v1537
      %v1540 = vsel %vm840, %v1532, %v1539
      %v1541 = vrot.slane %v1536, 4
      %v1543 = vshrl.u32 %v1444, 16
      %v1545 = vrot.slane %v1543, 7
      %v1546 = vshll.u32 %v1444, 16
      %v1548 = vor.u32 %v1545, %v1546
      %v1549 = vsel %vm840, %v1541, %v1548
      %v1551 = vshrl.u32 %v1445, 16
      %v1553 = vrot.slane %v1551, 7
      %v1554 = vrot.slane %v1553, 4
      %v1556 = vshrl.u32 %v1446, 16
      %v1558 = vrot.slane %v1556, 7
      %v1559 = vshll.u32 %v1446, 16
      %v1561 = vor.u32 %v1558, %v1559
      %v1562 = vsel %vm840, %v1554, %v1561
      %v1563 = vrot.slane %v1558, 4
      %v1565 = vshrl.u32 %v1447, 16
      %v1567 = vrot.slane %v1565, 7
      %v1568 = vshll.u32 %v1447, 16
      %v1570 = vor.u32 %v1567, %v1568
      %v1571 = vsel %vm840, %v1563, %v1570
      %v1573 = vshrl.u32 %v1448, 16
      %v1575 = vrot.slane %v1573, 7
      %v1576 = vrot.slane %v1575, 4
      %v1578 = vshrl.u32 %v1449, 16
      %v1580 = vrot.slane %v1578, 7
      %v1581 = vshll.u32 %v1449, 16
      %v1583 = vor.u32 %v1580, %v1581
      %v1584 = vsel %vm840, %v1576, %v1583
      %v1585 = vrot.slane %v1580, 4
      %v1587 = vshrl.u32 %v1450, 16
      %v1589 = vrot.slane %v1587, 7
      %v1590 = vshll.u32 %v1450, 16
      %v1592 = vor.u32 %v1589, %v1590
      %v1593 = vsel %vm840, %v1585, %v1592
      %v1595 = vshrl.u32 %v1451, 16
      %v1597 = vrot.slane %v1595, 7
      %v1598 = vrot.slane %v1597, 4
      %v1600 = vshrl.u32 %v1452, 16
      %v1602 = vrot.slane %v1600, 7
      %v1603 = vshll.u32 %v1452, 16
      %v1605 = vor.u32 %v1602, %v1603
      %v1606 = vsel %vm840, %v1598, %v1605
      %v1607 = vrot.slane %v1602, 4
      %v1609 = vshrl.u32 %v1453, 16
      %v1611 = vrot.slane %v1609, 7
      %v1612 = vshll.u32 %v1453, 16
      %v1614 = vor.u32 %v1611, %v1612
      %v1615 = vsel %vm840, %v1607, %v1614
      %v1617 = vshrl.u32 %v1454, 16
      %v1619 = vrot.slane %v1617, 7
      %v1620 = vrot.slane %v1619, 4
      %v1622 = vshrl.u32 %v1455, 16
      %v1624 = vrot.slane %v1622, 7
      %v1625 = vshll.u32 %v1455, 16
      %v1627 = vor.u32 %v1624, %v1625
      %v1628 = vsel %vm840, %v1620, %v1627
      %v1629 = vrot.slane %v1624, 4
      %v1631 = vshrl.u32 %v1456, 16
      %v1633 = vrot.slane %v1631, 7
      %v1634 = vshll.u32 %v1456, 16
      %v1636 = vor.u32 %v1633, %v1634
      %v1637 = vsel %vm840, %v1629, %v1636
      %v1639 = vshrl.u32 %v1457, 16
      %v1641 = vrot.slane %v1639, 7
      %v1642 = vrot.slane %v1641, 4
      %v1644 = vshrl.u32 %v1458, 16
      %v1646 = vrot.slane %v1644, 7
      %v1647 = vshll.u32 %v1458, 16
      %v1649 = vor.u32 %v1646, %v1647
      %v1650 = vsel %vm840, %v1642, %v1649
      %v1651 = vrot.slane %v1646, 4
      %v1653 = vshrl.u32 %v1459, 16
      %v1655 = vrot.slane %v1653, 7
      %v1656 = vshll.u32 %v1459, 16
      %v1658 = vor.u32 %v1655, %v1656
      %v1659 = vsel %vm840, %v1651, %v1658
      %v1661 = vshrl.u32 %v1460, 16
      %v1663 = vrot.slane %v1661, 7
      %v1664 = vrot.slane %v1663, 4
      %v1666 = vshrl.u32 %v1461, 16
      %v1668 = vrot.slane %v1666, 7
      %v1669 = vshll.u32 %v1461, 16
      %v1671 = vor.u32 %v1668, %v1669
      %v1672 = vsel %vm840, %v1664, %v1671
      %v1673 = vrot.slane %v1668, 4
      %v1675 = vshrl.u32 %v1462, 16
      %v1677 = vrot.slane %v1675, 7
      %v1678 = vshll.u32 %v1462, 16
      %v1680 = vor.u32 %v1677, %v1678
      %v1681 = vsel %vm840, %v1673, %v1680
      %v1683 = vshrl.u32 %v1463, 16
      %v1685 = vrot.slane %v1683, 7
      %v1686 = vrot.slane %v1685, 4
      %v1688 = vshrl.u32 %v1464, 16
      %v1690 = vrot.slane %v1688, 7
      %v1691 = vshll.u32 %v1464, 16
      %v1693 = vor.u32 %v1690, %v1691
      %v1694 = vsel %vm840, %v1686, %v1693
      %v1695 = vrot.slane %v1690, 4
      %v1697 = vshrl.u32 %v1465, 16
      %v1699 = vrot.slane %v1697, 7
      %v1700 = vshll.u32 %v1465, 16
      %v1702 = vor.u32 %v1699, %v1700
      %v1703 = vsel %vm840, %v1695, %v1702
      %v1705 = vshrl.u32 %v1466, 16
      %v1707 = vrot.slane %v1705, 7
      %v1708 = vrot.slane %v1707, 4
      %v1710 = vshrl.u32 %v1467, 16
      %v1712 = vrot.slane %v1710, 7
      %v1713 = vshll.u32 %v1467, 16
      %v1715 = vor.u32 %v1712, %v1713
      %v1716 = vsel %vm840, %v1708, %v1715
      %v1717 = vrot.slane %v1712, 4
      %v1719 = vshrl.u32 %v1468, 16
      %v1721 = vrot.slane %v1719, 7
      %v1722 = vshll.u32 %v1468, 16
      %v1724 = vor.u32 %v1721, %v1722
      %v1725 = vsel %vm840, %v1717, %v1724
      %v1727 = vshrl.u32 %v1469, 16
      %v1729 = vrot.slane %v1727, 7
      %v1730 = vrot.slane %v1729, 4
      %v1732 = vshrl.u32 %v1470, 16
      %v1734 = vrot.slane %v1732, 7
      %v1735 = vshll.u32 %v1470, 16
      %v1737 = vor.u32 %v1734, %v1735
      %v1738 = vsel %vm840, %v1730, %v1737
      %v1739 = vrot.slane %v1734, 4
      %v1741 = vshrl.u32 %v1471, 16
      %v1743 = vrot.slane %v1741, 7
      %v1744 = vshll.u32 %v1471, 16
      %v1746 = vor.u32 %v1743, %v1744
      %v1747 = vsel %vm840, %v1739, %v1746
      %v1749 = vshrl.u32 %v1472, 16
      %v1751 = vrot.slane %v1749, 7
      %v1752 = vrot.slane %v1751, 4
      %v1754 = vshrl.u32 %v1473, 16
      %v1756 = vrot.slane %v1754, 7
      %v1757 = vshll.u32 %v1473, 16
      %v1759 = vor.u32 %v1756, %v1757
      %v1760 = vsel %vm840, %v1752, %v1759
      %v1761 = vrot.slane %v1756, 4
      %v1763 = vshrl.u32 %v1474, 16
      %v1765 = vrot.slane %v1763, 7
      %v1766 = vshll.u32 %v1474, 16
      %v1768 = vor.u32 %v1765, %v1766
      %v1769 = vsel %vm840, %v1761, %v1768
      %v1771 = vshrl.u32 %v1475, 16
      %v1773 = vrot.slane %v1771, 7
      %v1774 = vrot.slane %v1773, 4
      %v1776 = vshrl.u32 %v1476, 16
      %v1778 = vrot.slane %v1776, 7
      %v1779 = vshll.u32 %v1476, 16
      %v1781 = vor.u32 %v1778, %v1779
      %v1782 = vsel %vm840, %v1774, %v1781
      %v1783 = vrot.slane %v1778, 4
      %v1785 = vshrl.u32 %v1477, 16
      %v1787 = vrot.slane %v1785, 7
      %v1788 = vshll.u32 %v1477, 16
      %v1790 = vor.u32 %v1787, %v1788
      %v1791 = vsel %vm840, %v1783, %v1790
      %v1793 = vshrl.u32 %v1478, 16
      %v1795 = vrot.slane %v1793, 7
      %v1796 = vrot.slane %v1795, 4
      %v1798 = vshrl.u32 %v1479, 16
      %v1800 = vrot.slane %v1798, 7
      %v1801 = vshll.u32 %v1479, 16
      %v1803 = vor.u32 %v1800, %v1801
      %v1804 = vsel %vm840, %v1796, %v1803
      %v1805 = vrot.slane %v1800, 4
      %v1807 = vshrl.u32 %v1480, 16
      %v1809 = vrot.slane %v1807, 7
      %v1810 = vshll.u32 %v1480, 16
      %v1812 = vor.u32 %v1809, %v1810
      %v1813 = vsel %vm840, %v1805, %v1812
      %v1815 = vshrl.u32 %v1481, 16
      %v1817 = vrot.slane %v1815, 7
      %v1818 = vrot.slane %v1817, 4
      %v1820 = vshrl.u32 %v1482, 16
      %v1822 = vrot.slane %v1820, 7
      %v1823 = vshll.u32 %v1482, 16
      %v1825 = vor.u32 %v1822, %v1823
      %v1826 = vsel %vm840, %v1818, %v1825
      %v1827 = vrot.slane %v1822, 4
      %v1829 = vshrl.u32 %v1483, 16
      %v1831 = vrot.slane %v1829, 7
      %v1832 = vshll.u32 %v1483, 16
      %v1834 = vor.u32 %v1831, %v1832
      %v1835 = vsel %vm840, %v1827, %v1834
      %v1836 = vld [vmem:[%s758 + $0x10] sm:$0x1]
      %v1837 = vld [vmem:[%s758 + $0x24] sm:$0x1]
      %v1838 = vld [vmem:[%s758 + $0x38] sm:$0x1]
      %v1839 = vld [vmem:[%s758 + $0x4c] sm:$0x1]
      %v1840 = vld [vmem:[%s758 + $0x60] sm:$0x1]
      %v1841 = vld [vmem:[%s758 + $0x74] sm:$0x1]
      %v1842 = vld [vmem:[%s758 + $0x88] sm:$0x1]
      %v1843 = vld [vmem:[%s758 + $0x9c] sm:$0x1]
      %v1844 = vld [vmem:[%s758 + $0xb0] sm:$0x1]
      %v1845 = vld [vmem:[%s758 + $0xc4] sm:$0x1]
      %v1846 = vld [vmem:[%s758 + $0xd8] sm:$0x1]
      %v1847 = vld [vmem:[%s758 + $0xec] sm:$0x1]
      %v1848 = vld [vmem:[%s758 + $0x100] sm:$0x1]
      %v1849 = vld [vmem:[%s758 + $0x114] sm:$0x1]
      %v1850 = vld [vmem:[%s758 + $0x128] sm:$0x1]
      %v1851 = vld [vmem:[%s758 + $0x13c] sm:$0x1]
      %v1852 = vrot.slane %v1490, 4
      %v1853 = vrot.slane %v1493, 5
      %v1854 = vor.u32 %v1852, %v1853
      %v1855 = vrot.slane %v1854, 4
      %v1856 = vrot.slane %v1502, 5
      %v1857 = vsel %vm1211, %v1855, %v1856
      %v1858 = vrot.slane %v1499, 4
      %v1859 = vor.u32 %v1858, %v1856
      %v1860 = vrot.slane %v1859, 4
      %v1862 = vshll.u32 %v1836, 16
      %v1864 = vrot.slane %v1862, 5
      %v1865 = vsel %vm1211, %v1860, %v1864
      %v1866 = vrot.slane %v1512, 4
      %v1867 = vrot.slane %v1515, 5
      %v1868 = vor.u32 %v1866, %v1867
      %v1869 = vrot.slane %v1868, 4
      %v1870 = vrot.slane %v1524, 5
      %v1871 = vsel %vm1211, %v1869, %v1870
      %v1872 = vrot.slane %v1521, 4
      %v1873 = vor.u32 %v1872, %v1870
      %v1874 = vrot.slane %v1873, 4
      %v1876 = vshll.u32 %v1837, 16
      %v1878 = vrot.slane %v1876, 5
      %v1879 = vsel %vm1211, %v1874, %v1878
      %v1880 = vrot.slane %v1534, 4
      %v1881 = vrot.slane %v1537, 5
      %v1882 = vor.u32 %v1880, %v1881
      %v1883 = vrot.slane %v1882, 4
      %v1884 = vrot.slane %v1546, 5
      %v1885 = vsel %vm1211, %v1883, %v1884
      %v1886 = vrot.slane %v1543, 4
      %v1887 = vor.u32 %v1886, %v1884
      %v1888 = vrot.slane %v1887, 4
      %v1890 = vshll.u32 %v1838, 16
      %v1892 = vrot.slane %v1890, 5
      %v1893 = vsel %vm1211, %v1888, %v1892
      %v1894 = vrot.slane %v1556, 4
      %v1895 = vrot.slane %v1559, 5
      %v1896 = vor.u32 %v1894, %v1895
      %v1897 = vrot.slane %v1896, 4
      %v1898 = vrot.slane %v1568, 5
      %v1899 = vsel %vm1211, %v1897, %v1898
      %v1900 = vrot.slane %v1565, 4
      %v1901 = vor.u32 %v1900, %v1898
      %v1902 = vrot.slane %v1901, 4
      %v1904 = vshll.u32 %v1839, 16
      %v1906 = vrot.slane %v1904, 5
      %v1907 = vsel %vm1211, %v1902, %v1906
      %v1908 = vrot.slane %v1578, 4
      %v1909 = vrot.slane %v1581, 5
      %v1910 = vor.u32 %v1908, %v1909
      %v1911 = vrot.slane %v1910, 4
      %v1912 = vrot.slane %v1590, 5
      %v1913 = vsel %vm1211, %v1911, %v1912
      %v1914 = vrot.slane %v1587, 4
      %v1915 = vor.u32 %v1914, %v1912
      %v1916 = vrot.slane %v1915, 4
      %v1918 = vshll.u32 %v1840, 16
      %v1920 = vrot.slane %v1918, 5
      %v1921 = vsel %vm1211, %v1916, %v1920
      %v1922 = vrot.slane %v1600, 4
      %v1923 = vrot.slane %v1603, 5
      %v1924 = vor.u32 %v1922, %v1923
      %v1925 = vrot.slane %v1924, 4
      %v1926 = vrot.slane %v1612, 5
      %v1927 = vsel %vm1211, %v1925, %v1926
      %v1928 = vrot.slane %v1609, 4
      %v1929 = vor.u32 %v1928, %v1926
      %v1930 = vrot.slane %v1929, 4
      %v1932 = vshll.u32 %v1841, 16
      %v1934 = vrot.slane %v1932, 5
      %v1935 = vsel %vm1211, %v1930, %v1934
      %v1936 = vrot.slane %v1622, 4
      %v1937 = vrot.slane %v1625, 5
      %v1938 = vor.u32 %v1936, %v1937
      %v1939 = vrot.slane %v1938, 4
      %v1940 = vrot.slane %v1634, 5
      %v1941 = vsel %vm1211, %v1939, %v1940
      %v1942 = vrot.slane %v1631, 4
      %v1943 = vor.u32 %v1942, %v1940
      %v1944 = vrot.slane %v1943, 4
      %v1946 = vshll.u32 %v1842, 16
      %v1948 = vrot.slane %v1946, 5
      %v1949 = vsel %vm1211, %v1944, %v1948
      %v1950 = vrot.slane %v1644, 4
      %v1951 = vrot.slane %v1647, 5
      %v1952 = vor.u32 %v1950, %v1951
      %v1953 = vrot.slane %v1952, 4
      %v1954 = vrot.slane %v1656, 5
      %v1955 = vsel %vm1211, %v1953, %v1954
      %v1956 = vrot.slane %v1653, 4
      %v1957 = vor.u32 %v1956, %v1954
      %v1958 = vrot.slane %v1957, 4
      %v1960 = vshll.u32 %v1843, 16
      %v1962 = vrot.slane %v1960, 5
      %v1963 = vsel %vm1211, %v1958, %v1962
      %v1964 = vrot.slane %v1666, 4
      %v1965 = vrot.slane %v1669, 5
      %v1966 = vor.u32 %v1964, %v1965
      %v1967 = vrot.slane %v1966, 4
      %v1968 = vrot.slane %v1678, 5
      %v1969 = vsel %vm1211, %v1967, %v1968
      %v1970 = vrot.slane %v1675, 4
      %v1971 = vor.u32 %v1970, %v1968
      %v1972 = vrot.slane %v1971, 4
      %v1974 = vshll.u32 %v1844, 16
      %v1976 = vrot.slane %v1974, 5
      %v1977 = vsel %vm1211, %v1972, %v1976
      %v1978 = vrot.slane %v1688, 4
      %v1979 = vrot.slane %v1691, 5
      %v1980 = vor.u32 %v1978, %v1979
      %v1981 = vrot.slane %v1980, 4
      %v1982 = vrot.slane %v1700, 5
      %v1983 = vsel %vm1211, %v1981, %v1982
      %v1984 = vrot.slane %v1697, 4
      %v1985 = vor.u32 %v1984, %v1982
      %v1986 = vrot.slane %v1985, 4
      %v1988 = vshll.u32 %v1845, 16
      %v1990 = vrot.slane %v1988, 5
      %v1991 = vsel %vm1211, %v1986, %v1990
      %v1992 = vrot.slane %v1710, 4
      %v1993 = vrot.slane %v1713, 5
      %v1994 = vor.u32 %v1992, %v1993
      %v1995 = vrot.slane %v1994, 4
      %v1996 = vrot.slane %v1722, 5
      %v1997 = vsel %vm1211, %v1995, %v1996
      %v1998 = vrot.slane %v1719, 4
      %v1999 = vor.u32 %v1998, %v1996
      %v2000 = vrot.slane %v1999, 4
      %v2002 = vshll.u32 %v1846, 16
      %v2004 = vrot.slane %v2002, 5
      %v2005 = vsel %vm1211, %v2000, %v2004
      %v2006 = vrot.slane %v1732, 4
      %v2007 = vrot.slane %v1735, 5
      %v2008 = vor.u32 %v2006, %v2007
      %v2009 = vrot.slane %v2008, 4
      %v2010 = vrot.slane %v1744, 5
      %v2011 = vsel %vm1211, %v2009, %v2010
      %v2012 = vrot.slane %v1741, 4
      %v2013 = vor.u32 %v2012, %v2010
      %v2014 = vrot.slane %v2013, 4
      %v2016 = vshll.u32 %v1847, 16
      %v2018 = vrot.slane %v2016, 5
      %v2019 = vsel %vm1211, %v2014, %v2018
      %v2020 = vrot.slane %v1754, 4
      %v2021 = vrot.slane %v1757, 5
      %v2022 = vor.u32 %v2020, %v2021
      %v2023 = vrot.slane %v2022, 4
      %v2024 = vrot.slane %v1766, 5
      %v2025 = vsel %vm1211, %v2023, %v2024
      %v2026 = vrot.slane %v1763, 4
      %v2027 = vor.u32 %v2026, %v2024
      %v2028 = vrot.slane %v2027, 4
      %v2030 = vshll.u32 %v1848, 16
      %v2032 = vrot.slane %v2030, 5
      %v2033 = vsel %vm1211, %v2028, %v2032
      %v2034 = vrot.slane %v1776, 4
      %v2035 = vrot.slane %v1779, 5
      %v2036 = vor.u32 %v2034, %v2035
      %v2037 = vrot.slane %v2036, 4
      %v2038 = vrot.slane %v1788, 5
      %v2039 = vsel %vm1211, %v2037, %v2038
      %v2040 = vrot.slane %v1785, 4
      %v2041 = vor.u32 %v2040, %v2038
      %v2042 = vrot.slane %v2041, 4
      %v2044 = vshll.u32 %v1849, 16
      %v2046 = vrot.slane %v2044, 5
      %v2047 = vsel %vm1211, %v2042, %v2046
      %v2048 = vrot.slane %v1798, 4
      %v2049 = vrot.slane %v1801, 5
      %v2050 = vor.u32 %v2048, %v2049
      %v2051 = vrot.slane %v2050, 4
      %v2052 = vrot.slane %v1810, 5
      %v2053 = vsel %vm1211, %v2051, %v2052
      %v2054 = vrot.slane %v1807, 4
      %v2055 = vor.u32 %v2054, %v2052
      %v2056 = vrot.slane %v2055, 4
      %v2058 = vshll.u32 %v1850, 16
      %v2060 = vrot.slane %v2058, 5
      %v2061 = vsel %vm1211, %v2056, %v2060
      %v2062 = vrot.slane %v1820, 4
      %v2063 = vrot.slane %v1823, 5
      %v2064 = vor.u32 %v2062, %v2063
      %v2065 = vrot.slane %v2064, 4
      %v2066 = vrot.slane %v1832, 5
      %v2067 = vsel %vm1211, %v2065, %v2066
      %v2068 = vrot.slane %v1829, 4
      %v2069 = vor.u32 %v2068, %v2066
      %v2070 = vrot.slane %v2069, 4
      %v2072 = vshll.u32 %v1851, 16
      %v2074 = vrot.slane %v2072, 5
      %v2075 = vsel %vm1211, %v2070, %v2074
      %s2076 = scalar_lea.vmem [#allocation2], 40
      %v2077 = vld [vmem:[%s2076 + $0x4] sm:$0x8]
      %v2078 = vld [vmem:[%s2076 + $0x8] sm:$0xf]
      %v2079 = vld [vmem:[%s2076 + $0xc] sm:$0xf]
      %v2080 = vld [vmem:[%s2076 + $0x18] sm:$0x8]
      %v2081 = vld [vmem:[%s2076 + $0x1c] sm:$0xf]
      %v2082 = vld [vmem:[%s2076 + $0x20] sm:$0xf]
      %v2083 = vld [vmem:[%s2076 + $0x2c] sm:$0x8]
      %v2084 = vld [vmem:[%s2076 + $0x30] sm:$0xf]
      %v2085 = vld [vmem:[%s2076 + $0x34] sm:$0xf]
      %v2086 = vld [vmem:[%s2076 + $0x40] sm:$0x8]
      %v2087 = vld [vmem:[%s2076 + $0x44] sm:$0xf]
      %v2088 = vld [vmem:[%s2076 + $0x48] sm:$0xf]
      %v2089 = vld [vmem:[%s2076 + $0x54] sm:$0x8]
      %v2090 = vld [vmem:[%s2076 + $0x58] sm:$0xf]
      %v2091 = vld [vmem:[%s2076 + $0x5c] sm:$0xf]
      %v2092 = vld [vmem:[%s2076 + $0x68] sm:$0x8]
      %v2093 = vld [vmem:[%s2076 + $0x6c] sm:$0xf]
      %v2094 = vld [vmem:[%s2076 + $0x70] sm:$0xf]
      %v2095 = vld [vmem:[%s2076 + $0x7c] sm:$0x8]
      %v2096 = vld [vmem:[%s2076 + $0x80] sm:$0xf]
      %v2097 = vld [vmem:[%s2076 + $0x84] sm:$0xf]
      %v2098 = vld [vmem:[%s2076 + $0x90] sm:$0x8]
      %v2099 = vld [vmem:[%s2076 + $0x94] sm:$0xf]
      %v2100 = vld [vmem:[%s2076 + $0x98] sm:$0xf]
      %v2101 = vld [vmem:[%s2076 + $0xa4] sm:$0x8]
      %v2102 = vld [vmem:[%s2076 + $0xa8] sm:$0xf]
      %v2103 = vld [vmem:[%s2076 + $0xac] sm:$0xf]
      %v2104 = vld [vmem:[%s2076 + $0xb8] sm:$0x8]
      %v2105 = vld [vmem:[%s2076 + $0xbc] sm:$0xf]
      %v2106 = vld [vmem:[%s2076 + $0xc0] sm:$0xf]
      %v2107 = vld [vmem:[%s2076 + $0xcc] sm:$0x8]
      %v2108 = vld [vmem:[%s2076 + $0xd0] sm:$0xf]
      %v2109 = vld [vmem:[%s2076 + $0xd4] sm:$0xf]
      %v2110 = vld [vmem:[%s2076 + $0xe0] sm:$0x8]
      %v2111 = vld [vmem:[%s2076 + $0xe4] sm:$0xf]
      %v2112 = vld [vmem:[%s2076 + $0xe8] sm:$0xf]
      %v2113 = vld [vmem:[%s2076 + $0xf4] sm:$0x8]
      %v2114 = vld [vmem:[%s2076 + $0xf8] sm:$0xf]
      %v2115 = vld [vmem:[%s2076 + $0xfc] sm:$0xf]
      %v2116 = vld [vmem:[%s2076 + $0x108] sm:$0x8]
      %v2117 = vld [vmem:[%s2076 + $0x10c] sm:$0xf]
      %v2118 = vld [vmem:[%s2076 + $0x110] sm:$0xf]
      %v2119 = vld [vmem:[%s2076 + $0x11c] sm:$0x8]
      %v2120 = vld [vmem:[%s2076 + $0x120] sm:$0xf]
      %v2121 = vld [vmem:[%s2076 + $0x124] sm:$0xf]
      %v2122 = vld [vmem:[%s2076 + $0x130] sm:$0x8]
      %v2123 = vld [vmem:[%s2076 + $0x134] sm:$0xf]
      %v2124 = vld [vmem:[%s2076 + $0x138] sm:$0xf]
      %v2126 = vshrl.u32 %v2077, 16
      %v2128 = vrot.slane %v2126, 7
      %v2129 = vrot.slane %v2128, 4
      %v2131 = vshrl.u32 %v2078, 16
      %v2133 = vrot.slane %v2131, 7
      %v2134 = vshll.u32 %v2078, 16
      %v2136 = vor.u32 %v2133, %v2134
      %v2137 = vsel %vm840, %v2129, %v2136
      %v2138 = vrot.slane %v2133, 4
      %v2140 = vshrl.u32 %v2079, 16
      %v2142 = vrot.slane %v2140, 7
      %v2143 = vshll.u32 %v2079, 16
      %v2145 = vor.u32 %v2142, %v2143
      %v2146 = vsel %vm840, %v2138, %v2145
      %v2148 = vshrl.u32 %v2080, 16
      %v2150 = vrot.slane %v2148, 7
      %v2151 = vrot.slane %v2150, 4
      %v2153 = vshrl.u32 %v2081, 16
      %v2155 = vrot.slane %v2153, 7
      %v2156 = vshll.u32 %v2081, 16
      %v2158 = vor.u32 %v2155, %v2156
      %v2159 = vsel %vm840, %v2151, %v2158
      %v2160 = vrot.slane %v2155, 4
      %v2162 = vshrl.u32 %v2082, 16
      %v2164 = vrot.slane %v2162, 7
      %v2165 = vshll.u32 %v2082, 16
      %v2167 = vor.u32 %v2164, %v2165
      %v2168 = vsel %vm840, %v2160, %v2167
      %v2170 = vshrl.u32 %v2083, 16
      %v2172 = vrot.slane %v2170, 7
      %v2173 = vrot.slane %v2172, 4
      %v2175 = vshrl.u32 %v2084, 16
      %v2177 = vrot.slane %v2175, 7
      %v2178 = vshll.u32 %v2084, 16
      %v2180 = vor.u32 %v2177, %v2178
      %v2181 = vsel %vm840, %v2173, %v2180
      %v2182 = vrot.slane %v2177, 4
      %v2184 = vshrl.u32 %v2085, 16
      %v2186 = vrot.slane %v2184, 7
      %v2187 = vshll.u32 %v2085, 16
      %v2189 = vor.u32 %v2186, %v2187
      %v2190 = vsel %vm840, %v2182, %v2189
      %v2192 = vshrl.u32 %v2086, 16
      %v2194 = vrot.slane %v2192, 7
      %v2195 = vrot.slane %v2194, 4
      %v2197 = vshrl.u32 %v2087, 16
      %v2199 = vrot.slane %v2197, 7
      %v2200 = vshll.u32 %v2087, 16
      %v2202 = vor.u32 %v2199, %v2200
      %v2203 = vsel %vm840, %v2195, %v2202
      %v2204 = vrot.slane %v2199, 4
      %v2206 = vshrl.u32 %v2088, 16
      %v2208 = vrot.slane %v2206, 7
      %v2209 = vshll.u32 %v2088, 16
      %v2211 = vor.u32 %v2208, %v2209
      %v2212 = vsel %vm840, %v2204, %v2211
      %v2214 = vshrl.u32 %v2089, 16
      %v2216 = vrot.slane %v2214, 7
      %v2217 = vrot.slane %v2216, 4
      %v2219 = vshrl.u32 %v2090, 16
      %v2221 = vrot.slane %v2219, 7
      %v2222 = vshll.u32 %v2090, 16
      %v2224 = vor.u32 %v2221, %v2222
      %v2225 = vsel %vm840, %v2217, %v2224
      %v2226 = vrot.slane %v2221, 4
      %v2228 = vshrl.u32 %v2091, 16
      %v2230 = vrot.slane %v2228, 7
      %v2231 = vshll.u32 %v2091, 16
      %v2233 = vor.u32 %v2230, %v2231
      %v2234 = vsel %vm840, %v2226, %v2233
      %v2236 = vshrl.u32 %v2092, 16
      %v2238 = vrot.slane %v2236, 7
      %v2239 = vrot.slane %v2238, 4
      %v2241 = vshrl.u32 %v2093, 16
      %v2243 = vrot.slane %v2241, 7
      %v2244 = vshll.u32 %v2093, 16
      %v2246 = vor.u32 %v2243, %v2244
      %v2247 = vsel %vm840, %v2239, %v2246
      %v2248 = vrot.slane %v2243, 4
      %v2250 = vshrl.u32 %v2094, 16
      %v2252 = vrot.slane %v2250, 7
      %v2253 = vshll.u32 %v2094, 16
      %v2255 = vor.u32 %v2252, %v2253
      %v2256 = vsel %vm840, %v2248, %v2255
      %v2258 = vshrl.u32 %v2095, 16
      %v2260 = vrot.slane %v2258, 7
      %v2261 = vrot.slane %v2260, 4
      %v2263 = vshrl.u32 %v2096, 16
      %v2265 = vrot.slane %v2263, 7
      %v2266 = vshll.u32 %v2096, 16
      %v2268 = vor.u32 %v2265, %v2266
      %v2269 = vsel %vm840, %v2261, %v2268
      %v2270 = vrot.slane %v2265, 4
      %v2272 = vshrl.u32 %v2097, 16
      %v2274 = vrot.slane %v2272, 7
      %v2275 = vshll.u32 %v2097, 16
      %v2277 = vor.u32 %v2274, %v2275
      %v2278 = vsel %vm840, %v2270, %v2277
      %v2280 = vshrl.u32 %v2098, 16
      %v2282 = vrot.slane %v2280, 7
      %v2283 = vrot.slane %v2282, 4
      %v2285 = vshrl.u32 %v2099, 16
      %v2287 = vrot.slane %v2285, 7
      %v2288 = vshll.u32 %v2099, 16
      %v2290 = vor.u32 %v2287, %v2288
      %v2291 = vsel %vm840, %v2283, %v2290
      %v2292 = vrot.slane %v2287, 4
      %v2294 = vshrl.u32 %v2100, 16
      %v2296 = vrot.slane %v2294, 7
      %v2297 = vshll.u32 %v2100, 16
      %v2299 = vor.u32 %v2296, %v2297
      %v2300 = vsel %vm840, %v2292, %v2299
      %v2302 = vshrl.u32 %v2101, 16
      %v2304 = vrot.slane %v2302, 7
      %v2305 = vrot.slane %v2304, 4
      %v2307 = vshrl.u32 %v2102, 16
      %v2309 = vrot.slane %v2307, 7
      %v2310 = vshll.u32 %v2102, 16
      %v2312 = vor.u32 %v2309, %v2310
      %v2313 = vsel %vm840, %v2305, %v2312
      %v2314 = vrot.slane %v2309, 4
      %v2316 = vshrl.u32 %v2103, 16
      %v2318 = vrot.slane %v2316, 7
      %v2319 = vshll.u32 %v2103, 16
      %v2321 = vor.u32 %v2318, %v2319
      %v2322 = vsel %vm840, %v2314, %v2321
      %v2324 = vshrl.u32 %v2104, 16
      %v2326 = vrot.slane %v2324, 7
      %v2327 = vrot.slane %v2326, 4
      %v2329 = vshrl.u32 %v2105, 16
      %v2331 = vrot.slane %v2329, 7
      %v2332 = vshll.u32 %v2105, 16
      %v2334 = vor.u32 %v2331, %v2332
      %v2335 = vsel %vm840, %v2327, %v2334
      %v2336 = vrot.slane %v2331, 4
      %v2338 = vshrl.u32 %v2106, 16
      %v2340 = vrot.slane %v2338, 7
      %v2341 = vshll.u32 %v2106, 16
      %v2343 = vor.u32 %v2340, %v2341
      %v2344 = vsel %vm840, %v2336, %v2343
      %v2346 = vshrl.u32 %v2107, 16
      %v2348 = vrot.slane %v2346, 7
      %v2349 = vrot.slane %v2348, 4
      %v2351 = vshrl.u32 %v2108, 16
      %v2353 = vrot.slane %v2351, 7
      %v2354 = vshll.u32 %v2108, 16
      %v2356 = vor.u32 %v2353, %v2354
      %v2357 = vsel %vm840, %v2349, %v2356
      %v2358 = vrot.slane %v2353, 4
      %v2360 = vshrl.u32 %v2109, 16
      %v2362 = vrot.slane %v2360, 7
      %v2363 = vshll.u32 %v2109, 16
      %v2365 = vor.u32 %v2362, %v2363
      %v2366 = vsel %vm840, %v2358, %v2365
      %v2368 = vshrl.u32 %v2110, 16
      %v2370 = vrot.slane %v2368, 7
      %v2371 = vrot.slane %v2370, 4
      %v2373 = vshrl.u32 %v2111, 16
      %v2375 = vrot.slane %v2373, 7
      %v2376 = vshll.u32 %v2111, 16
      %v2378 = vor.u32 %v2375, %v2376
      %v2379 = vsel %vm840, %v2371, %v2378
      %v2380 = vrot.slane %v2375, 4
      %v2382 = vshrl.u32 %v2112, 16
      %v2384 = vrot.slane %v2382, 7
      %v2385 = vshll.u32 %v2112, 16
      %v2387 = vor.u32 %v2384, %v2385
      %v2388 = vsel %vm840, %v2380, %v2387
      %v2390 = vshrl.u32 %v2113, 16
      %v2392 = vrot.slane %v2390, 7
      %v2393 = vrot.slane %v2392, 4
      %v2395 = vshrl.u32 %v2114, 16
      %v2397 = vrot.slane %v2395, 7
      %v2398 = vshll.u32 %v2114, 16
      %v2400 = vor.u32 %v2397, %v2398
      %v2401 = vsel %vm840, %v2393, %v2400
      %v2402 = vrot.slane %v2397, 4
      %v2404 = vshrl.u32 %v2115, 16
      %v2406 = vrot.slane %v2404, 7
      %v2407 = vshll.u32 %v2115, 16
      %v2409 = vor.u32 %v2406, %v2407
      %v2410 = vsel %vm840, %v2402, %v2409
      %v2412 = vshrl.u32 %v2116, 16
      %v2414 = vrot.slane %v2412, 7
      %v2415 = vrot.slane %v2414, 4
      %v2417 = vshrl.u32 %v2117, 16
      %v2419 = vrot.slane %v2417, 7
      %v2420 = vshll.u32 %v2117, 16
      %v2422 = vor.u32 %v2419, %v2420
      %v2423 = vsel %vm840, %v2415, %v2422
      %v2424 = vrot.slane %v2419, 4
      %v2426 = vshrl.u32 %v2118, 16
      %v2428 = vrot.slane %v2426, 7
      %v2429 = vshll.u32 %v2118, 16
      %v2431 = vor.u32 %v2428, %v2429
      %v2432 = vsel %vm840, %v2424, %v2431
      %v2434 = vshrl.u32 %v2119, 16
      %v2436 = vrot.slane %v2434, 7
      %v2437 = vrot.slane %v2436, 4
      %v2439 = vshrl.u32 %v2120, 16
      %v2441 = vrot.slane %v2439, 7
      %v2442 = vshll.u32 %v2120, 16
      %v2444 = vor.u32 %v2441, %v2442
      %v2445 = vsel %vm840, %v2437, %v2444
      %v2446 = vrot.slane %v2441, 4
      %v2448 = vshrl.u32 %v2121, 16
      %v2450 = vrot.slane %v2448, 7
      %v2451 = vshll.u32 %v2121, 16
      %v2453 = vor.u32 %v2450, %v2451
      %v2454 = vsel %vm840, %v2446, %v2453
      %v2456 = vshrl.u32 %v2122, 16
      %v2458 = vrot.slane %v2456, 7
      %v2459 = vrot.slane %v2458, 4
      %v2461 = vshrl.u32 %v2123, 16
      %v2463 = vrot.slane %v2461, 7
      %v2464 = vshll.u32 %v2123, 16
      %v2466 = vor.u32 %v2463, %v2464
      %v2467 = vsel %vm840, %v2459, %v2466
      %v2468 = vrot.slane %v2463, 4
      %v2470 = vshrl.u32 %v2124, 16
      %v2472 = vrot.slane %v2470, 7
      %v2473 = vshll.u32 %v2124, 16
      %v2475 = vor.u32 %v2472, %v2473
      %v2476 = vsel %vm840, %v2468, %v2475
      %v2477 = vld [vmem:[%s2076 + $0x10] sm:$0x1]
      %v2478 = vld [vmem:[%s2076 + $0x24] sm:$0x1]
      %v2479 = vld [vmem:[%s2076 + $0x38] sm:$0x1]
      %v2480 = vld [vmem:[%s2076 + $0x4c] sm:$0x1]
      %v2481 = vld [vmem:[%s2076 + $0x60] sm:$0x1]
      %v2482 = vld [vmem:[%s2076 + $0x74] sm:$0x1]
      %v2483 = vld [vmem:[%s2076 + $0x88] sm:$0x1]
      %v2484 = vld [vmem:[%s2076 + $0x9c] sm:$0x1]
      %v2485 = vld [vmem:[%s2076 + $0xb0] sm:$0x1]
      %v2486 = vld [vmem:[%s2076 + $0xc4] sm:$0x1]
      %v2487 = vld [vmem:[%s2076 + $0xd8] sm:$0x1]
      %v2488 = vld [vmem:[%s2076 + $0xec] sm:$0x1]
      %v2489 = vld [vmem:[%s2076 + $0x100] sm:$0x1]
      %v2490 = vld [vmem:[%s2076 + $0x114] sm:$0x1]
      %v2491 = vld [vmem:[%s2076 + $0x128] sm:$0x1]
      %v2492 = vld [vmem:[%s2076 + $0x13c] sm:$0x1]
      %v2493 = vrot.slane %v2131, 4
      %v2494 = vrot.slane %v2134, 5
      %v2495 = vor.u32 %v2493, %v2494
      %v2496 = vrot.slane %v2495, 4
      %v2497 = vrot.slane %v2143, 5
      %v2498 = vsel %vm1211, %v2496, %v2497
      %v2499 = vrot.slane %v2140, 4
      %v2500 = vor.u32 %v2499, %v2497
      %v2501 = vrot.slane %v2500, 4
      %v2503 = vshll.u32 %v2477, 16
      %v2505 = vrot.slane %v2503, 5
      %v2506 = vsel %vm1211, %v2501, %v2505
      %v2507 = vrot.slane %v2153, 4
      %v2508 = vrot.slane %v2156, 5
      %v2509 = vor.u32 %v2507, %v2508
      %v2510 = vrot.slane %v2509, 4
      %v2511 = vrot.slane %v2165, 5
      %v2512 = vsel %vm1211, %v2510, %v2511
      %v2513 = vrot.slane %v2162, 4
      %v2514 = vor.u32 %v2513, %v2511
      %v2515 = vrot.slane %v2514, 4
      %v2517 = vshll.u32 %v2478, 16
      %v2519 = vrot.slane %v2517, 5
      %v2520 = vsel %vm1211, %v2515, %v2519
      %v2521 = vrot.slane %v2175, 4
      %v2522 = vrot.slane %v2178, 5
      %v2523 = vor.u32 %v2521, %v2522
      %v2524 = vrot.slane %v2523, 4
      %v2525 = vrot.slane %v2187, 5
      %v2526 = vsel %vm1211, %v2524, %v2525
      %v2527 = vrot.slane %v2184, 4
      %v2528 = vor.u32 %v2527, %v2525
      %v2529 = vrot.slane %v2528, 4
      %v2531 = vshll.u32 %v2479, 16
      %v2533 = vrot.slane %v2531, 5
      %v2534 = vsel %vm1211, %v2529, %v2533
      %v2535 = vrot.slane %v2197, 4
      %v2536 = vrot.slane %v2200, 5
      %v2537 = vor.u32 %v2535, %v2536
      %v2538 = vrot.slane %v2537, 4
      %v2539 = vrot.slane %v2209, 5
      %v2540 = vsel %vm1211, %v2538, %v2539
      %v2541 = vrot.slane %v2206, 4
      %v2542 = vor.u32 %v2541, %v2539
      %v2543 = vrot.slane %v2542, 4
      %v2545 = vshll.u32 %v2480, 16
      %v2547 = vrot.slane %v2545, 5
      %v2548 = vsel %vm1211, %v2543, %v2547
      %v2549 = vrot.slane %v2219, 4
      %v2550 = vrot.slane %v2222, 5
      %v2551 = vor.u32 %v2549, %v2550
      %v2552 = vrot.slane %v2551, 4
      %v2553 = vrot.slane %v2231, 5
      %v2554 = vsel %vm1211, %v2552, %v2553
      %v2555 = vrot.slane %v2228, 4
      %v2556 = vor.u32 %v2555, %v2553
      %v2557 = vrot.slane %v2556, 4
      %v2559 = vshll.u32 %v2481, 16
      %v2561 = vrot.slane %v2559, 5
      %v2562 = vsel %vm1211, %v2557, %v2561
      %v2563 = vrot.slane %v2241, 4
      %v2564 = vrot.slane %v2244, 5
      %v2565 = vor.u32 %v2563, %v2564
      %v2566 = vrot.slane %v2565, 4
      %v2567 = vrot.slane %v2253, 5
      %v2568 = vsel %vm1211, %v2566, %v2567
      %v2569 = vrot.slane %v2250, 4
      %v2570 = vor.u32 %v2569, %v2567
      %v2571 = vrot.slane %v2570, 4
      %v2573 = vshll.u32 %v2482, 16
      %v2575 = vrot.slane %v2573, 5
      %v2576 = vsel %vm1211, %v2571, %v2575
      %v2577 = vrot.slane %v2263, 4
      %v2578 = vrot.slane %v2266, 5
      %v2579 = vor.u32 %v2577, %v2578
      %v2580 = vrot.slane %v2579, 4
      %v2581 = vrot.slane %v2275, 5
      %v2582 = vsel %vm1211, %v2580, %v2581
      %v2583 = vrot.slane %v2272, 4
      %v2584 = vor.u32 %v2583, %v2581
      %v2585 = vrot.slane %v2584, 4
      %v2587 = vshll.u32 %v2483, 16
      %v2589 = vrot.slane %v2587, 5
      %v2590 = vsel %vm1211, %v2585, %v2589
      %v2591 = vrot.slane %v2285, 4
      %v2592 = vrot.slane %v2288, 5
      %v2593 = vor.u32 %v2591, %v2592
      %v2594 = vrot.slane %v2593, 4
      %v2595 = vrot.slane %v2297, 5
      %v2596 = vsel %vm1211, %v2594, %v2595
      %v2597 = vrot.slane %v2294, 4
      %v2598 = vor.u32 %v2597, %v2595
      %v2599 = vrot.slane %v2598, 4
      %v2601 = vshll.u32 %v2484, 16
      %v2603 = vrot.slane %v2601, 5
      %v2604 = vsel %vm1211, %v2599, %v2603
      %v2605 = vrot.slane %v2307, 4
      %v2606 = vrot.slane %v2310, 5
      %v2607 = vor.u32 %v2605, %v2606
      %v2608 = vrot.slane %v2607, 4
      %v2609 = vrot.slane %v2319, 5
      %v2610 = vsel %vm1211, %v2608, %v2609
      %v2611 = vrot.slane %v2316, 4
      %v2612 = vor.u32 %v2611, %v2609
      %v2613 = vrot.slane %v2612, 4
      %v2615 = vshll.u32 %v2485, 16
      %v2617 = vrot.slane %v2615, 5
      %v2618 = vsel %vm1211, %v2613, %v2617
      %v2619 = vrot.slane %v2329, 4
      %v2620 = vrot.slane %v2332, 5
      %v2621 = vor.u32 %v2619, %v2620
      %v2622 = vrot.slane %v2621, 4
      %v2623 = vrot.slane %v2341, 5
      %v2624 = vsel %vm1211, %v2622, %v2623
      %v2625 = vrot.slane %v2338, 4
      %v2626 = vor.u32 %v2625, %v2623
      %v2627 = vrot.slane %v2626, 4
      %v2629 = vshll.u32 %v2486, 16
      %v2631 = vrot.slane %v2629, 5
      %v2632 = vsel %vm1211, %v2627, %v2631
      %v2633 = vrot.slane %v2351, 4
      %v2634 = vrot.slane %v2354, 5
      %v2635 = vor.u32 %v2633, %v2634
      %v2636 = vrot.slane %v2635, 4
      %v2637 = vrot.slane %v2363, 5
      %v2638 = vsel %vm1211, %v2636, %v2637
      %v2639 = vrot.slane %v2360, 4
      %v2640 = vor.u32 %v2639, %v2637
      %v2641 = vrot.slane %v2640, 4
      %v2643 = vshll.u32 %v2487, 16
      %v2645 = vrot.slane %v2643, 5
      %v2646 = vsel %vm1211, %v2641, %v2645
      %v2647 = vrot.slane %v2373, 4
      %v2648 = vrot.slane %v2376, 5
      %v2649 = vor.u32 %v2647, %v2648
      %v2650 = vrot.slane %v2649, 4
      %v2651 = vrot.slane %v2385, 5
      %v2652 = vsel %vm1211, %v2650, %v2651
      %v2653 = vrot.slane %v2382, 4
      %v2654 = vor.u32 %v2653, %v2651
      %v2655 = vrot.slane %v2654, 4
      %v2657 = vshll.u32 %v2488, 16
      %v2659 = vrot.slane %v2657, 5
      %v2660 = vsel %vm1211, %v2655, %v2659
      %v2661 = vrot.slane %v2395, 4
      %v2662 = vrot.slane %v2398, 5
      %v2663 = vor.u32 %v2661, %v2662
      %v2664 = vrot.slane %v2663, 4
      %v2665 = vrot.slane %v2407, 5
      %v2666 = vsel %vm1211, %v2664, %v2665
      %v2667 = vrot.slane %v2404, 4
      %v2668 = vor.u32 %v2667, %v2665
      %v2669 = vrot.slane %v2668, 4
      %v2671 = vshll.u32 %v2489, 16
      %v2673 = vrot.slane %v2671, 5
      %v2674 = vsel %vm1211, %v2669, %v2673
      %v2675 = vrot.slane %v2417, 4
      %v2676 = vrot.slane %v2420, 5
      %v2677 = vor.u32 %v2675, %v2676
      %v2678 = vrot.slane %v2677, 4
      %v2679 = vrot.slane %v2429, 5
      %v2680 = vsel %vm1211, %v2678, %v2679
      %v2681 = vrot.slane %v2426, 4
      %v2682 = vor.u32 %v2681, %v2679
      %v2683 = vrot.slane %v2682, 4
      %v2685 = vshll.u32 %v2490, 16
      %v2687 = vrot.slane %v2685, 5
      %v2688 = vsel %vm1211, %v2683, %v2687
      %v2689 = vrot.slane %v2439, 4
      %v2690 = vrot.slane %v2442, 5
      %v2691 = vor.u32 %v2689, %v2690
      %v2692 = vrot.slane %v2691, 4
      %v2693 = vrot.slane %v2451, 5
      %v2694 = vsel %vm1211, %v2692, %v2693
      %v2695 = vrot.slane %v2448, 4
      %v2696 = vor.u32 %v2695, %v2693
      %v2697 = vrot.slane %v2696, 4
      %v2699 = vshll.u32 %v2491, 16
      %v2701 = vrot.slane %v2699, 5
      %v2702 = vsel %vm1211, %v2697, %v2701
      %v2703 = vrot.slane %v2461, 4
      %v2704 = vrot.slane %v2464, 5
      %v2705 = vor.u32 %v2703, %v2704
      %v2706 = vrot.slane %v2705, 4
      %v2707 = vrot.slane %v2473, 5
      %v2708 = vsel %vm1211, %v2706, %v2707
      %v2709 = vrot.slane %v2470, 4
      %v2710 = vor.u32 %v2709, %v2707
      %v2711 = vrot.slane %v2710, 4
      %v2713 = vshll.u32 %v2492, 16
      %v2715 = vrot.slane %v2713, 5
      %v2716 = vsel %vm1211, %v2711, %v2715
      %v2717 = vunpack.c.l.b16 %v853
      %v2718 = vunpack.c.l.b16 %v862
      %v2719 = vunpack.c.l.b16 %v875
      %v2720 = vunpack.c.l.b16 %v884
      %v2721 = vunpack.c.l.b16 %v897
      %v2722 = vunpack.c.l.b16 %v906
      %v2723 = vunpack.c.l.b16 %v919
      %v2724 = vunpack.c.l.b16 %v928
      %v2725 = vunpack.c.l.b16 %v941
      %v2726 = vunpack.c.l.b16 %v950
      %v2727 = vunpack.c.l.b16 %v963
      %v2728 = vunpack.c.l.b16 %v972
      %v2729 = vunpack.c.l.b16 %v985
      %v2730 = vunpack.c.l.b16 %v994
      %v2731 = vunpack.c.l.b16 %v1007
      %v2732 = vunpack.c.l.b16 %v1016
      %v2733 = vunpack.c.l.b16 %v1029
      %v2734 = vunpack.c.l.b16 %v1038
      %v2735 = vunpack.c.l.b16 %v1051
      %v2736 = vunpack.c.l.b16 %v1060
      %v2737 = vunpack.c.l.b16 %v1073
      %v2738 = vunpack.c.l.b16 %v1082
      %v2739 = vunpack.c.l.b16 %v1095
      %v2740 = vunpack.c.l.b16 %v1104
      %v2741 = vunpack.c.l.b16 %v1117
      %v2742 = vunpack.c.l.b16 %v1126
      %v2743 = vunpack.c.l.b16 %v1139
      %v2744 = vunpack.c.l.b16 %v1148
      %v2745 = vunpack.c.l.b16 %v1161
      %v2746 = vunpack.c.l.b16 %v1170
      %v2747 = vunpack.c.l.b16 %v1183
      %v2748 = vunpack.c.l.b16 %v1192
      %v2749 = vpack.c.b16 %v2718, %v2717
      %v2750 = vpack.c.b16 %v2720, %v2719
      %v2751 = vpack.c.b16 %v2722, %v2721
      %v2752 = vpack.c.b16 %v2724, %v2723
      %v2753 = vpack.c.b16 %v2726, %v2725
      %v2754 = vpack.c.b16 %v2728, %v2727
      %v2755 = vpack.c.b16 %v2730, %v2729
      %v2756 = vpack.c.b16 %v2732, %v2731
      %v2757 = vpack.c.b16 %v2734, %v2733
      %v2758 = vpack.c.b16 %v2736, %v2735
      %v2759 = vpack.c.b16 %v2738, %v2737
      %v2760 = vpack.c.b16 %v2740, %v2739
      %v2761 = vpack.c.b16 %v2742, %v2741
      %v2762 = vpack.c.b16 %v2744, %v2743
      %v2763 = vpack.c.b16 %v2746, %v2745
      %v2764 = vpack.c.b16 %v2748, %v2747
      %v2813 = vunpack.c.l.b16 %v792
      %v2814 = vunpack.c.l.b16 %v793
      %v2815 = vunpack.c.l.b16 %v795
      %v2816 = vunpack.c.l.b16 %v796
      %v2817 = vunpack.c.l.b16 %v798
      %v2818 = vunpack.c.l.b16 %v799
      %v2819 = vunpack.c.l.b16 %v801
      %v2820 = vunpack.c.l.b16 %v802
      %v2821 = vunpack.c.l.b16 %v804
      %v2822 = vunpack.c.l.b16 %v805
      %v2823 = vunpack.c.l.b16 %v807
      %v2824 = vunpack.c.l.b16 %v808
      %v2825 = vunpack.c.l.b16 %v810
      %v2826 = vunpack.c.l.b16 %v811
      %v2827 = vunpack.c.l.b16 %v813
      %v2828 = vunpack.c.l.b16 %v814
      %v2829 = vunpack.c.l.b16 %v816
      %v2830 = vunpack.c.l.b16 %v817
      %v2831 = vunpack.c.l.b16 %v819
      %v2832 = vunpack.c.l.b16 %v820
      %v2833 = vunpack.c.l.b16 %v822
      %v2834 = vunpack.c.l.b16 %v823
      %v2835 = vunpack.c.l.b16 %v825
      %v2836 = vunpack.c.l.b16 %v826
      %v2837 = vunpack.c.l.b16 %v828
      %v2838 = vunpack.c.l.b16 %v829
      %v2839 = vunpack.c.l.b16 %v831
      %v2840 = vunpack.c.l.b16 %v832
      %v2841 = vunpack.c.l.b16 %v834
      %v2842 = vunpack.c.l.b16 %v835
      %v2843 = vunpack.c.l.b16 %v837
      %v2844 = vunpack.c.l.b16 %v838
      %v2845 = vpack.c.b16 %v2814, %v2813
      %v2846 = vpack.c.b16 %v2816, %v2815
      %v2847 = vpack.c.b16 %v2818, %v2817
      %v2848 = vpack.c.b16 %v2820, %v2819
      %v2849 = vpack.c.b16 %v2822, %v2821
      %v2850 = vpack.c.b16 %v2824, %v2823
      %v2851 = vpack.c.b16 %v2826, %v2825
      %v2852 = vpack.c.b16 %v2828, %v2827
      %v2853 = vpack.c.b16 %v2830, %v2829
      %v2854 = vpack.c.b16 %v2832, %v2831
      %v2855 = vpack.c.b16 %v2834, %v2833
      %v2856 = vpack.c.b16 %v2836, %v2835
      %v2857 = vpack.c.b16 %v2838, %v2837
      %v2858 = vpack.c.b16 %v2840, %v2839
      %v2859 = vpack.c.b16 %v2842, %v2841
      %v2860 = vpack.c.b16 %v2844, %v2843
      %v2877 = vunpack.c.l.b16 %v1217
      %v2878 = vunpack.c.l.b16 %v1225
      %v2879 = vunpack.c.l.b16 %v1231
      %v2880 = vunpack.c.l.b16 %v1239
      %v2881 = vunpack.c.l.b16 %v1245
      %v2882 = vunpack.c.l.b16 %v1253
      %v2883 = vunpack.c.l.b16 %v1259
      %v2884 = vunpack.c.l.b16 %v1267
      %v2885 = vunpack.c.l.b16 %v1273
      %v2886 = vunpack.c.l.b16 %v1281
      %v2887 = vunpack.c.l.b16 %v1287
      %v2888 = vunpack.c.l.b16 %v1295
      %v2889 = vunpack.c.l.b16 %v1301
      %v2890 = vunpack.c.l.b16 %v1309
      %v2891 = vunpack.c.l.b16 %v1315
      %v2892 = vunpack.c.l.b16 %v1323
      %v2893 = vunpack.c.l.b16 %v1329
      %v2894 = vunpack.c.l.b16 %v1337
      %v2895 = vunpack.c.l.b16 %v1343
      %v2896 = vunpack.c.l.b16 %v1351
      %v2897 = vunpack.c.l.b16 %v1357
      %v2898 = vunpack.c.l.b16 %v1365
      %v2899 = vunpack.c.l.b16 %v1371
      %v2900 = vunpack.c.l.b16 %v1379
      %v2901 = vunpack.c.l.b16 %v1385
      %v2902 = vunpack.c.l.b16 %v1393
      %v2903 = vunpack.c.l.b16 %v1399
      %v2904 = vunpack.c.l.b16 %v1407
      %v2905 = vunpack.c.l.b16 %v1413
      %v2906 = vunpack.c.l.b16 %v1421
      %v2907 = vunpack.c.l.b16 %v1427
      %v2908 = vunpack.c.l.b16 %v1435
      %v2909 = vpack.c.b16 %v2878, %v2877
      %v2910 = vpack.c.b16 %v2880, %v2879
      %v2911 = vpack.c.b16 %v2882, %v2881
      %v2912 = vpack.c.b16 %v2884, %v2883
      %v2913 = vpack.c.b16 %v2886, %v2885
      %v2914 = vpack.c.b16 %v2888, %v2887
      %v2915 = vpack.c.b16 %v2890, %v2889
      %v2916 = vpack.c.b16 %v2892, %v2891
      %v2917 = vpack.c.b16 %v2894, %v2893
      %v2918 = vpack.c.b16 %v2896, %v2895
      %v2919 = vpack.c.b16 %v2898, %v2897
      %v2920 = vpack.c.b16 %v2900, %v2899
      %v2921 = vpack.c.b16 %v2902, %v2901
      %v2922 = vpack.c.b16 %v2904, %v2903
      %v2923 = vpack.c.b16 %v2906, %v2905
      %v2924 = vpack.c.b16 %v2908, %v2907
      %v2941 = vunpack.c.l.b16 %v1496
      %v2942 = vunpack.c.l.b16 %v1505
      %v2943 = vunpack.c.l.b16 %v1518
      %v2944 = vunpack.c.l.b16 %v1527
      %v2945 = vunpack.c.l.b16 %v1540
      %v2946 = vunpack.c.l.b16 %v1549
      %v2947 = vunpack.c.l.b16 %v1562
      %v2948 = vunpack.c.l.b16 %v1571
      %v2949 = vunpack.c.l.b16 %v1584
      %v2950 = vunpack.c.l.b16 %v1593
      %v2951 = vunpack.c.l.b16 %v1606
      %v2952 = vunpack.c.l.b16 %v1615
      %v2953 = vunpack.c.l.b16 %v1628
      %v2954 = vunpack.c.l.b16 %v1637
      %v2955 = vunpack.c.l.b16 %v1650
      %v2956 = vunpack.c.l.b16 %v1659
      %v2957 = vunpack.c.l.b16 %v1672
      %v2958 = vunpack.c.l.b16 %v1681
      %v2959 = vunpack.c.l.b16 %v1694
      %v2960 = vunpack.c.l.b16 %v1703
      %v2961 = vunpack.c.l.b16 %v1716
      %v2962 = vunpack.c.l.b16 %v1725
      %v2963 = vunpack.c.l.b16 %v1738
      %v2964 = vunpack.c.l.b16 %v1747
      %v2965 = vunpack.c.l.b16 %v1760
      %v2966 = vunpack.c.l.b16 %v1769
      %v2967 = vunpack.c.l.b16 %v1782
      %v2968 = vunpack.c.l.b16 %v1791
      %v2969 = vunpack.c.l.b16 %v1804
      %v2970 = vunpack.c.l.b16 %v1813
      %v2971 = vunpack.c.l.b16 %v1826
      %v2972 = vunpack.c.l.b16 %v1835
      %v2973 = vpack.c.b16 %v2942, %v2941
      %v2974 = vpack.c.b16 %v2944, %v2943
      %v2975 = vpack.c.b16 %v2946, %v2945
      %v2976 = vpack.c.b16 %v2948, %v2947
      %v2977 = vpack.c.b16 %v2950, %v2949
      %v2978 = vpack.c.b16 %v2952, %v2951
      %v2979 = vpack.c.b16 %v2954, %v2953
      %v2980 = vpack.c.b16 %v2956, %v2955
      %v2981 = vpack.c.b16 %v2958, %v2957
      %v2982 = vpack.c.b16 %v2960, %v2959
      %v2983 = vpack.c.b16 %v2962, %v2961
      %v2984 = vpack.c.b16 %v2964, %v2963
      %v2985 = vpack.c.b16 %v2966, %v2965
      %v2986 = vpack.c.b16 %v2968, %v2967
      %v2987 = vpack.c.b16 %v2970, %v2969
      %v2988 = vpack.c.b16 %v2972, %v2971
      %v3037 = vunpack.c.l.b16 %v1437
      %v3038 = vunpack.c.l.b16 %v1438
      %v3039 = vunpack.c.l.b16 %v1440
      %v3040 = vunpack.c.l.b16 %v1441
      %v3041 = vunpack.c.l.b16 %v1443
      %v3042 = vunpack.c.l.b16 %v1444
      %v3043 = vunpack.c.l.b16 %v1446
      %v3044 = vunpack.c.l.b16 %v1447
      %v3045 = vunpack.c.l.b16 %v1449
      %v3046 = vunpack.c.l.b16 %v1450
      %v3047 = vunpack.c.l.b16 %v1452
      %v3048 = vunpack.c.l.b16 %v1453
      %v3049 = vunpack.c.l.b16 %v1455
      %v3050 = vunpack.c.l.b16 %v1456
      %v3051 = vunpack.c.l.b16 %v1458
      %v3052 = vunpack.c.l.b16 %v1459
      %v3053 = vunpack.c.l.b16 %v1461
      %v3054 = vunpack.c.l.b16 %v1462
      %v3055 = vunpack.c.l.b16 %v1464
      %v3056 = vunpack.c.l.b16 %v1465
      %v3057 = vunpack.c.l.b16 %v1467
      %v3058 = vunpack.c.l.b16 %v1468
      %v3059 = vunpack.c.l.b16 %v1470
      %v3060 = vunpack.c.l.b16 %v1471
      %v3061 = vunpack.c.l.b16 %v1473
      %v3062 = vunpack.c.l.b16 %v1474
      %v3063 = vunpack.c.l.b16 %v1476
      %v3064 = vunpack.c.l.b16 %v1477
      %v3065 = vunpack.c.l.b16 %v1479
      %v3066 = vunpack.c.l.b16 %v1480
      %v3067 = vunpack.c.l.b16 %v1482
      %v3068 = vunpack.c.l.b16 %v1483
      %v3069 = vpack.c.b16 %v3038, %v3037
      %v3070 = vpack.c.b16 %v3040, %v3039
      %v3071 = vpack.c.b16 %v3042, %v3041
      %v3072 = vpack.c.b16 %v3044, %v3043
      %v3073 = vpack.c.b16 %v3046, %v3045
      %v3074 = vpack.c.b16 %v3048, %v3047
      %v3075 = vpack.c.b16 %v3050, %v3049
      %v3076 = vpack.c.b16 %v3052, %v3051
      %v3077 = vpack.c.b16 %v3054, %v3053
      %v3078 = vpack.c.b16 %v3056, %v3055
      %v3079 = vpack.c.b16 %v3058, %v3057
      %v3080 = vpack.c.b16 %v3060, %v3059
      %v3081 = vpack.c.b16 %v3062, %v3061
      %v3082 = vpack.c.b16 %v3064, %v3063
      %v3083 = vpack.c.b16 %v3066, %v3065
      %v3084 = vpack.c.b16 %v3068, %v3067
      %v3101 = vunpack.c.l.b16 %v1857
      %v3102 = vunpack.c.l.b16 %v1865
      %v3103 = vunpack.c.l.b16 %v1871
      %v3104 = vunpack.c.l.b16 %v1879
      %v3105 = vunpack.c.l.b16 %v1885
      %v3106 = vunpack.c.l.b16 %v1893
      %v3107 = vunpack.c.l.b16 %v1899
      %v3108 = vunpack.c.l.b16 %v1907
      %v3109 = vunpack.c.l.b16 %v1913
      %v3110 = vunpack.c.l.b16 %v1921
      %v3111 = vunpack.c.l.b16 %v1927
      %v3112 = vunpack.c.l.b16 %v1935
      %v3113 = vunpack.c.l.b16 %v1941
      %v3114 = vunpack.c.l.b16 %v1949
      %v3115 = vunpack.c.l.b16 %v1955
      %v3116 = vunpack.c.l.b16 %v1963
      %v3117 = vunpack.c.l.b16 %v1969
      %v3118 = vunpack.c.l.b16 %v1977
      %v3119 = vunpack.c.l.b16 %v1983
      %v3120 = vunpack.c.l.b16 %v1991
      %v3121 = vunpack.c.l.b16 %v1997
      %v3122 = vunpack.c.l.b16 %v2005
      %v3123 = vunpack.c.l.b16 %v2011
      %v3124 = vunpack.c.l.b16 %v2019
      %v3125 = vunpack.c.l.b16 %v2025
      %v3126 = vunpack.c.l.b16 %v2033
      %v3127 = vunpack.c.l.b16 %v2039
      %v3128 = vunpack.c.l.b16 %v2047
      %v3129 = vunpack.c.l.b16 %v2053
      %v3130 = vunpack.c.l.b16 %v2061
      %v3131 = vunpack.c.l.b16 %v2067
      %v3132 = vunpack.c.l.b16 %v2075
      %v3133 = vpack.c.b16 %v3102, %v3101
      %v3134 = vpack.c.b16 %v3104, %v3103
      %v3135 = vpack.c.b16 %v3106, %v3105
      %v3136 = vpack.c.b16 %v3108, %v3107
      %v3137 = vpack.c.b16 %v3110, %v3109
      %v3138 = vpack.c.b16 %v3112, %v3111
      %v3139 = vpack.c.b16 %v3114, %v3113
      %v3140 = vpack.c.b16 %v3116, %v3115
      %v3141 = vpack.c.b16 %v3118, %v3117
      %v3142 = vpack.c.b16 %v3120, %v3119
      %v3143 = vpack.c.b16 %v3122, %v3121
      %v3144 = vpack.c.b16 %v3124, %v3123
      %v3145 = vpack.c.b16 %v3126, %v3125
      %v3146 = vpack.c.b16 %v3128, %v3127
      %v3147 = vpack.c.b16 %v3130, %v3129
      %v3148 = vpack.c.b16 %v3132, %v3131
      %v3165 = vunpack.c.l.b16 %v2137
      %v3166 = vunpack.c.l.b16 %v2146
      %v3167 = vunpack.c.l.b16 %v2159
      %v3168 = vunpack.c.l.b16 %v2168
      %v3169 = vunpack.c.l.b16 %v2181
      %v3170 = vunpack.c.l.b16 %v2190
      %v3171 = vunpack.c.l.b16 %v2203
      %v3172 = vunpack.c.l.b16 %v2212
      %v3173 = vunpack.c.l.b16 %v2225
      %v3174 = vunpack.c.l.b16 %v2234
      %v3175 = vunpack.c.l.b16 %v2247
      %v3176 = vunpack.c.l.b16 %v2256
      %v3177 = vunpack.c.l.b16 %v2269
      %v3178 = vunpack.c.l.b16 %v2278
      %v3179 = vunpack.c.l.b16 %v2291
      %v3180 = vunpack.c.l.b16 %v2300
      %v3181 = vunpack.c.l.b16 %v2313
      %v3182 = vunpack.c.l.b16 %v2322
      %v3183 = vunpack.c.l.b16 %v2335
      %v3184 = vunpack.c.l.b16 %v2344
      %v3185 = vunpack.c.l.b16 %v2357
      %v3186 = vunpack.c.l.b16 %v2366
      %v3187 = vunpack.c.l.b16 %v2379
      %v3188 = vunpack.c.l.b16 %v2388
      %v3189 = vunpack.c.l.b16 %v2401
      %v3190 = vunpack.c.l.b16 %v2410
      %v3191 = vunpack.c.l.b16 %v2423
      %v3192 = vunpack.c.l.b16 %v2432
      %v3193 = vunpack.c.l.b16 %v2445
      %v3194 = vunpack.c.l.b16 %v2454
      %v3195 = vunpack.c.l.b16 %v2467
      %v3196 = vunpack.c.l.b16 %v2476
      %v3197 = vpack.c.b16 %v3166, %v3165
      %v3198 = vpack.c.b16 %v3168, %v3167
      %v3199 = vpack.c.b16 %v3170, %v3169
      %v3200 = vpack.c.b16 %v3172, %v3171
      %v3201 = vpack.c.b16 %v3174, %v3173
      %v3202 = vpack.c.b16 %v3176, %v3175
      %v3203 = vpack.c.b16 %v3178, %v3177
      %v3204 = vpack.c.b16 %v3180, %v3179
      %v3205 = vpack.c.b16 %v3182, %v3181
      %v3206 = vpack.c.b16 %v3184, %v3183
      %v3207 = vpack.c.b16 %v3186, %v3185
      %v3208 = vpack.c.b16 %v3188, %v3187
      %v3209 = vpack.c.b16 %v3190, %v3189
      %v3210 = vpack.c.b16 %v3192, %v3191
      %v3211 = vpack.c.b16 %v3194, %v3193
      %v3212 = vpack.c.b16 %v3196, %v3195
      %v3261 = vunpack.c.l.b16 %v2078
      %v3262 = vunpack.c.l.b16 %v2079
      %v3263 = vunpack.c.l.b16 %v2081
      %v3264 = vunpack.c.l.b16 %v2082
      %v3265 = vunpack.c.l.b16 %v2084
      %v3266 = vunpack.c.l.b16 %v2085
      %v3267 = vunpack.c.l.b16 %v2087
      %v3268 = vunpack.c.l.b16 %v2088
      %v3269 = vunpack.c.l.b16 %v2090
      %v3270 = vunpack.c.l.b16 %v2091
      %v3271 = vunpack.c.l.b16 %v2093
      %v3272 = vunpack.c.l.b16 %v2094
      %v3273 = vunpack.c.l.b16 %v2096
      %v3274 = vunpack.c.l.b16 %v2097
      %v3275 = vunpack.c.l.b16 %v2099
      %v3276 = vunpack.c.l.b16 %v2100
      %v3277 = vunpack.c.l.b16 %v2102
      %v3278 = vunpack.c.l.b16 %v2103
      %v3279 = vunpack.c.l.b16 %v2105
      %v3280 = vunpack.c.l.b16 %v2106
      %v3281 = vunpack.c.l.b16 %v2108
      %v3282 = vunpack.c.l.b16 %v2109
      %v3283 = vunpack.c.l.b16 %v2111
      %v3284 = vunpack.c.l.b16 %v2112
      %v3285 = vunpack.c.l.b16 %v2114
      %v3286 = vunpack.c.l.b16 %v2115
      %v3287 = vunpack.c.l.b16 %v2117
      %v3288 = vunpack.c.l.b16 %v2118
      %v3289 = vunpack.c.l.b16 %v2120
      %v3290 = vunpack.c.l.b16 %v2121
      %v3291 = vunpack.c.l.b16 %v2123
      %v3292 = vunpack.c.l.b16 %v2124
      %v3293 = vpack.c.b16 %v3262, %v3261
      %v3294 = vpack.c.b16 %v3264, %v3263
      %v3295 = vpack.c.b16 %v3266, %v3265
      %v3296 = vpack.c.b16 %v3268, %v3267
      %v3297 = vpack.c.b16 %v3270, %v3269
      %v3298 = vpack.c.b16 %v3272, %v3271
      %v3299 = vpack.c.b16 %v3274, %v3273
      %v3300 = vpack.c.b16 %v3276, %v3275
      %v3301 = vpack.c.b16 %v3278, %v3277
      %v3302 = vpack.c.b16 %v3280, %v3279
      %v3303 = vpack.c.b16 %v3282, %v3281
      %v3304 = vpack.c.b16 %v3284, %v3283
      %v3305 = vpack.c.b16 %v3286, %v3285
      %v3306 = vpack.c.b16 %v3288, %v3287
      %v3307 = vpack.c.b16 %v3290, %v3289
      %v3308 = vpack.c.b16 %v3292, %v3291
      %v3325 = vunpack.c.l.b16 %v2498
      %v3326 = vunpack.c.l.b16 %v2506
      %v3327 = vunpack.c.l.b16 %v2512
      %v3328 = vunpack.c.l.b16 %v2520
      %v3329 = vunpack.c.l.b16 %v2526
      %v3330 = vunpack.c.l.b16 %v2534
      %v3331 = vunpack.c.l.b16 %v2540
      %v3332 = vunpack.c.l.b16 %v2548
      %v3333 = vunpack.c.l.b16 %v2554
      %v3334 = vunpack.c.l.b16 %v2562
      %v3335 = vunpack.c.l.b16 %v2568
      %v3336 = vunpack.c.l.b16 %v2576
      %v3337 = vunpack.c.l.b16 %v2582
      %v3338 = vunpack.c.l.b16 %v2590
      %v3339 = vunpack.c.l.b16 %v2596
      %v3340 = vunpack.c.l.b16 %v2604
      %v3341 = vunpack.c.l.b16 %v2610
      %v3342 = vunpack.c.l.b16 %v2618
      %v3343 = vunpack.c.l.b16 %v2624
      %v3344 = vunpack.c.l.b16 %v2632
      %v3345 = vunpack.c.l.b16 %v2638
      %v3346 = vunpack.c.l.b16 %v2646
      %v3347 = vunpack.c.l.b16 %v2652
      %v3348 = vunpack.c.l.b16 %v2660
      %v3349 = vunpack.c.l.b16 %v2666
      %v3350 = vunpack.c.l.b16 %v2674
      %v3351 = vunpack.c.l.b16 %v2680
      %v3352 = vunpack.c.l.b16 %v2688
      %v3353 = vunpack.c.l.b16 %v2694
      %v3354 = vunpack.c.l.b16 %v2702
      %v3355 = vunpack.c.l.b16 %v2708
      %v3356 = vunpack.c.l.b16 %v2716
      %v3357 = vpack.c.b16 %v3326, %v3325
      %v3358 = vpack.c.b16 %v3328, %v3327
      %v3359 = vpack.c.b16 %v3330, %v3329
      %v3360 = vpack.c.b16 %v3332, %v3331
      %v3361 = vpack.c.b16 %v3334, %v3333
      %v3362 = vpack.c.b16 %v3336, %v3335
      %v3363 = vpack.c.b16 %v3338, %v3337
      %v3364 = vpack.c.b16 %v3340, %v3339
      %v3365 = vpack.c.b16 %v3342, %v3341
      %v3366 = vpack.c.b16 %v3344, %v3343
      %v3367 = vpack.c.b16 %v3346, %v3345
      %v3368 = vpack.c.b16 %v3348, %v3347
      %v3369 = vpack.c.b16 %v3350, %v3349
      %v3370 = vpack.c.b16 %v3352, %v3351
      %v3371 = vpack.c.b16 %v3354, %v3353
      %v3372 = vpack.c.b16 %v3356, %v3355
      %v3389 = vld [vmem:[%s3] sm:$0xff]
      %v3390 = vld [vmem:[%s3 + $0x8] sm:$0xff]
      %v3391 = vld [vmem:[%s3 + $0x10] sm:$0xff]
      %v3392 = vld [vmem:[%s3 + $0x18] sm:$0xff]
      %v3393 = vld [vmem:[%s3 + $0x20] sm:$0xff]
      %v3394 = vld [vmem:[%s3 + $0x28] sm:$0xff]
      %v3395 = vld [vmem:[%s3 + $0x30] sm:$0xff]
      %v3396 = vld [vmem:[%s3 + $0x38] sm:$0xff]
      %v3397 = vld [vmem:[%s3 + $0x40] sm:$0xff]
      %v3398 = vld [vmem:[%s3 + $0x48] sm:$0xff]
      %v3399 = vld [vmem:[%s3 + $0x50] sm:$0xff]
      %v3400 = vld [vmem:[%s3 + $0x58] sm:$0xff]
      %v3401 = vld [vmem:[%s3 + $0x60] sm:$0xff]
      %v3402 = vld [vmem:[%s3 + $0x68] sm:$0xff]
      %v3403 = vld [vmem:[%s3 + $0x70] sm:$0xff]
      %v3404 = vld [vmem:[%s3 + $0x78] sm:$0xff]
      %v3405 = vld [vmem:[%s3 + $0x80] sm:$0xff]
      %v3406 = vld [vmem:[%s3 + $0x88] sm:$0xff]
      %v3407 = vld [vmem:[%s3 + $0x90] sm:$0xff]
      %v3408 = vld [vmem:[%s3 + $0x98] sm:$0xff]
      %v3409 = vld [vmem:[%s3 + $0xa0] sm:$0xff]
      %v3410 = vld [vmem:[%s3 + $0xa8] sm:$0xff]
      %v3411 = vld [vmem:[%s3 + $0xb0] sm:$0xff]
      %v3412 = vld [vmem:[%s3 + $0xb8] sm:$0xff]
      %v3413 = vld [vmem:[%s3 + $0xc0] sm:$0xff]
      %v3414 = vld [vmem:[%s3 + $0xc8] sm:$0xff]
      %v3415 = vld [vmem:[%s3 + $0xd0] sm:$0xff]
      %v3416 = vld [vmem:[%s3 + $0xd8] sm:$0xff]
      %v3417 = vld [vmem:[%s3 + $0xe0] sm:$0xff]
      %v3418 = vld [vmem:[%s3 + $0xe8] sm:$0xff]
      %v3419 = vld [vmem:[%s3 + $0xf0] sm:$0xff]
      %v3420 = vld [vmem:[%s3 + $0xf8] sm:$0xff]
      %v3421 = vld [vmem:[%s3 + $0x100] sm:$0xff]
      %v3422 = vld [vmem:[%s3 + $0x108] sm:$0xff]
      %v3423 = vld [vmem:[%s3 + $0x110] sm:$0xff]
      %v3424 = vld [vmem:[%s3 + $0x118] sm:$0xff]
      %v3425 = vld [vmem:[%s3 + $0x120] sm:$0xff]
      %v3426 = vld [vmem:[%s3 + $0x128] sm:$0xff]
      %v3427 = vld [vmem:[%s3 + $0x130] sm:$0xff]
      %v3428 = vld [vmem:[%s3 + $0x138] sm:$0xff]
      %v3429 = vld [vmem:[%s3 + $0x140] sm:$0xff]
      %v3430 = vld [vmem:[%s3 + $0x148] sm:$0xff]
      %v3431 = vld [vmem:[%s3 + $0x150] sm:$0xff]
      %v3432 = vld [vmem:[%s3 + $0x158] sm:$0xff]
      %v3433 = vld [vmem:[%s3 + $0x160] sm:$0xff]
      %v3434 = vld [vmem:[%s3 + $0x168] sm:$0xff]
      %v3435 = vld [vmem:[%s3 + $0x170] sm:$0xff]
      %v3436 = vld [vmem:[%s3 + $0x178] sm:$0xff]
      %v3437 = vld [vmem:[%s3 + $0x180] sm:$0xff]
      %v3438 = vld [vmem:[%s3 + $0x188] sm:$0xff]
      %v3439 = vld [vmem:[%s3 + $0x190] sm:$0xff]
      %v3440 = vld [vmem:[%s3 + $0x198] sm:$0xff]
      %v3441 = vld [vmem:[%s3 + $0x1a0] sm:$0xff]
      %v3442 = vld [vmem:[%s3 + $0x1a8] sm:$0xff]
      %v3443 = vld [vmem:[%s3 + $0x1b0] sm:$0xff]
      %v3444 = vld [vmem:[%s3 + $0x1b8] sm:$0xff]
      %v3445 = vld [vmem:[%s3 + $0x1c0] sm:$0xff]
      %v3446 = vld [vmem:[%s3 + $0x1c8] sm:$0xff]
      %v3447 = vld [vmem:[%s3 + $0x1d0] sm:$0xff]
      %v3448 = vld [vmem:[%s3 + $0x1d8] sm:$0xff]
      %v3449 = vld [vmem:[%s3 + $0x1e0] sm:$0xff]
      %v3450 = vld [vmem:[%s3 + $0x1e8] sm:$0xff]
      %v3451 = vld [vmem:[%s3 + $0x1f0] sm:$0xff]
      %v3452 = vld [vmem:[%s3 + $0x1f8] sm:$0xff]
      %v3453 = vld [vmem:[%s3 + $0x200] sm:$0xff]
      %v3454 = vld [vmem:[%s3 + $0x208] sm:$0xff]
      %v3455 = vld [vmem:[%s3 + $0x210] sm:$0xff]
      %v3456 = vld [vmem:[%s3 + $0x218] sm:$0xff]
      %v3457 = vld [vmem:[%s3 + $0x220] sm:$0xff]
      %v3458 = vld [vmem:[%s3 + $0x228] sm:$0xff]
      %v3459 = vld [vmem:[%s3 + $0x230] sm:$0xff]
      %v3460 = vld [vmem:[%s3 + $0x238] sm:$0xff]
      %v3461 = vld [vmem:[%s3 + $0x240] sm:$0xff]
      %v3462 = vld [vmem:[%s3 + $0x248] sm:$0xff]
      %v3463 = vld [vmem:[%s3 + $0x250] sm:$0xff]
      %v3464 = vld [vmem:[%s3 + $0x258] sm:$0xff]
      %v3465 = vld [vmem:[%s3 + $0x260] sm:$0xff]
      %v3466 = vld [vmem:[%s3 + $0x268] sm:$0xff]
      %v3467 = vld [vmem:[%s3 + $0x270] sm:$0xff]
      %v3468 = vld [vmem:[%s3 + $0x278] sm:$0xff]
      %v3469 = vld [vmem:[%s3 + $0x280] sm:$0xff]
      %v3470 = vld [vmem:[%s3 + $0x288] sm:$0xff]
      %v3471 = vld [vmem:[%s3 + $0x290] sm:$0xff]
      %v3472 = vld [vmem:[%s3 + $0x298] sm:$0xff]
      %v3473 = vld [vmem:[%s3 + $0x2a0] sm:$0xff]
      %v3474 = vld [vmem:[%s3 + $0x2a8] sm:$0xff]
      %v3475 = vld [vmem:[%s3 + $0x2b0] sm:$0xff]
      %v3476 = vld [vmem:[%s3 + $0x2b8] sm:$0xff]
      %v3477 = vld [vmem:[%s3 + $0x2c0] sm:$0xff]
      %v3478 = vld [vmem:[%s3 + $0x2c8] sm:$0xff]
      %v3479 = vld [vmem:[%s3 + $0x2d0] sm:$0xff]
      %v3480 = vld [vmem:[%s3 + $0x2d8] sm:$0xff]
      %v3481 = vld [vmem:[%s3 + $0x2e0] sm:$0xff]
      %v3482 = vld [vmem:[%s3 + $0x2e8] sm:$0xff]
      %v3483 = vld [vmem:[%s3 + $0x2f0] sm:$0xff]
      %v3484 = vld [vmem:[%s3 + $0x2f8] sm:$0xff]
      %v3485 = vld [vmem:[%s3 + $0x300] sm:$0xff]
      %v3486 = vld [vmem:[%s3 + $0x308] sm:$0xff]
      %v3487 = vld [vmem:[%s3 + $0x310] sm:$0xff]
      %v3488 = vld [vmem:[%s3 + $0x318] sm:$0xff]
      %v3489 = vld [vmem:[%s3 + $0x320] sm:$0xff]
      %v3490 = vld [vmem:[%s3 + $0x328] sm:$0xff]
      %v3491 = vld [vmem:[%s3 + $0x330] sm:$0xff]
      %v3492 = vld [vmem:[%s3 + $0x338] sm:$0xff]
      %v3493 = vld [vmem:[%s3 + $0x340] sm:$0xff]
      %v3494 = vld [vmem:[%s3 + $0x348] sm:$0xff]
      %v3495 = vld [vmem:[%s3 + $0x350] sm:$0xff]
      %v3496 = vld [vmem:[%s3 + $0x358] sm:$0xff]
      %v3497 = vld [vmem:[%s3 + $0x360] sm:$0xff]
      %v3498 = vld [vmem:[%s3 + $0x368] sm:$0xff]
      %v3499 = vld [vmem:[%s3 + $0x370] sm:$0xff]
      %v3500 = vld [vmem:[%s3 + $0x378] sm:$0xff]
      %v3501 = vld [vmem:[%s3 + $0x380] sm:$0xff]
      %v3502 = vld [vmem:[%s3 + $0x388] sm:$0xff]
      %v3503 = vld [vmem:[%s3 + $0x390] sm:$0xff]
      %v3504 = vld [vmem:[%s3 + $0x398] sm:$0xff]
      %v3505 = vld [vmem:[%s3 + $0x3a0] sm:$0xff]
      %v3506 = vld [vmem:[%s3 + $0x3a8] sm:$0xff]
      %v3507 = vld [vmem:[%s3 + $0x3b0] sm:$0xff]
      %v3508 = vld [vmem:[%s3 + $0x3b8] sm:$0xff]
      %v3509 = vld [vmem:[%s3 + $0x3c0] sm:$0xff]
      %v3510 = vld [vmem:[%s3 + $0x3c8] sm:$0xff]
      %v3511 = vld [vmem:[%s3 + $0x3d0] sm:$0xff]
      %v3512 = vld [vmem:[%s3 + $0x3d8] sm:$0xff]
      %v3513 = vld [vmem:[%s3 + $0x3e0] sm:$0xff]
      %v3514 = vld [vmem:[%s3 + $0x3e8] sm:$0xff]
      %v3515 = vld [vmem:[%s3 + $0x3f0] sm:$0xff]
      %v3516 = vld [vmem:[%s3 + $0x3f8] sm:$0xff]
      %v3517 = vld [vmem:[%s3 + $0x400] sm:$0xff]
      %v3518 = vld [vmem:[%s3 + $0x408] sm:$0xff]
      %v3519 = vld [vmem:[%s3 + $0x410] sm:$0xff]
      %v3520 = vld [vmem:[%s3 + $0x418] sm:$0xff]
      %v3521 = vld [vmem:[%s3 + $0x420] sm:$0xff]
      %v3522 = vld [vmem:[%s3 + $0x428] sm:$0xff]
      %v3523 = vld [vmem:[%s3 + $0x430] sm:$0xff]
      %v3524 = vld [vmem:[%s3 + $0x438] sm:$0xff]
      %v3525 = vld [vmem:[%s3 + $0x440] sm:$0xff]
      %v3526 = vld [vmem:[%s3 + $0x448] sm:$0xff]
      %v3527 = vld [vmem:[%s3 + $0x450] sm:$0xff]
      %v3528 = vld [vmem:[%s3 + $0x458] sm:$0xff]
      %v3529 = vld [vmem:[%s3 + $0x460] sm:$0xff]
      %v3530 = vld [vmem:[%s3 + $0x468] sm:$0xff]
      %v3531 = vld [vmem:[%s3 + $0x470] sm:$0xff]
      %v3532 = vld [vmem:[%s3 + $0x478] sm:$0xff]
      %v3533 = vld [vmem:[%s4] sm:$0x3]
      %v3535 = vperm.slane %v3533, 0
      %v3536 = vperm.slane %v3533, 1
      %v3683 = vunpack.c.l.b16 %v3389
      %v3684 = vunpack.c.h.b16 %v3389
      %v3685 = vunpack.c.l.b16 %v3390
      %v3686 = vunpack.c.h.b16 %v3390
      %v3687 = vunpack.c.l.b16 %v3391
      %v3688 = vunpack.c.h.b16 %v3391
      %v3689 = vunpack.c.l.b16 %v3392
      %v3690 = vunpack.c.h.b16 %v3392
      %v3691 = vunpack.c.l.b16 %v3393
      %v3692 = vunpack.c.h.b16 %v3393
      %v3693 = vunpack.c.l.b16 %v3394
      %v3694 = vunpack.c.h.b16 %v3394
      %v3695 = vunpack.c.l.b16 %v3395
      %v3696 = vunpack.c.h.b16 %v3395
      %v3697 = vunpack.c.l.b16 %v3396
      %v3698 = vunpack.c.h.b16 %v3396
      %v3699 = vunpack.c.l.b16 %v3397
      %v3700 = vunpack.c.h.b16 %v3397
      %v3701 = vunpack.c.l.b16 %v3398
      %v3702 = vunpack.c.h.b16 %v3398
      %v3703 = vunpack.c.l.b16 %v3399
      %v3704 = vunpack.c.h.b16 %v3399
      %v3705 = vunpack.c.l.b16 %v3400
      %v3706 = vunpack.c.h.b16 %v3400
      %v3707 = vunpack.c.l.b16 %v3401
      %v3708 = vunpack.c.h.b16 %v3401
      %v3709 = vunpack.c.l.b16 %v3402
      %v3710 = vunpack.c.h.b16 %v3402
      %v3711 = vunpack.c.l.b16 %v3403
      %v3712 = vunpack.c.h.b16 %v3403
      %v3713 = vunpack.c.l.b16 %v3404
      %v3714 = vunpack.c.h.b16 %v3404
      %v3715 = vunpack.c.l.b16 %v3405
      %v3716 = vunpack.c.h.b16 %v3405
      %v3717 = vunpack.c.l.b16 %v3406
      %v3718 = vunpack.c.h.b16 %v3406
      %v3719 = vunpack.c.l.b16 %v3407
      %v3720 = vunpack.c.h.b16 %v3407
      %v3721 = vunpack.c.l.b16 %v3408
      %v3722 = vunpack.c.h.b16 %v3408
      %v3723 = vunpack.c.l.b16 %v3409
      %v3724 = vunpack.c.h.b16 %v3409
      %v3725 = vunpack.c.l.b16 %v3410
      %v3726 = vunpack.c.h.b16 %v3410
      %v3727 = vunpack.c.l.b16 %v3411
      %v3728 = vunpack.c.h.b16 %v3411
      %v3729 = vunpack.c.l.b16 %v3412
      %v3730 = vunpack.c.h.b16 %v3412
      %v3731 = vunpack.c.l.b16 %v3413
      %v3732 = vunpack.c.h.b16 %v3413
      %v3733 = vunpack.c.l.b16 %v3414
      %v3734 = vunpack.c.h.b16 %v3414
      %v3735 = vunpack.c.l.b16 %v3415
      %v3736 = vunpack.c.h.b16 %v3415
      %v3737 = vunpack.c.l.b16 %v3416
      %v3738 = vunpack.c.h.b16 %v3416
      %v3739 = vunpack.c.l.b16 %v3417
      %v3740 = vunpack.c.h.b16 %v3417
      %v3741 = vunpack.c.l.b16 %v3418
      %v3742 = vunpack.c.h.b16 %v3418
      %v3743 = vunpack.c.l.b16 %v3419
      %v3744 = vunpack.c.h.b16 %v3419
      %v3745 = vunpack.c.l.b16 %v3420
      %v3746 = vunpack.c.h.b16 %v3420
      %v3747 = vunpack.c.l.b16 %v3421
      %v3748 = vunpack.c.h.b16 %v3421
      %v3749 = vunpack.c.l.b16 %v3422
      %v3750 = vunpack.c.h.b16 %v3422
      %v3751 = vunpack.c.l.b16 %v3423
      %v3752 = vunpack.c.h.b16 %v3423
      %v3753 = vunpack.c.l.b16 %v3424
      %v3754 = vunpack.c.h.b16 %v3424
      %v3755 = vunpack.c.l.b16 %v3425
      %v3756 = vunpack.c.h.b16 %v3425
      %v3757 = vunpack.c.l.b16 %v3426
      %v3758 = vunpack.c.h.b16 %v3426
      %v3759 = vunpack.c.l.b16 %v3427
      %v3760 = vunpack.c.h.b16 %v3427
      %v3761 = vunpack.c.l.b16 %v3428
      %v3762 = vunpack.c.h.b16 %v3428
      %v3763 = vunpack.c.l.b16 %v3429
      %v3764 = vunpack.c.h.b16 %v3429
      %v3765 = vunpack.c.l.b16 %v3430
      %v3766 = vunpack.c.h.b16 %v3430
      %v3767 = vunpack.c.l.b16 %v3431
      %v3768 = vunpack.c.h.b16 %v3431
      %v3769 = vunpack.c.l.b16 %v3432
      %v3770 = vunpack.c.h.b16 %v3432
      %v3771 = vunpack.c.l.b16 %v3433
      %v3772 = vunpack.c.h.b16 %v3433
      %v3773 = vunpack.c.l.b16 %v3434
      %v3774 = vunpack.c.h.b16 %v3434
      %v3775 = vunpack.c.l.b16 %v3435
      %v3776 = vunpack.c.h.b16 %v3435
      %v3777 = vunpack.c.l.b16 %v3436
      %v3778 = vunpack.c.h.b16 %v3436
      %v3779 = vunpack.c.l.b16 %v3437
      %v3780 = vunpack.c.h.b16 %v3437
      %v3781 = vunpack.c.l.b16 %v3438
      %v3782 = vunpack.c.h.b16 %v3438
      %v3783 = vunpack.c.l.b16 %v3439
      %v3784 = vunpack.c.h.b16 %v3439
      %v3785 = vunpack.c.l.b16 %v3440
      %v3786 = vunpack.c.h.b16 %v3440
      %v3787 = vunpack.c.l.b16 %v3441
      %v3788 = vunpack.c.h.b16 %v3441
      %v3789 = vunpack.c.l.b16 %v3442
      %v3790 = vunpack.c.h.b16 %v3442
      %v3791 = vunpack.c.l.b16 %v3443
      %v3792 = vunpack.c.h.b16 %v3443
      %v3793 = vunpack.c.l.b16 %v3444
      %v3794 = vunpack.c.h.b16 %v3444
      %v3795 = vunpack.c.l.b16 %v3445
      %v3796 = vunpack.c.h.b16 %v3445
      %v3797 = vunpack.c.l.b16 %v3446
      %v3798 = vunpack.c.h.b16 %v3446
      %v3799 = vunpack.c.l.b16 %v3447
      %v3800 = vunpack.c.h.b16 %v3447
      %v3801 = vunpack.c.l.b16 %v3448
      %v3802 = vunpack.c.h.b16 %v3448
      %v3803 = vunpack.c.l.b16 %v3449
      %v3804 = vunpack.c.h.b16 %v3449
      %v3805 = vunpack.c.l.b16 %v3450
      %v3806 = vunpack.c.h.b16 %v3450
      %v3807 = vunpack.c.l.b16 %v3451
      %v3808 = vunpack.c.h.b16 %v3451
      %v3809 = vunpack.c.l.b16 %v3452
      %v3810 = vunpack.c.h.b16 %v3452
      %v3811 = vunpack.c.l.b16 %v3453
      %v3812 = vunpack.c.h.b16 %v3453
      %v3813 = vunpack.c.l.b16 %v3454
      %v3814 = vunpack.c.h.b16 %v3454
      %v3815 = vunpack.c.l.b16 %v3455
      %v3816 = vunpack.c.h.b16 %v3455
      %v3817 = vunpack.c.l.b16 %v3456
      %v3818 = vunpack.c.h.b16 %v3456
      %v3819 = vunpack.c.l.b16 %v3457
      %v3820 = vunpack.c.h.b16 %v3457
      %v3821 = vunpack.c.l.b16 %v3458
      %v3822 = vunpack.c.h.b16 %v3458
      %v3823 = vunpack.c.l.b16 %v3459
      %v3824 = vunpack.c.h.b16 %v3459
      %v3825 = vunpack.c.l.b16 %v3460
      %v3826 = vunpack.c.h.b16 %v3460
      %v3827 = vunpack.c.l.b16 %v3461
      %v3828 = vunpack.c.h.b16 %v3461
      %v3829 = vunpack.c.l.b16 %v3462
      %v3830 = vunpack.c.h.b16 %v3462
      %v3831 = vunpack.c.l.b16 %v3463
      %v3832 = vunpack.c.h.b16 %v3463
      %v3833 = vunpack.c.l.b16 %v3464
      %v3834 = vunpack.c.h.b16 %v3464
      %v3835 = vunpack.c.l.b16 %v3465
      %v3836 = vunpack.c.h.b16 %v3465
      %v3837 = vunpack.c.l.b16 %v3466
      %v3838 = vunpack.c.h.b16 %v3466
      %v3839 = vunpack.c.l.b16 %v3467
      %v3840 = vunpack.c.h.b16 %v3467
      %v3841 = vunpack.c.l.b16 %v3468
      %v3842 = vunpack.c.h.b16 %v3468
      %v3843 = vunpack.c.l.b16 %v3469
      %v3844 = vunpack.c.h.b16 %v3469
      %v3845 = vunpack.c.l.b16 %v3470
      %v3846 = vunpack.c.h.b16 %v3470
      %v3847 = vunpack.c.l.b16 %v3471
      %v3848 = vunpack.c.h.b16 %v3471
      %v3849 = vunpack.c.l.b16 %v3472
      %v3850 = vunpack.c.h.b16 %v3472
      %v3851 = vunpack.c.l.b16 %v3473
      %v3852 = vunpack.c.h.b16 %v3473
      %v3853 = vunpack.c.l.b16 %v3474
      %v3854 = vunpack.c.h.b16 %v3474
      %v3855 = vunpack.c.l.b16 %v3475
      %v3856 = vunpack.c.h.b16 %v3475
      %v3857 = vunpack.c.l.b16 %v3476
      %v3858 = vunpack.c.h.b16 %v3476
      %v3859 = vunpack.c.l.b16 %v3477
      %v3860 = vunpack.c.h.b16 %v3477
      %v3861 = vunpack.c.l.b16 %v3478
      %v3862 = vunpack.c.h.b16 %v3478
      %v3863 = vunpack.c.l.b16 %v3479
      %v3864 = vunpack.c.h.b16 %v3479
      %v3865 = vunpack.c.l.b16 %v3480
      %v3866 = vunpack.c.h.b16 %v3480
      %v3867 = vunpack.c.l.b16 %v3481
      %v3868 = vunpack.c.h.b16 %v3481
      %v3869 = vunpack.c.l.b16 %v3482
      %v3870 = vunpack.c.h.b16 %v3482
      %v3871 = vunpack.c.l.b16 %v3483
      %v3872 = vunpack.c.h.b16 %v3483
      %v3873 = vunpack.c.l.b16 %v3484
      %v3874 = vunpack.c.h.b16 %v3484
      %v3875 = vunpack.c.l.b16 %v3485
      %v3876 = vunpack.c.h.b16 %v3485
      %v3877 = vunpack.c.l.b16 %v3486
      %v3878 = vunpack.c.h.b16 %v3486
      %v3879 = vunpack.c.l.b16 %v3487
      %v3880 = vunpack.c.h.b16 %v3487
      %v3881 = vunpack.c.l.b16 %v3488
      %v3882 = vunpack.c.h.b16 %v3488
      %v3883 = vunpack.c.l.b16 %v3489
      %v3884 = vunpack.c.h.b16 %v3489
      %v3885 = vunpack.c.l.b16 %v3490
      %v3886 = vunpack.c.h.b16 %v3490
      %v3887 = vunpack.c.l.b16 %v3491
      %v3888 = vunpack.c.h.b16 %v3491
      %v3889 = vunpack.c.l.b16 %v3492
      %v3890 = vunpack.c.h.b16 %v3492
      %v3891 = vunpack.c.l.b16 %v3493
      %v3892 = vunpack.c.h.b16 %v3493
      %v3893 = vunpack.c.l.b16 %v3494
      %v3894 = vunpack.c.h.b16 %v3494
      %v3895 = vunpack.c.l.b16 %v3495
      %v3896 = vunpack.c.h.b16 %v3495
      %v3897 = vunpack.c.l.b16 %v3496
      %v3898 = vunpack.c.h.b16 %v3496
      %v3899 = vunpack.c.l.b16 %v3497
      %v3900 = vunpack.c.h.b16 %v3497
      %v3901 = vunpack.c.l.b16 %v3498
      %v3902 = vunpack.c.h.b16 %v3498
      %v3903 = vunpack.c.l.b16 %v3499
      %v3904 = vunpack.c.h.b16 %v3499
      %v3905 = vunpack.c.l.b16 %v3500
      %v3906 = vunpack.c.h.b16 %v3500
      %v3907 = vunpack.c.l.b16 %v3501
      %v3908 = vunpack.c.h.b16 %v3501
      %v3909 = vunpack.c.l.b16 %v3502
      %v3910 = vunpack.c.h.b16 %v3502
      %v3911 = vunpack.c.l.b16 %v3503
      %v3912 = vunpack.c.h.b16 %v3503
      %v3913 = vunpack.c.l.b16 %v3504
      %v3914 = vunpack.c.h.b16 %v3504
      %v3915 = vunpack.c.l.b16 %v3505
      %v3916 = vunpack.c.h.b16 %v3505
      %v3917 = vunpack.c.l.b16 %v3506
      %v3918 = vunpack.c.h.b16 %v3506
      %v3919 = vunpack.c.l.b16 %v3507
      %v3920 = vunpack.c.h.b16 %v3507
      %v3921 = vunpack.c.l.b16 %v3508
      %v3922 = vunpack.c.h.b16 %v3508
      %v3923 = vunpack.c.l.b16 %v3509
      %v3924 = vunpack.c.h.b16 %v3509
      %v3925 = vunpack.c.l.b16 %v3510
      %v3926 = vunpack.c.h.b16 %v3510
      %v3927 = vunpack.c.l.b16 %v3511
      %v3928 = vunpack.c.h.b16 %v3511
      %v3929 = vunpack.c.l.b16 %v3512
      %v3930 = vunpack.c.h.b16 %v3512
      %v3931 = vunpack.c.l.b16 %v3513
      %v3932 = vunpack.c.h.b16 %v3513
      %v3933 = vunpack.c.l.b16 %v3514
      %v3934 = vunpack.c.h.b16 %v3514
      %v3935 = vunpack.c.l.b16 %v3515
      %v3936 = vunpack.c.h.b16 %v3515
      %v3937 = vunpack.c.l.b16 %v3516
      %v3938 = vunpack.c.h.b16 %v3516
      %v3939 = vunpack.c.l.b16 %v3517
      %v3940 = vunpack.c.h.b16 %v3517
      %v3941 = vunpack.c.l.b16 %v3518
      %v3942 = vunpack.c.h.b16 %v3518
      %v3943 = vunpack.c.l.b16 %v3519
      %v3944 = vunpack.c.h.b16 %v3519
      %v3945 = vunpack.c.l.b16 %v3520
      %v3946 = vunpack.c.h.b16 %v3520
      %v3947 = vunpack.c.l.b16 %v3521
      %v3948 = vunpack.c.h.b16 %v3521
      %v3949 = vunpack.c.l.b16 %v3522
      %v3950 = vunpack.c.h.b16 %v3522
      %v3951 = vunpack.c.l.b16 %v3523
      %v3952 = vunpack.c.h.b16 %v3523
      %v3953 = vunpack.c.l.b16 %v3524
      %v3954 = vunpack.c.h.b16 %v3524
      %v3955 = vunpack.c.l.b16 %v3525
      %v3956 = vunpack.c.h.b16 %v3525
      %v3957 = vunpack.c.l.b16 %v3526
      %v3958 = vunpack.c.h.b16 %v3526
      %v3959 = vunpack.c.l.b16 %v3527
      %v3960 = vunpack.c.h.b16 %v3527
      %v3961 = vunpack.c.l.b16 %v3528
      %v3962 = vunpack.c.h.b16 %v3528
      %v3963 = vunpack.c.l.b16 %v3529
      %v3964 = vunpack.c.h.b16 %v3529
      %v3965 = vunpack.c.l.b16 %v3530
      %v3966 = vunpack.c.h.b16 %v3530
      %v3967 = vunpack.c.l.b16 %v3531
      %v3968 = vunpack.c.h.b16 %v3531
      %v3969 = vunpack.c.l.b16 %v3532
      %v3970 = vunpack.c.h.b16 %v3532
      %v3971 = vpack.c.b16 %v3685, %v3683
      %v3972 = vpack.c.b16 %v3686, %v3684
      %v3973 = vpack.c.b16 %v3689, %v3687
      %v3974 = vpack.c.b16 %v3690, %v3688
      %v3975 = vpack.c.b16 %v3693, %v3691
      %v3976 = vpack.c.b16 %v3694, %v3692
      %v3977 = vpack.c.b16 %v3697, %v3695
      %v3978 = vpack.c.b16 %v3698, %v3696
      %v3979 = vpack.c.b16 %v3701, %v3699
      %v3980 = vpack.c.b16 %v3702, %v3700
      %v3981 = vpack.c.b16 %v3705, %v3703
      %v3982 = vpack.c.b16 %v3706, %v3704
      %v3983 = vpack.c.b16 %v3709, %v3707
      %v3984 = vpack.c.b16 %v3710, %v3708
      %v3985 = vpack.c.b16 %v3713, %v3711
      %v3986 = vpack.c.b16 %v3714, %v3712
      %v3987 = vpack.c.b16 %v3717, %v3715
      %v3988 = vpack.c.b16 %v3718, %v3716
      %v3989 = vpack.c.b16 %v3721, %v3719
      %v3990 = vpack.c.b16 %v3722, %v3720
      %v3991 = vpack.c.b16 %v3725, %v3723
      %v3992 = vpack.c.b16 %v3726, %v3724
      %v3993 = vpack.c.b16 %v3729, %v3727
      %v3994 = vpack.c.b16 %v3730, %v3728
      %v3995 = vpack.c.b16 %v3733, %v3731
      %v3996 = vpack.c.b16 %v3734, %v3732
      %v3997 = vpack.c.b16 %v3737, %v3735
      %v3998 = vpack.c.b16 %v3738, %v3736
      %v3999 = vpack.c.b16 %v3741, %v3739
      %v4000 = vpack.c.b16 %v3742, %v3740
      %v4001 = vpack.c.b16 %v3745, %v3743
      %v4002 = vpack.c.b16 %v3746, %v3744
      %v4003 = vpack.c.b16 %v3749, %v3747
      %v4004 = vpack.c.b16 %v3750, %v3748
      %v4005 = vpack.c.b16 %v3753, %v3751
      %v4006 = vpack.c.b16 %v3754, %v3752
      %v4007 = vpack.c.b16 %v3757, %v3755
      %v4008 = vpack.c.b16 %v3758, %v3756
      %v4009 = vpack.c.b16 %v3761, %v3759
      %v4010 = vpack.c.b16 %v3762, %v3760
      %v4011 = vpack.c.b16 %v3765, %v3763
      %v4012 = vpack.c.b16 %v3766, %v3764
      %v4013 = vpack.c.b16 %v3769, %v3767
      %v4014 = vpack.c.b16 %v3770, %v3768
      %v4015 = vpack.c.b16 %v3773, %v3771
      %v4016 = vpack.c.b16 %v3774, %v3772
      %v4017 = vpack.c.b16 %v3777, %v3775
      %v4018 = vpack.c.b16 %v3778, %v3776
      %v4019 = vpack.c.b16 %v3781, %v3779
      %v4020 = vpack.c.b16 %v3782, %v3780
      %v4021 = vpack.c.b16 %v3785, %v3783
      %v4022 = vpack.c.b16 %v3786, %v3784
      %v4023 = vpack.c.b16 %v3789, %v3787
      %v4024 = vpack.c.b16 %v3790, %v3788
      %v4025 = vpack.c.b16 %v3793, %v3791
      %v4026 = vpack.c.b16 %v3794, %v3792
      %v4027 = vpack.c.b16 %v3797, %v3795
      %v4028 = vpack.c.b16 %v3798, %v3796
      %v4029 = vpack.c.b16 %v3801, %v3799
      %v4030 = vpack.c.b16 %v3802, %v3800
      %v4031 = vpack.c.b16 %v3805, %v3803
      %v4032 = vpack.c.b16 %v3806, %v3804
      %v4033 = vpack.c.b16 %v3809, %v3807
      %v4034 = vpack.c.b16 %v3810, %v3808
      %v4035 = vpack.c.b16 %v3813, %v3811
      %v4036 = vpack.c.b16 %v3814, %v3812
      %v4037 = vpack.c.b16 %v3817, %v3815
      %v4038 = vpack.c.b16 %v3818, %v3816
      %v4039 = vpack.c.b16 %v3821, %v3819
      %v4040 = vpack.c.b16 %v3822, %v3820
      %v4041 = vpack.c.b16 %v3825, %v3823
      %v4042 = vpack.c.b16 %v3826, %v3824
      %v4043 = vpack.c.b16 %v3829, %v3827
      %v4044 = vpack.c.b16 %v3830, %v3828
      %v4045 = vpack.c.b16 %v3833, %v3831
      %v4046 = vpack.c.b16 %v3834, %v3832
      %v4047 = vpack.c.b16 %v3837, %v3835
      %v4048 = vpack.c.b16 %v3838, %v3836
      %v4049 = vpack.c.b16 %v3841, %v3839
      %v4050 = vpack.c.b16 %v3842, %v3840
      %v4051 = vpack.c.b16 %v3845, %v3843
      %v4052 = vpack.c.b16 %v3846, %v3844
      %v4053 = vpack.c.b16 %v3849, %v3847
      %v4054 = vpack.c.b16 %v3850, %v3848
      %v4055 = vpack.c.b16 %v3853, %v3851
      %v4056 = vpack.c.b16 %v3854, %v3852
      %v4057 = vpack.c.b16 %v3857, %v3855
      %v4058 = vpack.c.b16 %v3858, %v3856
      %v4059 = vpack.c.b16 %v3861, %v3859
      %v4060 = vpack.c.b16 %v3862, %v3860
      %v4061 = vpack.c.b16 %v3865, %v3863
      %v4062 = vpack.c.b16 %v3866, %v3864
      %v4063 = vpack.c.b16 %v3869, %v3867
      %v4064 = vpack.c.b16 %v3870, %v3868
      %v4065 = vpack.c.b16 %v3873, %v3871
      %v4066 = vpack.c.b16 %v3874, %v3872
      %v4067 = vpack.c.b16 %v3877, %v3875
      %v4068 = vpack.c.b16 %v3878, %v3876
      %v4069 = vpack.c.b16 %v3881, %v3879
      %v4070 = vpack.c.b16 %v3882, %v3880
      %v4071 = vpack.c.b16 %v3885, %v3883
      %v4072 = vpack.c.b16 %v3886, %v3884
      %v4073 = vpack.c.b16 %v3889, %v3887
      %v4074 = vpack.c.b16 %v3890, %v3888
      %v4075 = vpack.c.b16 %v3893, %v3891
      %v4076 = vpack.c.b16 %v3894, %v3892
      %v4077 = vpack.c.b16 %v3897, %v3895
      %v4078 = vpack.c.b16 %v3898, %v3896
      %v4079 = vpack.c.b16 %v3901, %v3899
      %v4080 = vpack.c.b16 %v3902, %v3900
      %v4081 = vpack.c.b16 %v3905, %v3903
      %v4082 = vpack.c.b16 %v3906, %v3904
      %v4083 = vpack.c.b16 %v3909, %v3907
      %v4084 = vpack.c.b16 %v3910, %v3908
      %v4085 = vpack.c.b16 %v3913, %v3911
      %v4086 = vpack.c.b16 %v3914, %v3912
      %v4087 = vpack.c.b16 %v3917, %v3915
      %v4088 = vpack.c.b16 %v3918, %v3916
      %v4089 = vpack.c.b16 %v3921, %v3919
      %v4090 = vpack.c.b16 %v3922, %v3920
      %v4091 = vpack.c.b16 %v3925, %v3923
      %v4092 = vpack.c.b16 %v3926, %v3924
      %v4093 = vpack.c.b16 %v3929, %v3927
      %v4094 = vpack.c.b16 %v3930, %v3928
      %v4095 = vpack.c.b16 %v3933, %v3931
      %v4096 = vpack.c.b16 %v3934, %v3932
      %v4097 = vpack.c.b16 %v3937, %v3935
      %v4098 = vpack.c.b16 %v3938, %v3936
      %v4099 = vpack.c.b16 %v3941, %v3939
      %v4100 = vpack.c.b16 %v3942, %v3940
      %v4101 = vpack.c.b16 %v3945, %v3943
      %v4102 = vpack.c.b16 %v3946, %v3944
      %v4103 = vpack.c.b16 %v3949, %v3947
      %v4104 = vpack.c.b16 %v3950, %v3948
      %v4105 = vpack.c.b16 %v3953, %v3951
      %v4106 = vpack.c.b16 %v3954, %v3952
      %v4107 = vpack.c.b16 %v3957, %v3955
      %v4108 = vpack.c.b16 %v3958, %v3956
      %v4109 = vpack.c.b16 %v3961, %v3959
      %v4110 = vpack.c.b16 %v3962, %v3960
      %v4111 = vpack.c.b16 %v3965, %v3963
      %v4112 = vpack.c.b16 %v3966, %v3964
      %v4113 = vpack.c.b16 %v3969, %v3967
      %v4114 = vpack.c.b16 %v3970, %v3968
      %4259 = vmatpush.bf16.msra.mxu0 %v3985
      %4260 = vmatpush.bf16.msra.mxu0 %v3983
      %4261 = vmatpush.bf16.msra.mxu0 %v3981
      %4262 = vmatpush.bf16.msra.mxu0 %v3979
      %4263 = vmatpush.bf16.msra.mxu0 %v3977
      %4264 = vmatpush.bf16.msra.mxu0 %v3975
      %4265 = vmatpush.bf16.msra.mxu0 %v3973
      %4266 = vmatpush.bf16.msra.mxu0 %v3971
      %4267 = vmatmul.bf16.gmra.mxu0 %v2749
      %v4268 = vpop.f32.mrf.mxu0
      %v4269 = vadd.f32 %v3535, %v4268
      %v4270 = vpop.f32.mrf.mxu0
      %v4271 = vadd.f32 %v3535, %v4270
      %4272 = vmatmul.bf16.gmra.mxu0 %v2750
      %v4273 = vpop.f32.mrf.mxu0
      %v4274 = vadd.f32 %v3535, %v4273
      %v4275 = vpop.f32.mrf.mxu0
      %v4276 = vadd.f32 %v3535, %v4275
      %4277 = vmatmul.bf16.gmra.mxu0 %v2751
      %v4278 = vpop.f32.mrf.mxu0
      %v4279 = vadd.f32 %v3535, %v4278
      %v4280 = vpop.f32.mrf.mxu0
      %v4281 = vadd.f32 %v3535, %v4280
      %4282 = vmatmul.bf16.gmra.mxu0 %v2752
      %v4283 = vpop.f32.mrf.mxu0
      %v4284 = vadd.f32 %v3535, %v4283
      %v4285 = vpop.f32.mrf.mxu0
      %v4286 = vadd.f32 %v3535, %v4285
      %4287 = vmatmul.bf16.gmra.mxu0 %v2753
      %v4288 = vpop.f32.mrf.mxu0
      %v4289 = vadd.f32 %v3535, %v4288
      %v4290 = vpop.f32.mrf.mxu0
      %v4291 = vadd.f32 %v3535, %v4290
      %4292 = vmatmul.bf16.gmra.mxu0 %v2754
      %v4293 = vpop.f32.mrf.mxu0
      %v4294 = vadd.f32 %v3535, %v4293
      %v4295 = vpop.f32.mrf.mxu0
      %v4296 = vadd.f32 %v3535, %v4295
      %4297 = vmatmul.bf16.gmra.mxu0 %v2755
      %v4298 = vpop.f32.mrf.mxu0
      %v4299 = vadd.f32 %v3535, %v4298
      %v4300 = vpop.f32.mrf.mxu0
      %v4301 = vadd.f32 %v3535, %v4300
      %4302 = vmatmul.bf16.gmra.mxu0 %v2756
      %v4303 = vpop.f32.mrf.mxu0
      %v4304 = vadd.f32 %v3535, %v4303
      %v4305 = vpop.f32.mrf.mxu0
      %v4306 = vadd.f32 %v3535, %v4305
      %4307 = vmatmul.bf16.gmra.mxu0 %v2757
      %v4308 = vpop.f32.mrf.mxu0
      %v4309 = vadd.f32 %v3535, %v4308
      %v4310 = vpop.f32.mrf.mxu0
      %v4311 = vadd.f32 %v3535, %v4310
      %4312 = vmatmul.bf16.gmra.mxu0 %v2758
      %v4313 = vpop.f32.mrf.mxu0
      %v4314 = vadd.f32 %v3535, %v4313
      %v4315 = vpop.f32.mrf.mxu0
      %v4316 = vadd.f32 %v3535, %v4315
      %4317 = vmatmul.bf16.gmra.mxu0 %v2759
      %v4318 = vpop.f32.mrf.mxu0
      %v4319 = vadd.f32 %v3535, %v4318
      %v4320 = vpop.f32.mrf.mxu0
      %v4321 = vadd.f32 %v3535, %v4320
      %4322 = vmatmul.bf16.gmra.mxu0 %v2760
      %v4323 = vpop.f32.mrf.mxu0
      %v4324 = vadd.f32 %v3535, %v4323
      %v4325 = vpop.f32.mrf.mxu0
      %v4326 = vadd.f32 %v3535, %v4325
      %4327 = vmatmul.bf16.gmra.mxu0 %v2761
      %v4328 = vpop.f32.mrf.mxu0
      %v4329 = vadd.f32 %v3535, %v4328
      %v4330 = vpop.f32.mrf.mxu0
      %v4331 = vadd.f32 %v3535, %v4330
      %4332 = vmatmul.bf16.gmra.mxu0 %v2762
      %v4333 = vpop.f32.mrf.mxu0
      %v4334 = vadd.f32 %v3535, %v4333
      %v4335 = vpop.f32.mrf.mxu0
      %v4336 = vadd.f32 %v3535, %v4335
      %4337 = vmatmul.bf16.gmra.mxu0 %v2763
      %v4338 = vpop.f32.mrf.mxu0
      %v4339 = vadd.f32 %v3535, %v4338
      %v4340 = vpop.f32.mrf.mxu0
      %v4341 = vadd.f32 %v3535, %v4340
      %4342 = vmatmul.bf16.gmra.mxu0 %v2764
      %v4343 = vpop.f32.mrf.mxu0
      %v4344 = vadd.f32 %v3535, %v4343
      %v4345 = vpop.f32.mrf.mxu0
      %v4346 = vadd.f32 %v3535, %v4345
      %4347 = vdwg.mxu0
      %4348 = vmatpush.bf16.msra.mxu0 %v4001
      %4349 = vmatpush.bf16.msra.mxu0 %v3999
      %4350 = vmatpush.bf16.msra.mxu0 %v3997
      %4351 = vmatpush.bf16.msra.mxu0 %v3995
      %4352 = vmatpush.bf16.msra.mxu0 %v3993
      %4353 = vmatpush.bf16.msra.mxu0 %v3991
      %4354 = vmatpush.bf16.msra.mxu0 %v3989
      %4355 = vmatpush.bf16.msra.mxu0 %v3987
      %4356 = vmatmul.bf16.gmra.mxu0 %v2845
      %v4357 = vpop.f32.mrf.mxu0
      %v4358 = vadd.f32 %v4269, %v4357
      %v4359 = vpop.f32.mrf.mxu0
      %v4360 = vadd.f32 %v4271, %v4359
      %4361 = vmatmul.bf16.gmra.mxu0 %v2846
      %v4362 = vpop.f32.mrf.mxu0
      %v4363 = vadd.f32 %v4274, %v4362
      %v4364 = vpop.f32.mrf.mxu0
      %v4365 = vadd.f32 %v4276, %v4364
      %4366 = vmatmul.bf16.gmra.mxu0 %v2847
      %v4367 = vpop.f32.mrf.mxu0
      %v4368 = vadd.f32 %v4279, %v4367
      %v4369 = vpop.f32.mrf.mxu0
      %v4370 = vadd.f32 %v4281, %v4369
      %4371 = vmatmul.bf16.gmra.mxu0 %v2848
      %v4372 = vpop.f32.mrf.mxu0
      %v4373 = vadd.f32 %v4284, %v4372
      %v4374 = vpop.f32.mrf.mxu0
      %v4375 = vadd.f32 %v4286, %v4374
      %4376 = vmatmul.bf16.gmra.mxu0 %v2849
      %v4377 = vpop.f32.mrf.mxu0
      %v4378 = vadd.f32 %v4289, %v4377
      %v4379 = vpop.f32.mrf.mxu0
      %v4380 = vadd.f32 %v4291, %v4379
      %4381 = vmatmul.bf16.gmra.mxu0 %v2850
      %v4382 = vpop.f32.mrf.mxu0
      %v4383 = vadd.f32 %v4294, %v4382
      %v4384 = vpop.f32.mrf.mxu0
      %v4385 = vadd.f32 %v4296, %v4384
      %4386 = vmatmul.bf16.gmra.mxu0 %v2851
      %v4387 = vpop.f32.mrf.mxu0
      %v4388 = vadd.f32 %v4299, %v4387
      %v4389 = vpop.f32.mrf.mxu0
      %v4390 = vadd.f32 %v4301, %v4389
      %4391 = vmatmul.bf16.gmra.mxu0 %v2852
      %v4392 = vpop.f32.mrf.mxu0
      %v4393 = vadd.f32 %v4304, %v4392
      %v4394 = vpop.f32.mrf.mxu0
      %v4395 = vadd.f32 %v4306, %v4394
      %4396 = vmatmul.bf16.gmra.mxu0 %v2853
      %v4397 = vpop.f32.mrf.mxu0
      %v4398 = vadd.f32 %v4309, %v4397
      %v4399 = vpop.f32.mrf.mxu0
      %v4400 = vadd.f32 %v4311, %v4399
      %4401 = vmatmul.bf16.gmra.mxu0 %v2854
      %v4402 = vpop.f32.mrf.mxu0
      %v4403 = vadd.f32 %v4314, %v4402
      %v4404 = vpop.f32.mrf.mxu0
      %v4405 = vadd.f32 %v4316, %v4404
      %4406 = vmatmul.bf16.gmra.mxu0 %v2855
      %v4407 = vpop.f32.mrf.mxu0
      %v4408 = vadd.f32 %v4319, %v4407
      %v4409 = vpop.f32.mrf.mxu0
      %v4410 = vadd.f32 %v4321, %v4409
      %4411 = vmatmul.bf16.gmra.mxu0 %v2856
      %v4412 = vpop.f32.mrf.mxu0
      %v4413 = vadd.f32 %v4324, %v4412
      %v4414 = vpop.f32.mrf.mxu0
      %v4415 = vadd.f32 %v4326, %v4414
      %4416 = vmatmul.bf16.gmra.mxu0 %v2857
      %v4417 = vpop.f32.mrf.mxu0
      %v4418 = vadd.f32 %v4329, %v4417
      %v4419 = vpop.f32.mrf.mxu0
      %v4420 = vadd.f32 %v4331, %v4419
      %4421 = vmatmul.bf16.gmra.mxu0 %v2858
      %v4422 = vpop.f32.mrf.mxu0
      %v4423 = vadd.f32 %v4334, %v4422
      %v4424 = vpop.f32.mrf.mxu0
      %v4425 = vadd.f32 %v4336, %v4424
      %4426 = vmatmul.bf16.gmra.mxu0 %v2859
      %v4427 = vpop.f32.mrf.mxu0
      %v4428 = vadd.f32 %v4339, %v4427
      %v4429 = vpop.f32.mrf.mxu0
      %v4430 = vadd.f32 %v4341, %v4429
      %4431 = vmatmul.bf16.gmra.mxu0 %v2860
      %v4432 = vpop.f32.mrf.mxu0
      %v4433 = vadd.f32 %v4344, %v4432
      %v4434 = vpop.f32.mrf.mxu0
      %v4435 = vadd.f32 %v4346, %v4434
      %4436 = vdwg.mxu0
      %4437 = vmatpush.bf16.msra.mxu0 %v4017
      %4438 = vmatpush.bf16.msra.mxu0 %v4015
      %4439 = vmatpush.bf16.msra.mxu0 %v4013
      %4440 = vmatpush.bf16.msra.mxu0 %v4011
      %4441 = vmatpush.bf16.msra.mxu0 %v4009
      %4442 = vmatpush.bf16.msra.mxu0 %v4007
      %4443 = vmatpush.bf16.msra.mxu0 %v4005
      %4444 = vmatpush.bf16.msra.mxu0 %v4003
      %4445 = vmatmul.bf16.gmra.mxu0 %v2909
      %v4446 = vpop.f32.mrf.mxu0
      %v4447 = vadd.f32 %v4358, %v4446
      %v4448 = vpop.f32.mrf.mxu0
      %v4449 = vadd.f32 %v4360, %v4448
      %4450 = vmatmul.bf16.gmra.mxu0 %v2910
      %v4451 = vpop.f32.mrf.mxu0
      %v4452 = vadd.f32 %v4363, %v4451
      %v4453 = vpop.f32.mrf.mxu0
      %v4454 = vadd.f32 %v4365, %v4453
      %4455 = vmatmul.bf16.gmra.mxu0 %v2911
      %v4456 = vpop.f32.mrf.mxu0
      %v4457 = vadd.f32 %v4368, %v4456
      %v4458 = vpop.f32.mrf.mxu0
      %v4459 = vadd.f32 %v4370, %v4458
      %4460 = vmatmul.bf16.gmra.mxu0 %v2912
      %v4461 = vpop.f32.mrf.mxu0
      %v4462 = vadd.f32 %v4373, %v4461
      %v4463 = vpop.f32.mrf.mxu0
      %v4464 = vadd.f32 %v4375, %v4463
      %4465 = vmatmul.bf16.gmra.mxu0 %v2913
      %v4466 = vpop.f32.mrf.mxu0
      %v4467 = vadd.f32 %v4378, %v4466
      %v4468 = vpop.f32.mrf.mxu0
      %v4469 = vadd.f32 %v4380, %v4468
      %4470 = vmatmul.bf16.gmra.mxu0 %v2914
      %v4471 = vpop.f32.mrf.mxu0
      %v4472 = vadd.f32 %v4383, %v4471
      %v4473 = vpop.f32.mrf.mxu0
      %v4474 = vadd.f32 %v4385, %v4473
      %4475 = vmatmul.bf16.gmra.mxu0 %v2915
      %v4476 = vpop.f32.mrf.mxu0
      %v4477 = vadd.f32 %v4388, %v4476
      %v4478 = vpop.f32.mrf.mxu0
      %v4479 = vadd.f32 %v4390, %v4478
      %4480 = vmatmul.bf16.gmra.mxu0 %v2916
      %v4481 = vpop.f32.mrf.mxu0
      %v4482 = vadd.f32 %v4393, %v4481
      %v4483 = vpop.f32.mrf.mxu0
      %v4484 = vadd.f32 %v4395, %v4483
      %4485 = vmatmul.bf16.gmra.mxu0 %v2917
      %v4486 = vpop.f32.mrf.mxu0
      %v4487 = vadd.f32 %v4398, %v4486
      %v4488 = vpop.f32.mrf.mxu0
      %v4489 = vadd.f32 %v4400, %v4488
      %4490 = vmatmul.bf16.gmra.mxu0 %v2918
      %v4491 = vpop.f32.mrf.mxu0
      %v4492 = vadd.f32 %v4403, %v4491
      %v4493 = vpop.f32.mrf.mxu0
      %v4494 = vadd.f32 %v4405, %v4493
      %4495 = vmatmul.bf16.gmra.mxu0 %v2919
      %v4496 = vpop.f32.mrf.mxu0
      %v4497 = vadd.f32 %v4408, %v4496
      %v4498 = vpop.f32.mrf.mxu0
      %v4499 = vadd.f32 %v4410, %v4498
      %4500 = vmatmul.bf16.gmra.mxu0 %v2920
      %v4501 = vpop.f32.mrf.mxu0
      %v4502 = vadd.f32 %v4413, %v4501
      %v4503 = vpop.f32.mrf.mxu0
      %v4504 = vadd.f32 %v4415, %v4503
      %4505 = vmatmul.bf16.gmra.mxu0 %v2921
      %v4506 = vpop.f32.mrf.mxu0
      %v4507 = vadd.f32 %v4418, %v4506
      %v4508 = vpop.f32.mrf.mxu0
      %v4509 = vadd.f32 %v4420, %v4508
      %4510 = vmatmul.bf16.gmra.mxu0 %v2922
      %v4511 = vpop.f32.mrf.mxu0
      %v4512 = vadd.f32 %v4423, %v4511
      %v4513 = vpop.f32.mrf.mxu0
      %v4514 = vadd.f32 %v4425, %v4513
      %4515 = vmatmul.bf16.gmra.mxu0 %v2923
      %v4516 = vpop.f32.mrf.mxu0
      %v4517 = vadd.f32 %v4428, %v4516
      %v4518 = vpop.f32.mrf.mxu0
      %v4519 = vadd.f32 %v4430, %v4518
      %4520 = vmatmul.bf16.gmra.mxu0 %v2924
      %v4521 = vpop.f32.mrf.mxu0
      %v4522 = vadd.f32 %v4433, %v4521
      %v4523 = vpop.f32.mrf.mxu0
      %v4524 = vadd.f32 %v4435, %v4523
      %4525 = vdwg.mxu0
      %4526 = vmatpush.bf16.msra.mxu0 %v4033
      %4527 = vmatpush.bf16.msra.mxu0 %v4031
      %4528 = vmatpush.bf16.msra.mxu0 %v4029
      %4529 = vmatpush.bf16.msra.mxu0 %v4027
      %4530 = vmatpush.bf16.msra.mxu0 %v4025
      %4531 = vmatpush.bf16.msra.mxu0 %v4023
      %4532 = vmatpush.bf16.msra.mxu0 %v4021
      %4533 = vmatpush.bf16.msra.mxu0 %v4019
      %4534 = vmatmul.bf16.gmra.mxu0 %v2973
      %v4535 = vpop.f32.mrf.mxu0
      %v4536 = vadd.f32 %v4447, %v4535
      %v4537 = vpop.f32.mrf.mxu0
      %v4538 = vadd.f32 %v4449, %v4537
      %4539 = vmatmul.bf16.gmra.mxu0 %v2974
      %v4540 = vpop.f32.mrf.mxu0
      %v4541 = vadd.f32 %v4452, %v4540
      %v4542 = vpop.f32.mrf.mxu0
      %v4543 = vadd.f32 %v4454, %v4542
      %4544 = vmatmul.bf16.gmra.mxu0 %v2975
      %v4545 = vpop.f32.mrf.mxu0
      %v4546 = vadd.f32 %v4457, %v4545
      %v4547 = vpop.f32.mrf.mxu0
      %v4548 = vadd.f32 %v4459, %v4547
      %4549 = vmatmul.bf16.gmra.mxu0 %v2976
      %v4550 = vpop.f32.mrf.mxu0
      %v4551 = vadd.f32 %v4462, %v4550
      %v4552 = vpop.f32.mrf.mxu0
      %v4553 = vadd.f32 %v4464, %v4552
      %4554 = vmatmul.bf16.gmra.mxu0 %v2977
      %v4555 = vpop.f32.mrf.mxu0
      %v4556 = vadd.f32 %v4467, %v4555
      %v4557 = vpop.f32.mrf.mxu0
      %v4558 = vadd.f32 %v4469, %v4557
      %4559 = vmatmul.bf16.gmra.mxu0 %v2978
      %v4560 = vpop.f32.mrf.mxu0
      %v4561 = vadd.f32 %v4472, %v4560
      %v4562 = vpop.f32.mrf.mxu0
      %v4563 = vadd.f32 %v4474, %v4562
      %4564 = vmatmul.bf16.gmra.mxu0 %v2979
      %v4565 = vpop.f32.mrf.mxu0
      %v4566 = vadd.f32 %v4477, %v4565
      %v4567 = vpop.f32.mrf.mxu0
      %v4568 = vadd.f32 %v4479, %v4567
      %4569 = vmatmul.bf16.gmra.mxu0 %v2980
      %v4570 = vpop.f32.mrf.mxu0
      %v4571 = vadd.f32 %v4482, %v4570
      %v4572 = vpop.f32.mrf.mxu0
      %v4573 = vadd.f32 %v4484, %v4572
      %4574 = vmatmul.bf16.gmra.mxu0 %v2981
      %v4575 = vpop.f32.mrf.mxu0
      %v4576 = vadd.f32 %v4487, %v4575
      %v4577 = vpop.f32.mrf.mxu0
      %v4578 = vadd.f32 %v4489, %v4577
      %4579 = vmatmul.bf16.gmra.mxu0 %v2982
      %v4580 = vpop.f32.mrf.mxu0
      %v4581 = vadd.f32 %v4492, %v4580
      %v4582 = vpop.f32.mrf.mxu0
      %v4583 = vadd.f32 %v4494, %v4582
      %4584 = vmatmul.bf16.gmra.mxu0 %v2983
      %v4585 = vpop.f32.mrf.mxu0
      %v4586 = vadd.f32 %v4497, %v4585
      %v4587 = vpop.f32.mrf.mxu0
      %v4588 = vadd.f32 %v4499, %v4587
      %4589 = vmatmul.bf16.gmra.mxu0 %v2984
      %v4590 = vpop.f32.mrf.mxu0
      %v4591 = vadd.f32 %v4502, %v4590
      %v4592 = vpop.f32.mrf.mxu0
      %v4593 = vadd.f32 %v4504, %v4592
      %4594 = vmatmul.bf16.gmra.mxu0 %v2985
      %v4595 = vpop.f32.mrf.mxu0
      %v4596 = vadd.f32 %v4507, %v4595
      %v4597 = vpop.f32.mrf.mxu0
      %v4598 = vadd.f32 %v4509, %v4597
      %4599 = vmatmul.bf16.gmra.mxu0 %v2986
      %v4600 = vpop.f32.mrf.mxu0
      %v4601 = vadd.f32 %v4512, %v4600
      %v4602 = vpop.f32.mrf.mxu0
      %v4603 = vadd.f32 %v4514, %v4602
      %4604 = vmatmul.bf16.gmra.mxu0 %v2987
      %v4605 = vpop.f32.mrf.mxu0
      %v4606 = vadd.f32 %v4517, %v4605
      %v4607 = vpop.f32.mrf.mxu0
      %v4608 = vadd.f32 %v4519, %v4607
      %4609 = vmatmul.bf16.gmra.mxu0 %v2988
      %v4610 = vpop.f32.mrf.mxu0
      %v4611 = vadd.f32 %v4522, %v4610
      %v4612 = vpop.f32.mrf.mxu0
      %v4613 = vadd.f32 %v4524, %v4612
      %4614 = vdwg.mxu0
      %4615 = vmatpush.bf16.msra.mxu0 %v4049
      %4616 = vmatpush.bf16.msra.mxu0 %v4047
      %4617 = vmatpush.bf16.msra.mxu0 %v4045
      %4618 = vmatpush.bf16.msra.mxu0 %v4043
      %4619 = vmatpush.bf16.msra.mxu0 %v4041
      %4620 = vmatpush.bf16.msra.mxu0 %v4039
      %4621 = vmatpush.bf16.msra.mxu0 %v4037
      %4622 = vmatpush.bf16.msra.mxu0 %v4035
      %4623 = vmatmul.bf16.gmra.mxu0 %v3069
      %v4624 = vpop.f32.mrf.mxu0
      %v4625 = vadd.f32 %v4536, %v4624
      %v4626 = vpop.f32.mrf.mxu0
      %v4627 = vadd.f32 %v4538, %v4626
      %4628 = vmatmul.bf16.gmra.mxu0 %v3070
      %v4629 = vpop.f32.mrf.mxu0
      %v4630 = vadd.f32 %v4541, %v4629
      %v4631 = vpop.f32.mrf.mxu0
      %v4632 = vadd.f32 %v4543, %v4631
      %4633 = vmatmul.bf16.gmra.mxu0 %v3071
      %v4634 = vpop.f32.mrf.mxu0
      %v4635 = vadd.f32 %v4546, %v4634
      %v4636 = vpop.f32.mrf.mxu0
      %v4637 = vadd.f32 %v4548, %v4636
      %4638 = vmatmul.bf16.gmra.mxu0 %v3072
      %v4639 = vpop.f32.mrf.mxu0
      %v4640 = vadd.f32 %v4551, %v4639
      %v4641 = vpop.f32.mrf.mxu0
      %v4642 = vadd.f32 %v4553, %v4641
      %4643 = vmatmul.bf16.gmra.mxu0 %v3073
      %v4644 = vpop.f32.mrf.mxu0
      %v4645 = vadd.f32 %v4556, %v4644
      %v4646 = vpop.f32.mrf.mxu0
      %v4647 = vadd.f32 %v4558, %v4646
      %4648 = vmatmul.bf16.gmra.mxu0 %v3074
      %v4649 = vpop.f32.mrf.mxu0
      %v4650 = vadd.f32 %v4561, %v4649
      %v4651 = vpop.f32.mrf.mxu0
      %v4652 = vadd.f32 %v4563, %v4651
      %4653 = vmatmul.bf16.gmra.mxu0 %v3075
      %v4654 = vpop.f32.mrf.mxu0
      %v4655 = vadd.f32 %v4566, %v4654
      %v4656 = vpop.f32.mrf.mxu0
      %v4657 = vadd.f32 %v4568, %v4656
      %4658 = vmatmul.bf16.gmra.mxu0 %v3076
      %v4659 = vpop.f32.mrf.mxu0
      %v4660 = vadd.f32 %v4571, %v4659
      %v4661 = vpop.f32.mrf.mxu0
      %v4662 = vadd.f32 %v4573, %v4661
      %4663 = vmatmul.bf16.gmra.mxu0 %v3077
      %v4664 = vpop.f32.mrf.mxu0
      %v4665 = vadd.f32 %v4576, %v4664
      %v4666 = vpop.f32.mrf.mxu0
      %v4667 = vadd.f32 %v4578, %v4666
      %4668 = vmatmul.bf16.gmra.mxu0 %v3078
      %v4669 = vpop.f32.mrf.mxu0
      %v4670 = vadd.f32 %v4581, %v4669
      %v4671 = vpop.f32.mrf.mxu0
      %v4672 = vadd.f32 %v4583, %v4671
      %4673 = vmatmul.bf16.gmra.mxu0 %v3079
      %v4674 = vpop.f32.mrf.mxu0
      %v4675 = vadd.f32 %v4586, %v4674
      %v4676 = vpop.f32.mrf.mxu0
      %v4677 = vadd.f32 %v4588, %v4676
      %4678 = vmatmul.bf16.gmra.mxu0 %v3080
      %v4679 = vpop.f32.mrf.mxu0
      %v4680 = vadd.f32 %v4591, %v4679
      %v4681 = vpop.f32.mrf.mxu0
      %v4682 = vadd.f32 %v4593, %v4681
      %4683 = vmatmul.bf16.gmra.mxu0 %v3081
      %v4684 = vpop.f32.mrf.mxu0
      %v4685 = vadd.f32 %v4596, %v4684
      %v4686 = vpop.f32.mrf.mxu0
      %v4687 = vadd.f32 %v4598, %v4686
      %4688 = vmatmul.bf16.gmra.mxu0 %v3082
      %v4689 = vpop.f32.mrf.mxu0
      %v4690 = vadd.f32 %v4601, %v4689
      %v4691 = vpop.f32.mrf.mxu0
      %v4692 = vadd.f32 %v4603, %v4691
      %4693 = vmatmul.bf16.gmra.mxu0 %v3083
      %v4694 = vpop.f32.mrf.mxu0
      %v4695 = vadd.f32 %v4606, %v4694
      %v4696 = vpop.f32.mrf.mxu0
      %v4697 = vadd.f32 %v4608, %v4696
      %4698 = vmatmul.bf16.gmra.mxu0 %v3084
      %v4699 = vpop.f32.mrf.mxu0
      %v4700 = vadd.f32 %v4611, %v4699
      %v4701 = vpop.f32.mrf.mxu0
      %v4702 = vadd.f32 %v4613, %v4701
      %4703 = vdwg.mxu0
      %4704 = vmatpush.bf16.msra.mxu0 %v4065
      %4705 = vmatpush.bf16.msra.mxu0 %v4063
      %4706 = vmatpush.bf16.msra.mxu0 %v4061
      %4707 = vmatpush.bf16.msra.mxu0 %v4059
      %4708 = vmatpush.bf16.msra.mxu0 %v4057
      %4709 = vmatpush.bf16.msra.mxu0 %v4055
      %4710 = vmatpush.bf16.msra.mxu0 %v4053
      %4711 = vmatpush.bf16.msra.mxu0 %v4051
      %4712 = vmatmul.bf16.gmra.mxu0 %v3133
      %v4713 = vpop.f32.mrf.mxu0
      %v4714 = vadd.f32 %v4625, %v4713
      %v4715 = vpop.f32.mrf.mxu0
      %v4716 = vadd.f32 %v4627, %v4715
      %4717 = vmatmul.bf16.gmra.mxu0 %v3134
      %v4718 = vpop.f32.mrf.mxu0
      %v4719 = vadd.f32 %v4630, %v4718
      %v4720 = vpop.f32.mrf.mxu0
      %v4721 = vadd.f32 %v4632, %v4720
      %4722 = vmatmul.bf16.gmra.mxu0 %v3135
      %v4723 = vpop.f32.mrf.mxu0
      %v4724 = vadd.f32 %v4635, %v4723
      %v4725 = vpop.f32.mrf.mxu0
      %v4726 = vadd.f32 %v4637, %v4725
      %4727 = vmatmul.bf16.gmra.mxu0 %v3136
      %v4728 = vpop.f32.mrf.mxu0
      %v4729 = vadd.f32 %v4640, %v4728
      %v4730 = vpop.f32.mrf.mxu0
      %v4731 = vadd.f32 %v4642, %v4730
      %4732 = vmatmul.bf16.gmra.mxu0 %v3137
      %v4733 = vpop.f32.mrf.mxu0
      %v4734 = vadd.f32 %v4645, %v4733
      %v4735 = vpop.f32.mrf.mxu0
      %v4736 = vadd.f32 %v4647, %v4735
      %4737 = vmatmul.bf16.gmra.mxu0 %v3138
      %v4738 = vpop.f32.mrf.mxu0
      %v4739 = vadd.f32 %v4650, %v4738
      %v4740 = vpop.f32.mrf.mxu0
      %v4741 = vadd.f32 %v4652, %v4740
      %4742 = vmatmul.bf16.gmra.mxu0 %v3139
      %v4743 = vpop.f32.mrf.mxu0
      %v4744 = vadd.f32 %v4655, %v4743
      %v4745 = vpop.f32.mrf.mxu0
      %v4746 = vadd.f32 %v4657, %v4745
      %4747 = vmatmul.bf16.gmra.mxu0 %v3140
      %v4748 = vpop.f32.mrf.mxu0
      %v4749 = vadd.f32 %v4660, %v4748
      %v4750 = vpop.f32.mrf.mxu0
      %v4751 = vadd.f32 %v4662, %v4750
      %4752 = vmatmul.bf16.gmra.mxu0 %v3141
      %v4753 = vpop.f32.mrf.mxu0
      %v4754 = vadd.f32 %v4665, %v4753
      %v4755 = vpop.f32.mrf.mxu0
      %v4756 = vadd.f32 %v4667, %v4755
      %4757 = vmatmul.bf16.gmra.mxu0 %v3142
      %v4758 = vpop.f32.mrf.mxu0
      %v4759 = vadd.f32 %v4670, %v4758
      %v4760 = vpop.f32.mrf.mxu0
      %v4761 = vadd.f32 %v4672, %v4760
      %4762 = vmatmul.bf16.gmra.mxu0 %v3143
      %v4763 = vpop.f32.mrf.mxu0
      %v4764 = vadd.f32 %v4675, %v4763
      %v4765 = vpop.f32.mrf.mxu0
      %v4766 = vadd.f32 %v4677, %v4765
      %4767 = vmatmul.bf16.gmra.mxu0 %v3144
      %v4768 = vpop.f32.mrf.mxu0
      %v4769 = vadd.f32 %v4680, %v4768
      %v4770 = vpop.f32.mrf.mxu0
      %v4771 = vadd.f32 %v4682, %v4770
      %4772 = vmatmul.bf16.gmra.mxu0 %v3145
      %v4773 = vpop.f32.mrf.mxu0
      %v4774 = vadd.f32 %v4685, %v4773
      %v4775 = vpop.f32.mrf.mxu0
      %v4776 = vadd.f32 %v4687, %v4775
      %4777 = vmatmul.bf16.gmra.mxu0 %v3146
      %v4778 = vpop.f32.mrf.mxu0
      %v4779 = vadd.f32 %v4690, %v4778
      %v4780 = vpop.f32.mrf.mxu0
      %v4781 = vadd.f32 %v4692, %v4780
      %4782 = vmatmul.bf16.gmra.mxu0 %v3147
      %v4783 = vpop.f32.mrf.mxu0
      %v4784 = vadd.f32 %v4695, %v4783
      %v4785 = vpop.f32.mrf.mxu0
      %v4786 = vadd.f32 %v4697, %v4785
      %4787 = vmatmul.bf16.gmra.mxu0 %v3148
      %v4788 = vpop.f32.mrf.mxu0
      %v4789 = vadd.f32 %v4700, %v4788
      %v4790 = vpop.f32.mrf.mxu0
      %v4791 = vadd.f32 %v4702, %v4790
      %4792 = vdwg.mxu0
      %4793 = vmatpush.bf16.msra.mxu0 %v4081
      %4794 = vmatpush.bf16.msra.mxu0 %v4079
      %4795 = vmatpush.bf16.msra.mxu0 %v4077
      %4796 = vmatpush.bf16.msra.mxu0 %v4075
      %4797 = vmatpush.bf16.msra.mxu0 %v4073
      %4798 = vmatpush.bf16.msra.mxu0 %v4071
      %4799 = vmatpush.bf16.msra.mxu0 %v4069
      %4800 = vmatpush.bf16.msra.mxu0 %v4067
      %4801 = vmatmul.bf16.gmra.mxu0 %v3197
      %v4802 = vpop.f32.mrf.mxu0
      %v4803 = vadd.f32 %v4714, %v4802
      %v4804 = vpop.f32.mrf.mxu0
      %v4805 = vadd.f32 %v4716, %v4804
      %4806 = vmatmul.bf16.gmra.mxu0 %v3198
      %v4807 = vpop.f32.mrf.mxu0
      %v4808 = vadd.f32 %v4719, %v4807
      %v4809 = vpop.f32.mrf.mxu0
      %v4810 = vadd.f32 %v4721, %v4809
      %4811 = vmatmul.bf16.gmra.mxu0 %v3199
      %v4812 = vpop.f32.mrf.mxu0
      %v4813 = vadd.f32 %v4724, %v4812
      %v4814 = vpop.f32.mrf.mxu0
      %v4815 = vadd.f32 %v4726, %v4814
      %4816 = vmatmul.bf16.gmra.mxu0 %v3200
      %v4817 = vpop.f32.mrf.mxu0
      %v4818 = vadd.f32 %v4729, %v4817
      %v4819 = vpop.f32.mrf.mxu0
      %v4820 = vadd.f32 %v4731, %v4819
      %4821 = vmatmul.bf16.gmra.mxu0 %v3201
      %v4822 = vpop.f32.mrf.mxu0
      %v4823 = vadd.f32 %v4734, %v4822
      %v4824 = vpop.f32.mrf.mxu0
      %v4825 = vadd.f32 %v4736, %v4824
      %4826 = vmatmul.bf16.gmra.mxu0 %v3202
      %v4827 = vpop.f32.mrf.mxu0
      %v4828 = vadd.f32 %v4739, %v4827
      %v4829 = vpop.f32.mrf.mxu0
      %v4830 = vadd.f32 %v4741, %v4829
      %4831 = vmatmul.bf16.gmra.mxu0 %v3203
      %v4832 = vpop.f32.mrf.mxu0
      %v4833 = vadd.f32 %v4744, %v4832
      %v4834 = vpop.f32.mrf.mxu0
      %v4835 = vadd.f32 %v4746, %v4834
      %4836 = vmatmul.bf16.gmra.mxu0 %v3204
      %v4837 = vpop.f32.mrf.mxu0
      %v4838 = vadd.f32 %v4749, %v4837
      %v4839 = vpop.f32.mrf.mxu0
      %v4840 = vadd.f32 %v4751, %v4839
      %4841 = vmatmul.bf16.gmra.mxu0 %v3205
      %v4842 = vpop.f32.mrf.mxu0
      %v4843 = vadd.f32 %v4754, %v4842
      %v4844 = vpop.f32.mrf.mxu0
      %v4845 = vadd.f32 %v4756, %v4844
      %4846 = vmatmul.bf16.gmra.mxu0 %v3206
      %v4847 = vpop.f32.mrf.mxu0
      %v4848 = vadd.f32 %v4759, %v4847
      %v4849 = vpop.f32.mrf.mxu0
      %v4850 = vadd.f32 %v4761, %v4849
      %4851 = vmatmul.bf16.gmra.mxu0 %v3207
      %v4852 = vpop.f32.mrf.mxu0
      %v4853 = vadd.f32 %v4764, %v4852
      %v4854 = vpop.f32.mrf.mxu0
      %v4855 = vadd.f32 %v4766, %v4854
      %4856 = vmatmul.bf16.gmra.mxu0 %v3208
      %v4857 = vpop.f32.mrf.mxu0
      %v4858 = vadd.f32 %v4769, %v4857
      %v4859 = vpop.f32.mrf.mxu0
      %v4860 = vadd.f32 %v4771, %v4859
      %4861 = vmatmul.bf16.gmra.mxu0 %v3209
      %v4862 = vpop.f32.mrf.mxu0
      %v4863 = vadd.f32 %v4774, %v4862
      %v4864 = vpop.f32.mrf.mxu0
      %v4865 = vadd.f32 %v4776, %v4864
      %4866 = vmatmul.bf16.gmra.mxu0 %v3210
      %v4867 = vpop.f32.mrf.mxu0
      %v4868 = vadd.f32 %v4779, %v4867
      %v4869 = vpop.f32.mrf.mxu0
      %v4870 = vadd.f32 %v4781, %v4869
      %4871 = vmatmul.bf16.gmra.mxu0 %v3211
      %v4872 = vpop.f32.mrf.mxu0
      %v4873 = vadd.f32 %v4784, %v4872
      %v4874 = vpop.f32.mrf.mxu0
      %v4875 = vadd.f32 %v4786, %v4874
      %4876 = vmatmul.bf16.gmra.mxu0 %v3212
      %v4877 = vpop.f32.mrf.mxu0
      %v4878 = vadd.f32 %v4789, %v4877
      %v4879 = vpop.f32.mrf.mxu0
      %v4880 = vadd.f32 %v4791, %v4879
      %4881 = vdwg.mxu0
      %4882 = vmatpush.bf16.msra.mxu0 %v4097
      %4883 = vmatpush.bf16.msra.mxu0 %v4095
      %4884 = vmatpush.bf16.msra.mxu0 %v4093
      %4885 = vmatpush.bf16.msra.mxu0 %v4091
      %4886 = vmatpush.bf16.msra.mxu0 %v4089
      %4887 = vmatpush.bf16.msra.mxu0 %v4087
      %4888 = vmatpush.bf16.msra.mxu0 %v4085
      %4889 = vmatpush.bf16.msra.mxu0 %v4083
      %4890 = vmatmul.bf16.gmra.mxu0 %v3293
      %v4891 = vpop.f32.mrf.mxu0
      %v4892 = vadd.f32 %v4803, %v4891
      %v4893 = vpop.f32.mrf.mxu0
      %v4894 = vadd.f32 %v4805, %v4893
      %4895 = vmatmul.bf16.gmra.mxu0 %v3294
      %v4896 = vpop.f32.mrf.mxu0
      %v4897 = vadd.f32 %v4808, %v4896
      %v4898 = vpop.f32.mrf.mxu0
      %v4899 = vadd.f32 %v4810, %v4898
      %4900 = vmatmul.bf16.gmra.mxu0 %v3295
      %v4901 = vpop.f32.mrf.mxu0
      %v4902 = vadd.f32 %v4813, %v4901
      %v4903 = vpop.f32.mrf.mxu0
      %v4904 = vadd.f32 %v4815, %v4903
      %4905 = vmatmul.bf16.gmra.mxu0 %v3296
      %v4906 = vpop.f32.mrf.mxu0
      %v4907 = vadd.f32 %v4818, %v4906
      %v4908 = vpop.f32.mrf.mxu0
      %v4909 = vadd.f32 %v4820, %v4908
      %4910 = vmatmul.bf16.gmra.mxu0 %v3297
      %v4911 = vpop.f32.mrf.mxu0
      %v4912 = vadd.f32 %v4823, %v4911
      %v4913 = vpop.f32.mrf.mxu0
      %v4914 = vadd.f32 %v4825, %v4913
      %4915 = vmatmul.bf16.gmra.mxu0 %v3298
      %v4916 = vpop.f32.mrf.mxu0
      %v4917 = vadd.f32 %v4828, %v4916
      %v4918 = vpop.f32.mrf.mxu0
      %v4919 = vadd.f32 %v4830, %v4918
      %4920 = vmatmul.bf16.gmra.mxu0 %v3299
      %v4921 = vpop.f32.mrf.mxu0
      %v4922 = vadd.f32 %v4833, %v4921
      %v4923 = vpop.f32.mrf.mxu0
      %v4924 = vadd.f32 %v4835, %v4923
      %4925 = vmatmul.bf16.gmra.mxu0 %v3300
      %v4926 = vpop.f32.mrf.mxu0
      %v4927 = vadd.f32 %v4838, %v4926
      %v4928 = vpop.f32.mrf.mxu0
      %v4929 = vadd.f32 %v4840, %v4928
      %4930 = vmatmul.bf16.gmra.mxu0 %v3301
      %v4931 = vpop.f32.mrf.mxu0
      %v4932 = vadd.f32 %v4843, %v4931
      %v4933 = vpop.f32.mrf.mxu0
      %v4934 = vadd.f32 %v4845, %v4933
      %4935 = vmatmul.bf16.gmra.mxu0 %v3302
      %v4936 = vpop.f32.mrf.mxu0
      %v4937 = vadd.f32 %v4848, %v4936
      %v4938 = vpop.f32.mrf.mxu0
      %v4939 = vadd.f32 %v4850, %v4938
      %4940 = vmatmul.bf16.gmra.mxu0 %v3303
      %v4941 = vpop.f32.mrf.mxu0
      %v4942 = vadd.f32 %v4853, %v4941
      %v4943 = vpop.f32.mrf.mxu0
      %v4944 = vadd.f32 %v4855, %v4943
      %4945 = vmatmul.bf16.gmra.mxu0 %v3304
      %v4946 = vpop.f32.mrf.mxu0
      %v4947 = vadd.f32 %v4858, %v4946
      %v4948 = vpop.f32.mrf.mxu0
      %v4949 = vadd.f32 %v4860, %v4948
      %4950 = vmatmul.bf16.gmra.mxu0 %v3305
      %v4951 = vpop.f32.mrf.mxu0
      %v4952 = vadd.f32 %v4863, %v4951
      %v4953 = vpop.f32.mrf.mxu0
      %v4954 = vadd.f32 %v4865, %v4953
      %4955 = vmatmul.bf16.gmra.mxu0 %v3306
      %v4956 = vpop.f32.mrf.mxu0
      %v4957 = vadd.f32 %v4868, %v4956
      %v4958 = vpop.f32.mrf.mxu0
      %v4959 = vadd.f32 %v4870, %v4958
      %4960 = vmatmul.bf16.gmra.mxu0 %v3307
      %v4961 = vpop.f32.mrf.mxu0
      %v4962 = vadd.f32 %v4873, %v4961
      %v4963 = vpop.f32.mrf.mxu0
      %v4964 = vadd.f32 %v4875, %v4963
      %4965 = vmatmul.bf16.gmra.mxu0 %v3308
      %v4966 = vpop.f32.mrf.mxu0
      %v4967 = vadd.f32 %v4878, %v4966
      %v4968 = vpop.f32.mrf.mxu0
      %v4969 = vadd.f32 %v4880, %v4968
      %4970 = vdwg.mxu0
      %4971 = vmatpush.bf16.msra.mxu0 %v4113
      %4972 = vmatpush.bf16.msra.mxu0 %v4111
      %4973 = vmatpush.bf16.msra.mxu0 %v4109
      %4974 = vmatpush.bf16.msra.mxu0 %v4107
      %4975 = vmatpush.bf16.msra.mxu0 %v4105
      %4976 = vmatpush.bf16.msra.mxu0 %v4103
      %4977 = vmatpush.bf16.msra.mxu0 %v4101
      %4978 = vmatpush.bf16.msra.mxu0 %v4099
      %4979 = vmatmul.bf16.gmra.mxu0 %v3357
      %v4980 = vpop.f32.mrf.mxu0
      %v4981 = vadd.f32 %v4892, %v4980
      %v4982 = vpop.f32.mrf.mxu0
      %v4983 = vadd.f32 %v4894, %v4982
      %4984 = vmatmul.bf16.gmra.mxu0 %v3358
      %v4985 = vpop.f32.mrf.mxu0
      %v4986 = vadd.f32 %v4897, %v4985
      %v4987 = vpop.f32.mrf.mxu0
      %v4988 = vadd.f32 %v4899, %v4987
      %4989 = vmatmul.bf16.gmra.mxu0 %v3359
      %v4990 = vpop.f32.mrf.mxu0
      %v4991 = vadd.f32 %v4902, %v4990
      %v4992 = vpop.f32.mrf.mxu0
      %v4993 = vadd.f32 %v4904, %v4992
      %4994 = vmatmul.bf16.gmra.mxu0 %v3360
      %v4995 = vpop.f32.mrf.mxu0
      %v4996 = vadd.f32 %v4907, %v4995
      %v4997 = vpop.f32.mrf.mxu0
      %v4998 = vadd.f32 %v4909, %v4997
      %4999 = vmatmul.bf16.gmra.mxu0 %v3361
      %v5000 = vpop.f32.mrf.mxu0
      %v5001 = vadd.f32 %v4912, %v5000
      %v5002 = vpop.f32.mrf.mxu0
      %v5003 = vadd.f32 %v4914, %v5002
      %5004 = vmatmul.bf16.gmra.mxu0 %v3362
      %v5005 = vpop.f32.mrf.mxu0
      %v5006 = vadd.f32 %v4917, %v5005
      %v5007 = vpop.f32.mrf.mxu0
      %v5008 = vadd.f32 %v4919, %v5007
      %5009 = vmatmul.bf16.gmra.mxu0 %v3363
      %v5010 = vpop.f32.mrf.mxu0
      %v5011 = vadd.f32 %v4922, %v5010
      %v5012 = vpop.f32.mrf.mxu0
      %v5013 = vadd.f32 %v4924, %v5012
      %5014 = vmatmul.bf16.gmra.mxu0 %v3364
      %v5015 = vpop.f32.mrf.mxu0
      %v5016 = vadd.f32 %v4927, %v5015
      %v5017 = vpop.f32.mrf.mxu0
      %v5018 = vadd.f32 %v4929, %v5017
      %5019 = vmatmul.bf16.gmra.mxu0 %v3365
      %v5020 = vpop.f32.mrf.mxu0
      %v5021 = vadd.f32 %v4932, %v5020
      %v5022 = vpop.f32.mrf.mxu0
      %v5023 = vadd.f32 %v4934, %v5022
      %5024 = vmatmul.bf16.gmra.mxu0 %v3366
      %v5025 = vpop.f32.mrf.mxu0
      %v5026 = vadd.f32 %v4937, %v5025
      %v5027 = vpop.f32.mrf.mxu0
      %v5028 = vadd.f32 %v4939, %v5027
      %5029 = vmatmul.bf16.gmra.mxu0 %v3367
      %v5030 = vpop.f32.mrf.mxu0
      %v5031 = vadd.f32 %v4942, %v5030
      %v5032 = vpop.f32.mrf.mxu0
      %v5033 = vadd.f32 %v4944, %v5032
      %5034 = vmatmul.bf16.gmra.mxu0 %v3368
      %v5035 = vpop.f32.mrf.mxu0
      %v5036 = vadd.f32 %v4947, %v5035
      %v5037 = vpop.f32.mrf.mxu0
      %v5038 = vadd.f32 %v4949, %v5037
      %5039 = vmatmul.bf16.gmra.mxu0 %v3369
      %v5040 = vpop.f32.mrf.mxu0
      %v5041 = vadd.f32 %v4952, %v5040
      %v5042 = vpop.f32.mrf.mxu0
      %v5043 = vadd.f32 %v4954, %v5042
      %5044 = vmatmul.bf16.gmra.mxu0 %v3370
      %v5045 = vpop.f32.mrf.mxu0
      %v5046 = vadd.f32 %v4957, %v5045
      %v5047 = vpop.f32.mrf.mxu0
      %v5048 = vadd.f32 %v4959, %v5047
      %5049 = vmatmul.bf16.gmra.mxu0 %v3371
      %v5050 = vpop.f32.mrf.mxu0
      %v5051 = vadd.f32 %v4962, %v5050
      %v5052 = vpop.f32.mrf.mxu0
      %v5053 = vadd.f32 %v4964, %v5052
      %5054 = vmatmul.bf16.gmra.mxu0 %v3372
      %v5055 = vpop.f32.mrf.mxu0
      %v5056 = vadd.f32 %v4967, %v5055
      %v5057 = vpop.f32.mrf.mxu0
      %v5058 = vadd.f32 %v4969, %v5057
      %5059 = vdwg.mxu0
      %5060 = vmatpush.bf16.msra.mxu0 %v3986
      %5061 = vmatpush.bf16.msra.mxu0 %v3984
      %5062 = vmatpush.bf16.msra.mxu0 %v3982
      %5063 = vmatpush.bf16.msra.mxu0 %v3980
      %5064 = vmatpush.bf16.msra.mxu0 %v3978
      %5065 = vmatpush.bf16.msra.mxu0 %v3976
      %5066 = vmatpush.bf16.msra.mxu0 %v3974
      %5067 = vmatpush.bf16.msra.mxu0 %v3972
      %5068 = vmatmul.bf16.gmra.mxu0 %v2749
      %v5069 = vpop.f32.mrf.mxu0
      %v5070 = vadd.f32 %v3536, %v5069
      %v5071 = vpop.f32.mrf.mxu0
      %v5072 = vadd.f32 %v3536, %v5071
      %5073 = vmatmul.bf16.gmra.mxu0 %v2750
      %v5074 = vpop.f32.mrf.mxu0
      %v5075 = vadd.f32 %v3536, %v5074
      %v5076 = vpop.f32.mrf.mxu0
      %v5077 = vadd.f32 %v3536, %v5076
      %5078 = vmatmul.bf16.gmra.mxu0 %v2751
      %v5079 = vpop.f32.mrf.mxu0
      %v5080 = vadd.f32 %v3536, %v5079
      %v5081 = vpop.f32.mrf.mxu0
      %v5082 = vadd.f32 %v3536, %v5081
      %5083 = vmatmul.bf16.gmra.mxu0 %v2752
      %v5084 = vpop.f32.mrf.mxu0
      %v5085 = vadd.f32 %v3536, %v5084
      %v5086 = vpop.f32.mrf.mxu0
      %v5087 = vadd.f32 %v3536, %v5086
      %5088 = vmatmul.bf16.gmra.mxu0 %v2753
      %v5089 = vpop.f32.mrf.mxu0
      %v5090 = vadd.f32 %v3536, %v5089
      %v5091 = vpop.f32.mrf.mxu0
      %v5092 = vadd.f32 %v3536, %v5091
      %5093 = vmatmul.bf16.gmra.mxu0 %v2754
      %v5094 = vpop.f32.mrf.mxu0
      %v5095 = vadd.f32 %v3536, %v5094
      %v5096 = vpop.f32.mrf.mxu0
      %v5097 = vadd.f32 %v3536, %v5096
      %5098 = vmatmul.bf16.gmra.mxu0 %v2755
      %v5099 = vpop.f32.mrf.mxu0
      %v5100 = vadd.f32 %v3536, %v5099
      %v5101 = vpop.f32.mrf.mxu0
      %v5102 = vadd.f32 %v3536, %v5101
      %5103 = vmatmul.bf16.gmra.mxu0 %v2756
      %v5104 = vpop.f32.mrf.mxu0
      %v5105 = vadd.f32 %v3536, %v5104
      %v5106 = vpop.f32.mrf.mxu0
      %v5107 = vadd.f32 %v3536, %v5106
      %5108 = vmatmul.bf16.gmra.mxu0 %v2757
      %v5109 = vpop.f32.mrf.mxu0
      %v5110 = vadd.f32 %v3536, %v5109
      %v5111 = vpop.f32.mrf.mxu0
      %v5112 = vadd.f32 %v3536, %v5111
      %5113 = vmatmul.bf16.gmra.mxu0 %v2758
      %v5114 = vpop.f32.mrf.mxu0
      %v5115 = vadd.f32 %v3536, %v5114
      %v5116 = vpop.f32.mrf.mxu0
      %v5117 = vadd.f32 %v3536, %v5116
      %5118 = vmatmul.bf16.gmra.mxu0 %v2759
      %v5119 = vpop.f32.mrf.mxu0
      %v5120 = vadd.f32 %v3536, %v5119
      %v5121 = vpop.f32.mrf.mxu0
      %v5122 = vadd.f32 %v3536, %v5121
      %5123 = vmatmul.bf16.gmra.mxu0 %v2760
      %v5124 = vpop.f32.mrf.mxu0
      %v5125 = vadd.f32 %v3536, %v5124
      %v5126 = vpop.f32.mrf.mxu0
      %v5127 = vadd.f32 %v3536, %v5126
      %5128 = vmatmul.bf16.gmra.mxu0 %v2761
      %v5129 = vpop.f32.mrf.mxu0
      %v5130 = vadd.f32 %v3536, %v5129
      %v5131 = vpop.f32.mrf.mxu0
      %v5132 = vadd.f32 %v3536, %v5131
      %5133 = vmatmul.bf16.gmra.mxu0 %v2762
      %v5134 = vpop.f32.mrf.mxu0
      %v5135 = vadd.f32 %v3536, %v5134
      %v5136 = vpop.f32.mrf.mxu0
      %v5137 = vadd.f32 %v3536, %v5136
      %5138 = vmatmul.bf16.gmra.mxu0 %v2763
      %v5139 = vpop.f32.mrf.mxu0
      %v5140 = vadd.f32 %v3536, %v5139
      %v5141 = vpop.f32.mrf.mxu0
      %v5142 = vadd.f32 %v3536, %v5141
      %5143 = vmatmul.bf16.gmra.mxu0 %v2764
      %v5144 = vpop.f32.mrf.mxu0
      %v5145 = vadd.f32 %v3536, %v5144
      %v5146 = vpop.f32.mrf.mxu0
      %v5147 = vadd.f32 %v3536, %v5146
      %5148 = vdwg.mxu0
      %5149 = vmatpush.bf16.msra.mxu0 %v4002
      %5150 = vmatpush.bf16.msra.mxu0 %v4000
      %5151 = vmatpush.bf16.msra.mxu0 %v3998
      %5152 = vmatpush.bf16.msra.mxu0 %v3996
      %5153 = vmatpush.bf16.msra.mxu0 %v3994
      %5154 = vmatpush.bf16.msra.mxu0 %v3992
      %5155 = vmatpush.bf16.msra.mxu0 %v3990
      %5156 = vmatpush.bf16.msra.mxu0 %v3988
      %5157 = vmatmul.bf16.gmra.mxu0 %v2845
      %v5158 = vpop.f32.mrf.mxu0
      %v5159 = vadd.f32 %v5070, %v5158
      %v5160 = vpop.f32.mrf.mxu0
      %v5161 = vadd.f32 %v5072, %v5160
      %5162 = vmatmul.bf16.gmra.mxu0 %v2846
      %v5163 = vpop.f32.mrf.mxu0
      %v5164 = vadd.f32 %v5075, %v5163
      %v5165 = vpop.f32.mrf.mxu0
      %v5166 = vadd.f32 %v5077, %v5165
      %5167 = vmatmul.bf16.gmra.mxu0 %v2847
      %v5168 = vpop.f32.mrf.mxu0
      %v5169 = vadd.f32 %v5080, %v5168
      %v5170 = vpop.f32.mrf.mxu0
      %v5171 = vadd.f32 %v5082, %v5170
      %5172 = vmatmul.bf16.gmra.mxu0 %v2848
      %v5173 = vpop.f32.mrf.mxu0
      %v5174 = vadd.f32 %v5085, %v5173
      %v5175 = vpop.f32.mrf.mxu0
      %v5176 = vadd.f32 %v5087, %v5175
      %5177 = vmatmul.bf16.gmra.mxu0 %v2849
      %v5178 = vpop.f32.mrf.mxu0
      %v5179 = vadd.f32 %v5090, %v5178
      %v5180 = vpop.f32.mrf.mxu0
      %v5181 = vadd.f32 %v5092, %v5180
      %5182 = vmatmul.bf16.gmra.mxu0 %v2850
      %v5183 = vpop.f32.mrf.mxu0
      %v5184 = vadd.f32 %v5095, %v5183
      %v5185 = vpop.f32.mrf.mxu0
      %v5186 = vadd.f32 %v5097, %v5185
      %5187 = vmatmul.bf16.gmra.mxu0 %v2851
      %v5188 = vpop.f32.mrf.mxu0
      %v5189 = vadd.f32 %v5100, %v5188
      %v5190 = vpop.f32.mrf.mxu0
      %v5191 = vadd.f32 %v5102, %v5190
      %5192 = vmatmul.bf16.gmra.mxu0 %v2852
      %v5193 = vpop.f32.mrf.mxu0
      %v5194 = vadd.f32 %v5105, %v5193
      %v5195 = vpop.f32.mrf.mxu0
      %v5196 = vadd.f32 %v5107, %v5195
      %5197 = vmatmul.bf16.gmra.mxu0 %v2853
      %v5198 = vpop.f32.mrf.mxu0
      %v5199 = vadd.f32 %v5110, %v5198
      %v5200 = vpop.f32.mrf.mxu0
      %v5201 = vadd.f32 %v5112, %v5200
      %5202 = vmatmul.bf16.gmra.mxu0 %v2854
      %v5203 = vpop.f32.mrf.mxu0
      %v5204 = vadd.f32 %v5115, %v5203
      %v5205 = vpop.f32.mrf.mxu0
      %v5206 = vadd.f32 %v5117, %v5205
      %5207 = vmatmul.bf16.gmra.mxu0 %v2855
      %v5208 = vpop.f32.mrf.mxu0
      %v5209 = vadd.f32 %v5120, %v5208
      %v5210 = vpop.f32.mrf.mxu0
      %v5211 = vadd.f32 %v5122, %v5210
      %5212 = vmatmul.bf16.gmra.mxu0 %v2856
      %v5213 = vpop.f32.mrf.mxu0
      %v5214 = vadd.f32 %v5125, %v5213
      %v5215 = vpop.f32.mrf.mxu0
      %v5216 = vadd.f32 %v5127, %v5215
      %5217 = vmatmul.bf16.gmra.mxu0 %v2857
      %v5218 = vpop.f32.mrf.mxu0
      %v5219 = vadd.f32 %v5130, %v5218
      %v5220 = vpop.f32.mrf.mxu0
      %v5221 = vadd.f32 %v5132, %v5220
      %5222 = vmatmul.bf16.gmra.mxu0 %v2858
      %v5223 = vpop.f32.mrf.mxu0
      %v5224 = vadd.f32 %v5135, %v5223
      %v5225 = vpop.f32.mrf.mxu0
      %v5226 = vadd.f32 %v5137, %v5225
      %5227 = vmatmul.bf16.gmra.mxu0 %v2859
      %v5228 = vpop.f32.mrf.mxu0
      %v5229 = vadd.f32 %v5140, %v5228
      %v5230 = vpop.f32.mrf.mxu0
      %v5231 = vadd.f32 %v5142, %v5230
      %5232 = vmatmul.bf16.gmra.mxu0 %v2860
      %v5233 = vpop.f32.mrf.mxu0
      %v5234 = vadd.f32 %v5145, %v5233
      %v5235 = vpop.f32.mrf.mxu0
      %v5236 = vadd.f32 %v5147, %v5235
      %5237 = vdwg.mxu0
      %5238 = vmatpush.bf16.msra.mxu0 %v4018
      %5239 = vmatpush.bf16.msra.mxu0 %v4016
      %5240 = vmatpush.bf16.msra.mxu0 %v4014
      %5241 = vmatpush.bf16.msra.mxu0 %v4012
      %5242 = vmatpush.bf16.msra.mxu0 %v4010
      %5243 = vmatpush.bf16.msra.mxu0 %v4008
      %5244 = vmatpush.bf16.msra.mxu0 %v4006
      %5245 = vmatpush.bf16.msra.mxu0 %v4004
      %5246 = vmatmul.bf16.gmra.mxu0 %v2909
      %v5247 = vpop.f32.mrf.mxu0
      %v5248 = vadd.f32 %v5159, %v5247
      %v5249 = vpop.f32.mrf.mxu0
      %v5250 = vadd.f32 %v5161, %v5249
      %5251 = vmatmul.bf16.gmra.mxu0 %v2910
      %v5252 = vpop.f32.mrf.mxu0
      %v5253 = vadd.f32 %v5164, %v5252
      %v5254 = vpop.f32.mrf.mxu0
      %v5255 = vadd.f32 %v5166, %v5254
      %5256 = vmatmul.bf16.gmra.mxu0 %v2911
      %v5257 = vpop.f32.mrf.mxu0
      %v5258 = vadd.f32 %v5169, %v5257
      %v5259 = vpop.f32.mrf.mxu0
      %v5260 = vadd.f32 %v5171, %v5259
      %5261 = vmatmul.bf16.gmra.mxu0 %v2912
      %v5262 = vpop.f32.mrf.mxu0
      %v5263 = vadd.f32 %v5174, %v5262
      %v5264 = vpop.f32.mrf.mxu0
      %v5265 = vadd.f32 %v5176, %v5264
      %5266 = vmatmul.bf16.gmra.mxu0 %v2913
      %v5267 = vpop.f32.mrf.mxu0
      %v5268 = vadd.f32 %v5179, %v5267
      %v5269 = vpop.f32.mrf.mxu0
      %v5270 = vadd.f32 %v5181, %v5269
      %5271 = vmatmul.bf16.gmra.mxu0 %v2914
      %v5272 = vpop.f32.mrf.mxu0
      %v5273 = vadd.f32 %v5184, %v5272
      %v5274 = vpop.f32.mrf.mxu0
      %v5275 = vadd.f32 %v5186, %v5274
      %5276 = vmatmul.bf16.gmra.mxu0 %v2915
      %v5277 = vpop.f32.mrf.mxu0
      %v5278 = vadd.f32 %v5189, %v5277
      %v5279 = vpop.f32.mrf.mxu0
      %v5280 = vadd.f32 %v5191, %v5279
      %5281 = vmatmul.bf16.gmra.mxu0 %v2916
      %v5282 = vpop.f32.mrf.mxu0
      %v5283 = vadd.f32 %v5194, %v5282
      %v5284 = vpop.f32.mrf.mxu0
      %v5285 = vadd.f32 %v5196, %v5284
      %5286 = vmatmul.bf16.gmra.mxu0 %v2917
      %v5287 = vpop.f32.mrf.mxu0
      %v5288 = vadd.f32 %v5199, %v5287
      %v5289 = vpop.f32.mrf.mxu0
      %v5290 = vadd.f32 %v5201, %v5289
      %5291 = vmatmul.bf16.gmra.mxu0 %v2918
      %v5292 = vpop.f32.mrf.mxu0
      %v5293 = vadd.f32 %v5204, %v5292
      %v5294 = vpop.f32.mrf.mxu0
      %v5295 = vadd.f32 %v5206, %v5294
      %5296 = vmatmul.bf16.gmra.mxu0 %v2919
      %v5297 = vpop.f32.mrf.mxu0
      %v5298 = vadd.f32 %v5209, %v5297
      %v5299 = vpop.f32.mrf.mxu0
      %v5300 = vadd.f32 %v5211, %v5299
      %5301 = vmatmul.bf16.gmra.mxu0 %v2920
      %v5302 = vpop.f32.mrf.mxu0
      %v5303 = vadd.f32 %v5214, %v5302
      %v5304 = vpop.f32.mrf.mxu0
      %v5305 = vadd.f32 %v5216, %v5304
      %5306 = vmatmul.bf16.gmra.mxu0 %v2921
      %v5307 = vpop.f32.mrf.mxu0
      %v5308 = vadd.f32 %v5219, %v5307
      %v5309 = vpop.f32.mrf.mxu0
      %v5310 = vadd.f32 %v5221, %v5309
      %5311 = vmatmul.bf16.gmra.mxu0 %v2922
      %v5312 = vpop.f32.mrf.mxu0
      %v5313 = vadd.f32 %v5224, %v5312
      %v5314 = vpop.f32.mrf.mxu0
      %v5315 = vadd.f32 %v5226, %v5314
      %5316 = vmatmul.bf16.gmra.mxu0 %v2923
      %v5317 = vpop.f32.mrf.mxu0
      %v5318 = vadd.f32 %v5229, %v5317
      %v5319 = vpop.f32.mrf.mxu0
      %v5320 = vadd.f32 %v5231, %v5319
      %5321 = vmatmul.bf16.gmra.mxu0 %v2924
      %v5322 = vpop.f32.mrf.mxu0
      %v5323 = vadd.f32 %v5234, %v5322
      %v5324 = vpop.f32.mrf.mxu0
      %v5325 = vadd.f32 %v5236, %v5324
      %5326 = vdwg.mxu0
      %5327 = vmatpush.bf16.msra.mxu0 %v4034
      %5328 = vmatpush.bf16.msra.mxu0 %v4032
      %5329 = vmatpush.bf16.msra.mxu0 %v4030
      %5330 = vmatpush.bf16.msra.mxu0 %v4028
      %5331 = vmatpush.bf16.msra.mxu0 %v4026
      %5332 = vmatpush.bf16.msra.mxu0 %v4024
      %5333 = vmatpush.bf16.msra.mxu0 %v4022
      %5334 = vmatpush.bf16.msra.mxu0 %v4020
      %5335 = vmatmul.bf16.gmra.mxu0 %v2973
      %v5336 = vpop.f32.mrf.mxu0
      %v5337 = vadd.f32 %v5248, %v5336
      %v5338 = vpop.f32.mrf.mxu0
      %v5339 = vadd.f32 %v5250, %v5338
      %5340 = vmatmul.bf16.gmra.mxu0 %v2974
      %v5341 = vpop.f32.mrf.mxu0
      %v5342 = vadd.f32 %v5253, %v5341
      %v5343 = vpop.f32.mrf.mxu0
      %v5344 = vadd.f32 %v5255, %v5343
      %5345 = vmatmul.bf16.gmra.mxu0 %v2975
      %v5346 = vpop.f32.mrf.mxu0
      %v5347 = vadd.f32 %v5258, %v5346
      %v5348 = vpop.f32.mrf.mxu0
      %v5349 = vadd.f32 %v5260, %v5348
      %5350 = vmatmul.bf16.gmra.mxu0 %v2976
      %v5351 = vpop.f32.mrf.mxu0
      %v5352 = vadd.f32 %v5263, %v5351
      %v5353 = vpop.f32.mrf.mxu0
      %v5354 = vadd.f32 %v5265, %v5353
      %5355 = vmatmul.bf16.gmra.mxu0 %v2977
      %v5356 = vpop.f32.mrf.mxu0
      %v5357 = vadd.f32 %v5268, %v5356
      %v5358 = vpop.f32.mrf.mxu0
      %v5359 = vadd.f32 %v5270, %v5358
      %5360 = vmatmul.bf16.gmra.mxu0 %v2978
      %v5361 = vpop.f32.mrf.mxu0
      %v5362 = vadd.f32 %v5273, %v5361
      %v5363 = vpop.f32.mrf.mxu0
      %v5364 = vadd.f32 %v5275, %v5363
      %5365 = vmatmul.bf16.gmra.mxu0 %v2979
      %v5366 = vpop.f32.mrf.mxu0
      %v5367 = vadd.f32 %v5278, %v5366
      %v5368 = vpop.f32.mrf.mxu0
      %v5369 = vadd.f32 %v5280, %v5368
      %5370 = vmatmul.bf16.gmra.mxu0 %v2980
      %v5371 = vpop.f32.mrf.mxu0
      %v5372 = vadd.f32 %v5283, %v5371
      %v5373 = vpop.f32.mrf.mxu0
      %v5374 = vadd.f32 %v5285, %v5373
      %5375 = vmatmul.bf16.gmra.mxu0 %v2981
      %v5376 = vpop.f32.mrf.mxu0
      %v5377 = vadd.f32 %v5288, %v5376
      %v5378 = vpop.f32.mrf.mxu0
      %v5379 = vadd.f32 %v5290, %v5378
      %5380 = vmatmul.bf16.gmra.mxu0 %v2982
      %v5381 = vpop.f32.mrf.mxu0
      %v5382 = vadd.f32 %v5293, %v5381
      %v5383 = vpop.f32.mrf.mxu0
      %v5384 = vadd.f32 %v5295, %v5383
      %5385 = vmatmul.bf16.gmra.mxu0 %v2983
      %v5386 = vpop.f32.mrf.mxu0
      %v5387 = vadd.f32 %v5298, %v5386
      %v5388 = vpop.f32.mrf.mxu0
      %v5389 = vadd.f32 %v5300, %v5388
      %5390 = vmatmul.bf16.gmra.mxu0 %v2984
      %v5391 = vpop.f32.mrf.mxu0
      %v5392 = vadd.f32 %v5303, %v5391
      %v5393 = vpop.f32.mrf.mxu0
      %v5394 = vadd.f32 %v5305, %v5393
      %5395 = vmatmul.bf16.gmra.mxu0 %v2985
      %v5396 = vpop.f32.mrf.mxu0
      %v5397 = vadd.f32 %v5308, %v5396
      %v5398 = vpop.f32.mrf.mxu0
      %v5399 = vadd.f32 %v5310, %v5398
      %5400 = vmatmul.bf16.gmra.mxu0 %v2986
      %v5401 = vpop.f32.mrf.mxu0
      %v5402 = vadd.f32 %v5313, %v5401
      %v5403 = vpop.f32.mrf.mxu0
      %v5404 = vadd.f32 %v5315, %v5403
      %5405 = vmatmul.bf16.gmra.mxu0 %v2987
      %v5406 = vpop.f32.mrf.mxu0
      %v5407 = vadd.f32 %v5318, %v5406
      %v5408 = vpop.f32.mrf.mxu0
      %v5409 = vadd.f32 %v5320, %v5408
      %5410 = vmatmul.bf16.gmra.mxu0 %v2988
      %v5411 = vpop.f32.mrf.mxu0
      %v5412 = vadd.f32 %v5323, %v5411
      %v5413 = vpop.f32.mrf.mxu0
      %v5414 = vadd.f32 %v5325, %v5413
      %5415 = vdwg.mxu0
      %5416 = vmatpush.bf16.msra.mxu0 %v4050
      %5417 = vmatpush.bf16.msra.mxu0 %v4048
      %5418 = vmatpush.bf16.msra.mxu0 %v4046
      %5419 = vmatpush.bf16.msra.mxu0 %v4044
      %5420 = vmatpush.bf16.msra.mxu0 %v4042
      %5421 = vmatpush.bf16.msra.mxu0 %v4040
      %5422 = vmatpush.bf16.msra.mxu0 %v4038
      %5423 = vmatpush.bf16.msra.mxu0 %v4036
      %5424 = vmatmul.bf16.gmra.mxu0 %v3069
      %v5425 = vpop.f32.mrf.mxu0
      %v5426 = vadd.f32 %v5337, %v5425
      %v5427 = vpop.f32.mrf.mxu0
      %v5428 = vadd.f32 %v5339, %v5427
      %5429 = vmatmul.bf16.gmra.mxu0 %v3070
      %v5430 = vpop.f32.mrf.mxu0
      %v5431 = vadd.f32 %v5342, %v5430
      %v5432 = vpop.f32.mrf.mxu0
      %v5433 = vadd.f32 %v5344, %v5432
      %5434 = vmatmul.bf16.gmra.mxu0 %v3071
      %v5435 = vpop.f32.mrf.mxu0
      %v5436 = vadd.f32 %v5347, %v5435
      %v5437 = vpop.f32.mrf.mxu0
      %v5438 = vadd.f32 %v5349, %v5437
      %5439 = vmatmul.bf16.gmra.mxu0 %v3072
      %v5440 = vpop.f32.mrf.mxu0
      %v5441 = vadd.f32 %v5352, %v5440
      %v5442 = vpop.f32.mrf.mxu0
      %v5443 = vadd.f32 %v5354, %v5442
      %5444 = vmatmul.bf16.gmra.mxu0 %v3073
      %v5445 = vpop.f32.mrf.mxu0
      %v5446 = vadd.f32 %v5357, %v5445
      %v5447 = vpop.f32.mrf.mxu0
      %v5448 = vadd.f32 %v5359, %v5447
      %5449 = vmatmul.bf16.gmra.mxu0 %v3074
      %v5450 = vpop.f32.mrf.mxu0
      %v5451 = vadd.f32 %v5362, %v5450
      %v5452 = vpop.f32.mrf.mxu0
      %v5453 = vadd.f32 %v5364, %v5452
      %5454 = vmatmul.bf16.gmra.mxu0 %v3075
      %v5455 = vpop.f32.mrf.mxu0
      %v5456 = vadd.f32 %v5367, %v5455
      %v5457 = vpop.f32.mrf.mxu0
      %v5458 = vadd.f32 %v5369, %v5457
      %5459 = vmatmul.bf16.gmra.mxu0 %v3076
      %v5460 = vpop.f32.mrf.mxu0
      %v5461 = vadd.f32 %v5372, %v5460
      %v5462 = vpop.f32.mrf.mxu0
      %v5463 = vadd.f32 %v5374, %v5462
      %5464 = vmatmul.bf16.gmra.mxu0 %v3077
      %v5465 = vpop.f32.mrf.mxu0
      %v5466 = vadd.f32 %v5377, %v5465
      %v5467 = vpop.f32.mrf.mxu0
      %v5468 = vadd.f32 %v5379, %v5467
      %5469 = vmatmul.bf16.gmra.mxu0 %v3078
      %v5470 = vpop.f32.mrf.mxu0
      %v5471 = vadd.f32 %v5382, %v5470
      %v5472 = vpop.f32.mrf.mxu0
      %v5473 = vadd.f32 %v5384, %v5472
      %5474 = vmatmul.bf16.gmra.mxu0 %v3079
      %v5475 = vpop.f32.mrf.mxu0
      %v5476 = vadd.f32 %v5387, %v5475
      %v5477 = vpop.f32.mrf.mxu0
      %v5478 = vadd.f32 %v5389, %v5477
      %5479 = vmatmul.bf16.gmra.mxu0 %v3080
      %v5480 = vpop.f32.mrf.mxu0
      %v5481 = vadd.f32 %v5392, %v5480
      %v5482 = vpop.f32.mrf.mxu0
      %v5483 = vadd.f32 %v5394, %v5482
      %5484 = vmatmul.bf16.gmra.mxu0 %v3081
      %v5485 = vpop.f32.mrf.mxu0
      %v5486 = vadd.f32 %v5397, %v5485
      %v5487 = vpop.f32.mrf.mxu0
      %v5488 = vadd.f32 %v5399, %v5487
      %5489 = vmatmul.bf16.gmra.mxu0 %v3082
      %v5490 = vpop.f32.mrf.mxu0
      %v5491 = vadd.f32 %v5402, %v5490
      %v5492 = vpop.f32.mrf.mxu0
      %v5493 = vadd.f32 %v5404, %v5492
      %5494 = vmatmul.bf16.gmra.mxu0 %v3083
      %v5495 = vpop.f32.mrf.mxu0
      %v5496 = vadd.f32 %v5407, %v5495
      %v5497 = vpop.f32.mrf.mxu0
      %v5498 = vadd.f32 %v5409, %v5497
      %5499 = vmatmul.bf16.gmra.mxu0 %v3084
      %v5500 = vpop.f32.mrf.mxu0
      %v5501 = vadd.f32 %v5412, %v5500
      %v5502 = vpop.f32.mrf.mxu0
      %v5503 = vadd.f32 %v5414, %v5502
      %5504 = vdwg.mxu0
      %5505 = vmatpush.bf16.msra.mxu0 %v4066
      %5506 = vmatpush.bf16.msra.mxu0 %v4064
      %5507 = vmatpush.bf16.msra.mxu0 %v4062
      %5508 = vmatpush.bf16.msra.mxu0 %v4060
      %5509 = vmatpush.bf16.msra.mxu0 %v4058
      %5510 = vmatpush.bf16.msra.mxu0 %v4056
      %5511 = vmatpush.bf16.msra.mxu0 %v4054
      %5512 = vmatpush.bf16.msra.mxu0 %v4052
      %5513 = vmatmul.bf16.gmra.mxu0 %v3133
      %v5514 = vpop.f32.mrf.mxu0
      %v5515 = vadd.f32 %v5426, %v5514
      %v5516 = vpop.f32.mrf.mxu0
      %v5517 = vadd.f32 %v5428, %v5516
      %5518 = vmatmul.bf16.gmra.mxu0 %v3134
      %v5519 = vpop.f32.mrf.mxu0
      %v5520 = vadd.f32 %v5431, %v5519
      %v5521 = vpop.f32.mrf.mxu0
      %v5522 = vadd.f32 %v5433, %v5521
      %5523 = vmatmul.bf16.gmra.mxu0 %v3135
      %v5524 = vpop.f32.mrf.mxu0
      %v5525 = vadd.f32 %v5436, %v5524
      %v5526 = vpop.f32.mrf.mxu0
      %v5527 = vadd.f32 %v5438, %v5526
      %5528 = vmatmul.bf16.gmra.mxu0 %v3136
      %v5529 = vpop.f32.mrf.mxu0
      %v5530 = vadd.f32 %v5441, %v5529
      %v5531 = vpop.f32.mrf.mxu0
      %v5532 = vadd.f32 %v5443, %v5531
      %5533 = vmatmul.bf16.gmra.mxu0 %v3137
      %v5534 = vpop.f32.mrf.mxu0
      %v5535 = vadd.f32 %v5446, %v5534
      %v5536 = vpop.f32.mrf.mxu0
      %v5537 = vadd.f32 %v5448, %v5536
      %5538 = vmatmul.bf16.gmra.mxu0 %v3138
      %v5539 = vpop.f32.mrf.mxu0
      %v5540 = vadd.f32 %v5451, %v5539
      %v5541 = vpop.f32.mrf.mxu0
      %v5542 = vadd.f32 %v5453, %v5541
      %5543 = vmatmul.bf16.gmra.mxu0 %v3139
      %v5544 = vpop.f32.mrf.mxu0
      %v5545 = vadd.f32 %v5456, %v5544
      %v5546 = vpop.f32.mrf.mxu0
      %v5547 = vadd.f32 %v5458, %v5546
      %5548 = vmatmul.bf16.gmra.mxu0 %v3140
      %v5549 = vpop.f32.mrf.mxu0
      %v5550 = vadd.f32 %v5461, %v5549
      %v5551 = vpop.f32.mrf.mxu0
      %v5552 = vadd.f32 %v5463, %v5551
      %5553 = vmatmul.bf16.gmra.mxu0 %v3141
      %v5554 = vpop.f32.mrf.mxu0
      %v5555 = vadd.f32 %v5466, %v5554
      %v5556 = vpop.f32.mrf.mxu0
      %v5557 = vadd.f32 %v5468, %v5556
      %5558 = vmatmul.bf16.gmra.mxu0 %v3142
      %v5559 = vpop.f32.mrf.mxu0
      %v5560 = vadd.f32 %v5471, %v5559
      %v5561 = vpop.f32.mrf.mxu0
      %v5562 = vadd.f32 %v5473, %v5561
      %5563 = vmatmul.bf16.gmra.mxu0 %v3143
      %v5564 = vpop.f32.mrf.mxu0
      %v5565 = vadd.f32 %v5476, %v5564
      %v5566 = vpop.f32.mrf.mxu0
      %v5567 = vadd.f32 %v5478, %v5566
      %5568 = vmatmul.bf16.gmra.mxu0 %v3144
      %v5569 = vpop.f32.mrf.mxu0
      %v5570 = vadd.f32 %v5481, %v5569
      %v5571 = vpop.f32.mrf.mxu0
      %v5572 = vadd.f32 %v5483, %v5571
      %5573 = vmatmul.bf16.gmra.mxu0 %v3145
      %v5574 = vpop.f32.mrf.mxu0
      %v5575 = vadd.f32 %v5486, %v5574
      %v5576 = vpop.f32.mrf.mxu0
      %v5577 = vadd.f32 %v5488, %v5576
      %5578 = vmatmul.bf16.gmra.mxu0 %v3146
      %v5579 = vpop.f32.mrf.mxu0
      %v5580 = vadd.f32 %v5491, %v5579
      %v5581 = vpop.f32.mrf.mxu0
      %v5582 = vadd.f32 %v5493, %v5581
      %5583 = vmatmul.bf16.gmra.mxu0 %v3147
      %v5584 = vpop.f32.mrf.mxu0
      %v5585 = vadd.f32 %v5496, %v5584
      %v5586 = vpop.f32.mrf.mxu0
      %v5587 = vadd.f32 %v5498, %v5586
      %5588 = vmatmul.bf16.gmra.mxu0 %v3148
      %v5589 = vpop.f32.mrf.mxu0
      %v5590 = vadd.f32 %v5501, %v5589
      %v5591 = vpop.f32.mrf.mxu0
      %v5592 = vadd.f32 %v5503, %v5591
      %5593 = vdwg.mxu0
      %5594 = vmatpush.bf16.msra.mxu0 %v4082
      %5595 = vmatpush.bf16.msra.mxu0 %v4080
      %5596 = vmatpush.bf16.msra.mxu0 %v4078
      %5597 = vmatpush.bf16.msra.mxu0 %v4076
      %5598 = vmatpush.bf16.msra.mxu0 %v4074
      %5599 = vmatpush.bf16.msra.mxu0 %v4072
      %5600 = vmatpush.bf16.msra.mxu0 %v4070
      %5601 = vmatpush.bf16.msra.mxu0 %v4068
      %5602 = vmatmul.bf16.gmra.mxu0 %v3197
      %v5603 = vpop.f32.mrf.mxu0
      %v5604 = vadd.f32 %v5515, %v5603
      %v5605 = vpop.f32.mrf.mxu0
      %v5606 = vadd.f32 %v5517, %v5605
      %5607 = vmatmul.bf16.gmra.mxu0 %v3198
      %v5608 = vpop.f32.mrf.mxu0
      %v5609 = vadd.f32 %v5520, %v5608
      %v5610 = vpop.f32.mrf.mxu0
      %v5611 = vadd.f32 %v5522, %v5610
      %5612 = vmatmul.bf16.gmra.mxu0 %v3199
      %v5613 = vpop.f32.mrf.mxu0
      %v5614 = vadd.f32 %v5525, %v5613
      %v5615 = vpop.f32.mrf.mxu0
      %v5616 = vadd.f32 %v5527, %v5615
      %5617 = vmatmul.bf16.gmra.mxu0 %v3200
      %v5618 = vpop.f32.mrf.mxu0
      %v5619 = vadd.f32 %v5530, %v5618
      %v5620 = vpop.f32.mrf.mxu0
      %v5621 = vadd.f32 %v5532, %v5620
      %5622 = vmatmul.bf16.gmra.mxu0 %v3201
      %v5623 = vpop.f32.mrf.mxu0
      %v5624 = vadd.f32 %v5535, %v5623
      %v5625 = vpop.f32.mrf.mxu0
      %v5626 = vadd.f32 %v5537, %v5625
      %5627 = vmatmul.bf16.gmra.mxu0 %v3202
      %v5628 = vpop.f32.mrf.mxu0
      %v5629 = vadd.f32 %v5540, %v5628
      %v5630 = vpop.f32.mrf.mxu0
      %v5631 = vadd.f32 %v5542, %v5630
      %5632 = vmatmul.bf16.gmra.mxu0 %v3203
      %v5633 = vpop.f32.mrf.mxu0
      %v5634 = vadd.f32 %v5545, %v5633
      %v5635 = vpop.f32.mrf.mxu0
      %v5636 = vadd.f32 %v5547, %v5635
      %5637 = vmatmul.bf16.gmra.mxu0 %v3204
      %v5638 = vpop.f32.mrf.mxu0
      %v5639 = vadd.f32 %v5550, %v5638
      %v5640 = vpop.f32.mrf.mxu0
      %v5641 = vadd.f32 %v5552, %v5640
      %5642 = vmatmul.bf16.gmra.mxu0 %v3205
      %v5643 = vpop.f32.mrf.mxu0
      %v5644 = vadd.f32 %v5555, %v5643
      %v5645 = vpop.f32.mrf.mxu0
      %v5646 = vadd.f32 %v5557, %v5645
      %5647 = vmatmul.bf16.gmra.mxu0 %v3206
      %v5648 = vpop.f32.mrf.mxu0
      %v5649 = vadd.f32 %v5560, %v5648
      %v5650 = vpop.f32.mrf.mxu0
      %v5651 = vadd.f32 %v5562, %v5650
      %5652 = vmatmul.bf16.gmra.mxu0 %v3207
      %v5653 = vpop.f32.mrf.mxu0
      %v5654 = vadd.f32 %v5565, %v5653
      %v5655 = vpop.f32.mrf.mxu0
      %v5656 = vadd.f32 %v5567, %v5655
      %5657 = vmatmul.bf16.gmra.mxu0 %v3208
      %v5658 = vpop.f32.mrf.mxu0
      %v5659 = vadd.f32 %v5570, %v5658
      %v5660 = vpop.f32.mrf.mxu0
      %v5661 = vadd.f32 %v5572, %v5660
      %5662 = vmatmul.bf16.gmra.mxu0 %v3209
      %v5663 = vpop.f32.mrf.mxu0
      %v5664 = vadd.f32 %v5575, %v5663
      %v5665 = vpop.f32.mrf.mxu0
      %v5666 = vadd.f32 %v5577, %v5665
      %5667 = vmatmul.bf16.gmra.mxu0 %v3210
      %v5668 = vpop.f32.mrf.mxu0
      %v5669 = vadd.f32 %v5580, %v5668
      %v5670 = vpop.f32.mrf.mxu0
      %v5671 = vadd.f32 %v5582, %v5670
      %5672 = vmatmul.bf16.gmra.mxu0 %v3211
      %v5673 = vpop.f32.mrf.mxu0
      %v5674 = vadd.f32 %v5585, %v5673
      %v5675 = vpop.f32.mrf.mxu0
      %v5676 = vadd.f32 %v5587, %v5675
      %5677 = vmatmul.bf16.gmra.mxu0 %v3212
      %v5678 = vpop.f32.mrf.mxu0
      %v5679 = vadd.f32 %v5590, %v5678
      %v5680 = vpop.f32.mrf.mxu0
      %v5681 = vadd.f32 %v5592, %v5680
      %5682 = vdwg.mxu0
      %5683 = vmatpush.bf16.msra.mxu0 %v4098
      %5684 = vmatpush.bf16.msra.mxu0 %v4096
      %5685 = vmatpush.bf16.msra.mxu0 %v4094
      %5686 = vmatpush.bf16.msra.mxu0 %v4092
      %5687 = vmatpush.bf16.msra.mxu0 %v4090
      %5688 = vmatpush.bf16.msra.mxu0 %v4088
      %5689 = vmatpush.bf16.msra.mxu0 %v4086
      %5690 = vmatpush.bf16.msra.mxu0 %v4084
      %5691 = vmatmul.bf16.gmra.mxu0 %v3293
      %v5692 = vpop.f32.mrf.mxu0
      %v5693 = vadd.f32 %v5604, %v5692
      %v5694 = vpop.f32.mrf.mxu0
      %v5695 = vadd.f32 %v5606, %v5694
      %5696 = vmatmul.bf16.gmra.mxu0 %v3294
      %v5697 = vpop.f32.mrf.mxu0
      %v5698 = vadd.f32 %v5609, %v5697
      %v5699 = vpop.f32.mrf.mxu0
      %v5700 = vadd.f32 %v5611, %v5699
      %5701 = vmatmul.bf16.gmra.mxu0 %v3295
      %v5702 = vpop.f32.mrf.mxu0
      %v5703 = vadd.f32 %v5614, %v5702
      %v5704 = vpop.f32.mrf.mxu0
      %v5705 = vadd.f32 %v5616, %v5704
      %5706 = vmatmul.bf16.gmra.mxu0 %v3296
      %v5707 = vpop.f32.mrf.mxu0
      %v5708 = vadd.f32 %v5619, %v5707
      %v5709 = vpop.f32.mrf.mxu0
      %v5710 = vadd.f32 %v5621, %v5709
      %5711 = vmatmul.bf16.gmra.mxu0 %v3297
      %v5712 = vpop.f32.mrf.mxu0
      %v5713 = vadd.f32 %v5624, %v5712
      %v5714 = vpop.f32.mrf.mxu0
      %v5715 = vadd.f32 %v5626, %v5714
      %5716 = vmatmul.bf16.gmra.mxu0 %v3298
      %v5717 = vpop.f32.mrf.mxu0
      %v5718 = vadd.f32 %v5629, %v5717
      %v5719 = vpop.f32.mrf.mxu0
      %v5720 = vadd.f32 %v5631, %v5719
      %5721 = vmatmul.bf16.gmra.mxu0 %v3299
      %v5722 = vpop.f32.mrf.mxu0
      %v5723 = vadd.f32 %v5634, %v5722
      %v5724 = vpop.f32.mrf.mxu0
      %v5725 = vadd.f32 %v5636, %v5724
      %5726 = vmatmul.bf16.gmra.mxu0 %v3300
      %v5727 = vpop.f32.mrf.mxu0
      %v5728 = vadd.f32 %v5639, %v5727
      %v5729 = vpop.f32.mrf.mxu0
      %v5730 = vadd.f32 %v5641, %v5729
      %5731 = vmatmul.bf16.gmra.mxu0 %v3301
      %v5732 = vpop.f32.mrf.mxu0
      %v5733 = vadd.f32 %v5644, %v5732
      %v5734 = vpop.f32.mrf.mxu0
      %v5735 = vadd.f32 %v5646, %v5734
      %5736 = vmatmul.bf16.gmra.mxu0 %v3302
      %v5737 = vpop.f32.mrf.mxu0
      %v5738 = vadd.f32 %v5649, %v5737
      %v5739 = vpop.f32.mrf.mxu0
      %v5740 = vadd.f32 %v5651, %v5739
      %5741 = vmatmul.bf16.gmra.mxu0 %v3303
      %v5742 = vpop.f32.mrf.mxu0
      %v5743 = vadd.f32 %v5654, %v5742
      %v5744 = vpop.f32.mrf.mxu0
      %v5745 = vadd.f32 %v5656, %v5744
      %5746 = vmatmul.bf16.gmra.mxu0 %v3304
      %v5747 = vpop.f32.mrf.mxu0
      %v5748 = vadd.f32 %v5659, %v5747
      %v5749 = vpop.f32.mrf.mxu0
      %v5750 = vadd.f32 %v5661, %v5749
      %5751 = vmatmul.bf16.gmra.mxu0 %v3305
      %v5752 = vpop.f32.mrf.mxu0
      %v5753 = vadd.f32 %v5664, %v5752
      %v5754 = vpop.f32.mrf.mxu0
      %v5755 = vadd.f32 %v5666, %v5754
      %5756 = vmatmul.bf16.gmra.mxu0 %v3306
      %v5757 = vpop.f32.mrf.mxu0
      %v5758 = vadd.f32 %v5669, %v5757
      %v5759 = vpop.f32.mrf.mxu0
      %v5760 = vadd.f32 %v5671, %v5759
      %5761 = vmatmul.bf16.gmra.mxu0 %v3307
      %v5762 = vpop.f32.mrf.mxu0
      %v5763 = vadd.f32 %v5674, %v5762
      %v5764 = vpop.f32.mrf.mxu0
      %v5765 = vadd.f32 %v5676, %v5764
      %5766 = vmatmul.bf16.gmra.mxu0 %v3308
      %v5767 = vpop.f32.mrf.mxu0
      %v5768 = vadd.f32 %v5679, %v5767
      %v5769 = vpop.f32.mrf.mxu0
      %v5770 = vadd.f32 %v5681, %v5769
      %5771 = vdwg.mxu0
      %5772 = vmatpush.bf16.msra.mxu0 %v4114
      %5773 = vmatpush.bf16.msra.mxu0 %v4112
      %5774 = vmatpush.bf16.msra.mxu0 %v4110
      %5775 = vmatpush.bf16.msra.mxu0 %v4108
      %5776 = vmatpush.bf16.msra.mxu0 %v4106
      %5777 = vmatpush.bf16.msra.mxu0 %v4104
      %5778 = vmatpush.bf16.msra.mxu0 %v4102
      %5779 = vmatpush.bf16.msra.mxu0 %v4100
      %5780 = vmatmul.bf16.gmra.mxu0 %v3357
      %v5781 = vpop.f32.mrf.mxu0
      %v5782 = vadd.f32 %v5693, %v5781
      %v5783 = vpop.f32.mrf.mxu0
      %v5784 = vadd.f32 %v5695, %v5783
      %5785 = vmatmul.bf16.gmra.mxu0 %v3358
      %v5786 = vpop.f32.mrf.mxu0
      %v5787 = vadd.f32 %v5698, %v5786
      %v5788 = vpop.f32.mrf.mxu0
      %v5789 = vadd.f32 %v5700, %v5788
      %5790 = vmatmul.bf16.gmra.mxu0 %v3359
      %v5791 = vpop.f32.mrf.mxu0
      %v5792 = vadd.f32 %v5703, %v5791
      %v5793 = vpop.f32.mrf.mxu0
      %v5794 = vadd.f32 %v5705, %v5793
      %5795 = vmatmul.bf16.gmra.mxu0 %v3360
      %v5796 = vpop.f32.mrf.mxu0
      %v5797 = vadd.f32 %v5708, %v5796
      %v5798 = vpop.f32.mrf.mxu0
      %v5799 = vadd.f32 %v5710, %v5798
      %5800 = vmatmul.bf16.gmra.mxu0 %v3361
      %v5801 = vpop.f32.mrf.mxu0
      %v5802 = vadd.f32 %v5713, %v5801
      %v5803 = vpop.f32.mrf.mxu0
      %v5804 = vadd.f32 %v5715, %v5803
      %5805 = vmatmul.bf16.gmra.mxu0 %v3362
      %v5806 = vpop.f32.mrf.mxu0
      %v5807 = vadd.f32 %v5718, %v5806
      %v5808 = vpop.f32.mrf.mxu0
      %v5809 = vadd.f32 %v5720, %v5808
      %5810 = vmatmul.bf16.gmra.mxu0 %v3363
      %v5811 = vpop.f32.mrf.mxu0
      %v5812 = vadd.f32 %v5723, %v5811
      %v5813 = vpop.f32.mrf.mxu0
      %v5814 = vadd.f32 %v5725, %v5813
      %5815 = vmatmul.bf16.gmra.mxu0 %v3364
      %v5816 = vpop.f32.mrf.mxu0
      %v5817 = vadd.f32 %v5728, %v5816
      %v5818 = vpop.f32.mrf.mxu0
      %v5819 = vadd.f32 %v5730, %v5818
      %5820 = vmatmul.bf16.gmra.mxu0 %v3365
      %v5821 = vpop.f32.mrf.mxu0
      %v5822 = vadd.f32 %v5733, %v5821
      %v5823 = vpop.f32.mrf.mxu0
      %v5824 = vadd.f32 %v5735, %v5823
      %5825 = vmatmul.bf16.gmra.mxu0 %v3366
      %v5826 = vpop.f32.mrf.mxu0
      %v5827 = vadd.f32 %v5738, %v5826
      %v5828 = vpop.f32.mrf.mxu0
      %v5829 = vadd.f32 %v5740, %v5828
      %5830 = vmatmul.bf16.gmra.mxu0 %v3367
      %v5831 = vpop.f32.mrf.mxu0
      %v5832 = vadd.f32 %v5743, %v5831
      %v5833 = vpop.f32.mrf.mxu0
      %v5834 = vadd.f32 %v5745, %v5833
      %5835 = vmatmul.bf16.gmra.mxu0 %v3368
      %v5836 = vpop.f32.mrf.mxu0
      %v5837 = vadd.f32 %v5748, %v5836
      %v5838 = vpop.f32.mrf.mxu0
      %v5839 = vadd.f32 %v5750, %v5838
      %5840 = vmatmul.bf16.gmra.mxu0 %v3369
      %v5841 = vpop.f32.mrf.mxu0
      %v5842 = vadd.f32 %v5753, %v5841
      %v5843 = vpop.f32.mrf.mxu0
      %v5844 = vadd.f32 %v5755, %v5843
      %5845 = vmatmul.bf16.gmra.mxu0 %v3370
      %v5846 = vpop.f32.mrf.mxu0
      %v5847 = vadd.f32 %v5758, %v5846
      %v5848 = vpop.f32.mrf.mxu0
      %v5849 = vadd.f32 %v5760, %v5848
      %5850 = vmatmul.bf16.gmra.mxu0 %v3371
      %v5851 = vpop.f32.mrf.mxu0
      %v5852 = vadd.f32 %v5763, %v5851
      %v5853 = vpop.f32.mrf.mxu0
      %v5854 = vadd.f32 %v5765, %v5853
      %5855 = vmatmul.bf16.gmra.mxu0 %v3372
      %v5856 = vpop.f32.mrf.mxu0
      %v5857 = vadd.f32 %v5768, %v5856
      %v5858 = vpop.f32.mrf.mxu0
      %v5859 = vadd.f32 %v5770, %v5858
      %5860 = vdwg.mxu0
      %v5861 = vmax.f32 %v4981, 0.0
      %v5862 = vmax.f32 %v5782, 0.0
      %v5863 = vmax.f32 %v4983, 0.0
      %v5864 = vmax.f32 %v5784, 0.0
      %v5865 = vmax.f32 %v4986, 0.0
      %v5866 = vmax.f32 %v5787, 0.0
      %v5867 = vmax.f32 %v4988, 0.0
      %v5868 = vmax.f32 %v5789, 0.0
      %v5869 = vmax.f32 %v4991, 0.0
      %v5870 = vmax.f32 %v5792, 0.0
      %v5871 = vmax.f32 %v4993, 0.0
      %v5872 = vmax.f32 %v5794, 0.0
      %v5873 = vmax.f32 %v4996, 0.0
      %v5874 = vmax.f32 %v5797, 0.0
      %v5875 = vmax.f32 %v4998, 0.0
      %v5876 = vmax.f32 %v5799, 0.0
      %v5877 = vmax.f32 %v5001, 0.0
      %v5878 = vmax.f32 %v5802, 0.0
      %v5879 = vmax.f32 %v5003, 0.0
      %v5880 = vmax.f32 %v5804, 0.0
      %v5881 = vmax.f32 %v5006, 0.0
      %v5882 = vmax.f32 %v5807, 0.0
      %v5883 = vmax.f32 %v5008, 0.0
      %v5884 = vmax.f32 %v5809, 0.0
      %v5885 = vmax.f32 %v5011, 0.0
      %v5886 = vmax.f32 %v5812, 0.0
      %v5887 = vmax.f32 %v5013, 0.0
      %v5888 = vmax.f32 %v5814, 0.0
      %v5889 = vmax.f32 %v5016, 0.0
      %v5890 = vmax.f32 %v5817, 0.0
      %v5891 = vmax.f32 %v5018, 0.0
      %v5892 = vmax.f32 %v5819, 0.0
      %v5893 = vmax.f32 %v5021, 0.0
      %v5894 = vmax.f32 %v5822, 0.0
      %v5895 = vmax.f32 %v5023, 0.0
      %v5896 = vmax.f32 %v5824, 0.0
      %v5897 = vmax.f32 %v5026, 0.0
      %v5898 = vmax.f32 %v5827, 0.0
      %v5899 = vmax.f32 %v5028, 0.0
      %v5900 = vmax.f32 %v5829, 0.0
      %v5901 = vmax.f32 %v5031, 0.0
      %v5902 = vmax.f32 %v5832, 0.0
      %v5903 = vmax.f32 %v5033, 0.0
      %v5904 = vmax.f32 %v5834, 0.0
      %v5905 = vmax.f32 %v5036, 0.0
      %v5906 = vmax.f32 %v5837, 0.0
      %v5907 = vmax.f32 %v5038, 0.0
      %v5908 = vmax.f32 %v5839, 0.0
      %v5909 = vmax.f32 %v5041, 0.0
      %v5910 = vmax.f32 %v5842, 0.0
      %v5911 = vmax.f32 %v5043, 0.0
      %v5912 = vmax.f32 %v5844, 0.0
      %v5913 = vmax.f32 %v5046, 0.0
      %v5914 = vmax.f32 %v5847, 0.0
      %v5915 = vmax.f32 %v5048, 0.0
      %v5916 = vmax.f32 %v5849, 0.0
      %v5917 = vmax.f32 %v5051, 0.0
      %v5918 = vmax.f32 %v5852, 0.0
      %v5919 = vmax.f32 %v5053, 0.0
      %v5920 = vmax.f32 %v5854, 0.0
      %v5921 = vmax.f32 %v5056, 0.0
      %v5922 = vmax.f32 %v5857, 0.0
      %v5923 = vmax.f32 %v5058, 0.0
      %v5924 = vmax.f32 %v5859, 0.0
      %v5925 = vpack.c.bf16 %v5863, %v5861
      %v5926 = vpack.c.bf16 %v5864, %v5862
      %v5927 = vpack.c.bf16 %v5867, %v5865
      %v5928 = vpack.c.bf16 %v5868, %v5866
      %v5929 = vpack.c.bf16 %v5871, %v5869
      %v5930 = vpack.c.bf16 %v5872, %v5870
      %v5931 = vpack.c.bf16 %v5875, %v5873
      %v5932 = vpack.c.bf16 %v5876, %v5874
      %v5933 = vpack.c.bf16 %v5879, %v5877
      %v5934 = vpack.c.bf16 %v5880, %v5878
      %v5935 = vpack.c.bf16 %v5883, %v5881
      %v5936 = vpack.c.bf16 %v5884, %v5882
      %v5937 = vpack.c.bf16 %v5887, %v5885
      %v5938 = vpack.c.bf16 %v5888, %v5886
      %v5939 = vpack.c.bf16 %v5891, %v5889
      %v5940 = vpack.c.bf16 %v5892, %v5890
      %v5941 = vpack.c.bf16 %v5895, %v5893
      %v5942 = vpack.c.bf16 %v5896, %v5894
      %v5943 = vpack.c.bf16 %v5899, %v5897
      %v5944 = vpack.c.bf16 %v5900, %v5898
      %v5945 = vpack.c.bf16 %v5903, %v5901
      %v5946 = vpack.c.bf16 %v5904, %v5902
      %v5947 = vpack.c.bf16 %v5907, %v5905
      %v5948 = vpack.c.bf16 %v5908, %v5906
      %v5949 = vpack.c.bf16 %v5911, %v5909
      %v5950 = vpack.c.bf16 %v5912, %v5910
      %v5951 = vpack.c.bf16 %v5915, %v5913
      %v5952 = vpack.c.bf16 %v5916, %v5914
      %v5953 = vpack.c.bf16 %v5919, %v5917
      %v5954 = vpack.c.bf16 %v5920, %v5918
      %v5955 = vpack.c.bf16 %v5923, %v5921
      %v5956 = vpack.c.bf16 %v5924, %v5922
      %v5957 = vld [vmem:[%s5] sm:$0xf]
      %v5958 = vld [vmem:[%s5 + $0x4] sm:$0xf]
      %v5959 = vld [vmem:[%s5 + $0x8] sm:$0xf]
      %v5960 = vld [vmem:[%s5 + $0xc] sm:$0xf]
      %v5961 = vld [vmem:[%s5 + $0x10] sm:$0xf]
      %v5962 = vld [vmem:[%s5 + $0x14] sm:$0xf]
      %v5963 = vld [vmem:[%s5 + $0x18] sm:$0xf]
      %v5964 = vld [vmem:[%s5 + $0x1c] sm:$0xf]
      %v5965 = vld [vmem:[%s5 + $0x20] sm:$0xf]
      %v5966 = vld [vmem:[%s5 + $0x24] sm:$0xf]
      %v5967 = vld [vmem:[%s5 + $0x28] sm:$0xf]
      %v5968 = vld [vmem:[%s5 + $0x2c] sm:$0xf]
      %v5969 = vld [vmem:[%s5 + $0x30] sm:$0xf]
      %v5970 = vld [vmem:[%s5 + $0x34] sm:$0xf]
      %v5971 = vld [vmem:[%s5 + $0x38] sm:$0xf]
      %v5972 = vld [vmem:[%s5 + $0x3c] sm:$0xf]
      %v5973 = vld [vmem:[%s5 + $0x40] sm:$0xf]
      %v5974 = vld [vmem:[%s5 + $0x44] sm:$0xf]
      %v5975 = vld [vmem:[%s5 + $0x48] sm:$0xf]
      %v5976 = vld [vmem:[%s5 + $0x4c] sm:$0xf]
      %v5977 = vld [vmem:[%s5 + $0x50] sm:$0xf]
      %v5978 = vld [vmem:[%s5 + $0x54] sm:$0xf]
      %v5979 = vld [vmem:[%s5 + $0x58] sm:$0xf]
      %v5980 = vld [vmem:[%s5 + $0x5c] sm:$0xf]
      %v5981 = vld [vmem:[%s5 + $0x60] sm:$0xf]
      %v5982 = vld [vmem:[%s5 + $0x64] sm:$0xf]
      %v5983 = vld [vmem:[%s5 + $0x68] sm:$0xf]
      %v5984 = vld [vmem:[%s5 + $0x6c] sm:$0xf]
      %v5985 = vld [vmem:[%s5 + $0x70] sm:$0xf]
      %v5986 = vld [vmem:[%s5 + $0x74] sm:$0xf]
      %v5987 = vld [vmem:[%s5 + $0x78] sm:$0xf]
      %v5988 = vld [vmem:[%s5 + $0x7c] sm:$0xf]
      %v5989 = vld [vmem:[%s6] sm:$0x1]
      %v5991 = vperm.slane %v5989, 0
      %v6025 = vunpack.c.l.b16 %v5957
      %v6026 = vunpack.c.l.b16 %v5958
      %v6027 = vunpack.c.l.b16 %v5959
      %v6028 = vunpack.c.l.b16 %v5960
      %v6029 = vunpack.c.l.b16 %v5961
      %v6030 = vunpack.c.l.b16 %v5962
      %v6031 = vunpack.c.l.b16 %v5963
      %v6032 = vunpack.c.l.b16 %v5964
      %v6033 = vunpack.c.l.b16 %v5965
      %v6034 = vunpack.c.l.b16 %v5966
      %v6035 = vunpack.c.l.b16 %v5967
      %v6036 = vunpack.c.l.b16 %v5968
      %v6037 = vunpack.c.l.b16 %v5969
      %v6038 = vunpack.c.l.b16 %v5970
      %v6039 = vunpack.c.l.b16 %v5971
      %v6040 = vunpack.c.l.b16 %v5972
      %v6041 = vunpack.c.l.b16 %v5973
      %v6042 = vunpack.c.l.b16 %v5974
      %v6043 = vunpack.c.l.b16 %v5975
      %v6044 = vunpack.c.l.b16 %v5976
      %v6045 = vunpack.c.l.b16 %v5977
      %v6046 = vunpack.c.l.b16 %v5978
      %v6047 = vunpack.c.l.b16 %v5979
      %v6048 = vunpack.c.l.b16 %v5980
      %v6049 = vunpack.c.l.b16 %v5981
      %v6050 = vunpack.c.l.b16 %v5982
      %v6051 = vunpack.c.l.b16 %v5983
      %v6052 = vunpack.c.l.b16 %v5984
      %v6053 = vunpack.c.l.b16 %v5985
      %v6054 = vunpack.c.l.b16 %v5986
      %v6055 = vunpack.c.l.b16 %v5987
      %v6056 = vunpack.c.l.b16 %v5988
      %v6057 = vpack.c.b16 %v6026, %v6025
      %v6058 = vpack.c.b16 %v6028, %v6027
      %v6059 = vpack.c.b16 %v6030, %v6029
      %v6060 = vpack.c.b16 %v6032, %v6031
      %v6061 = vpack.c.b16 %v6034, %v6033
      %v6062 = vpack.c.b16 %v6036, %v6035
      %v6063 = vpack.c.b16 %v6038, %v6037
      %v6064 = vpack.c.b16 %v6040, %v6039
      %v6065 = vpack.c.b16 %v6042, %v6041
      %v6066 = vpack.c.b16 %v6044, %v6043
      %v6067 = vpack.c.b16 %v6046, %v6045
      %v6068 = vpack.c.b16 %v6048, %v6047
      %v6069 = vpack.c.b16 %v6050, %v6049
      %v6070 = vpack.c.b16 %v6052, %v6051
      %v6071 = vpack.c.b16 %v6054, %v6053
      %v6072 = vpack.c.b16 %v6056, %v6055
      %6089 = vmatpush.bf16.msra.mxu0 %v6064
      %6090 = vmatpush.bf16.msra.mxu0 %v6063
      %6091 = vmatpush.bf16.msra.mxu0 %v6062
      %6092 = vmatpush.bf16.msra.mxu0 %v6061
      %6093 = vmatpush.bf16.msra.mxu0 %v6060
      %6094 = vmatpush.bf16.msra.mxu0 %v6059
      %6095 = vmatpush.bf16.msra.mxu0 %v6058
      %6096 = vmatpush.bf16.msra.mxu0 %v6057
      %6097 = vmatmul.bf16.gmra.mxu0 %v5925
      %v6098 = vpop.f32.mrf.mxu0
      %v6099 = vadd.f32 %v5991, %v6098
      %v6100 = vpop.f32.mrf.mxu0
      %v6101 = vadd.f32 %v5991, %v6100
      %6102 = vmatmul.bf16.gmra.mxu0 %v5927
      %v6103 = vpop.f32.mrf.mxu0
      %v6104 = vadd.f32 %v5991, %v6103
      %v6105 = vpop.f32.mrf.mxu0
      %v6106 = vadd.f32 %v5991, %v6105
      %6107 = vmatmul.bf16.gmra.mxu0 %v5929
      %v6108 = vpop.f32.mrf.mxu0
      %v6109 = vadd.f32 %v5991, %v6108
      %v6110 = vpop.f32.mrf.mxu0
      %v6111 = vadd.f32 %v5991, %v6110
      %6112 = vmatmul.bf16.gmra.mxu0 %v5931
      %v6113 = vpop.f32.mrf.mxu0
      %v6114 = vadd.f32 %v5991, %v6113
      %v6115 = vpop.f32.mrf.mxu0
      %v6116 = vadd.f32 %v5991, %v6115
      %6117 = vmatmul.bf16.gmra.mxu0 %v5933
      %v6118 = vpop.f32.mrf.mxu0
      %v6119 = vadd.f32 %v5991, %v6118
      %v6120 = vpop.f32.mrf.mxu0
      %v6121 = vadd.f32 %v5991, %v6120
      %6122 = vmatmul.bf16.gmra.mxu0 %v5935
      %v6123 = vpop.f32.mrf.mxu0
      %v6124 = vadd.f32 %v5991, %v6123
      %v6125 = vpop.f32.mrf.mxu0
      %v6126 = vadd.f32 %v5991, %v6125
      %6127 = vmatmul.bf16.gmra.mxu0 %v5937
      %v6128 = vpop.f32.mrf.mxu0
      %v6129 = vadd.f32 %v5991, %v6128
      %v6130 = vpop.f32.mrf.mxu0
      %v6131 = vadd.f32 %v5991, %v6130
      %6132 = vmatmul.bf16.gmra.mxu0 %v5939
      %v6133 = vpop.f32.mrf.mxu0
      %v6134 = vadd.f32 %v5991, %v6133
      %v6135 = vpop.f32.mrf.mxu0
      %v6136 = vadd.f32 %v5991, %v6135
      %6137 = vmatmul.bf16.gmra.mxu0 %v5941
      %v6138 = vpop.f32.mrf.mxu0
      %v6139 = vadd.f32 %v5991, %v6138
      %v6140 = vpop.f32.mrf.mxu0
      %v6141 = vadd.f32 %v5991, %v6140
      %6142 = vmatmul.bf16.gmra.mxu0 %v5943
      %v6143 = vpop.f32.mrf.mxu0
      %v6144 = vadd.f32 %v5991, %v6143
      %v6145 = vpop.f32.mrf.mxu0
      %v6146 = vadd.f32 %v5991, %v6145
      %6147 = vmatmul.bf16.gmra.mxu0 %v5945
      %v6148 = vpop.f32.mrf.mxu0
      %v6149 = vadd.f32 %v5991, %v6148
      %v6150 = vpop.f32.mrf.mxu0
      %v6151 = vadd.f32 %v5991, %v6150
      %6152 = vmatmul.bf16.gmra.mxu0 %v5947
      %v6153 = vpop.f32.mrf.mxu0
      %v6154 = vadd.f32 %v5991, %v6153
      %v6155 = vpop.f32.mrf.mxu0
      %v6156 = vadd.f32 %v5991, %v6155
      %6157 = vmatmul.bf16.gmra.mxu0 %v5949
      %v6158 = vpop.f32.mrf.mxu0
      %v6159 = vadd.f32 %v5991, %v6158
      %v6160 = vpop.f32.mrf.mxu0
      %v6161 = vadd.f32 %v5991, %v6160
      %6162 = vmatmul.bf16.gmra.mxu0 %v5951
      %v6163 = vpop.f32.mrf.mxu0
      %v6164 = vadd.f32 %v5991, %v6163
      %v6165 = vpop.f32.mrf.mxu0
      %v6166 = vadd.f32 %v5991, %v6165
      %6167 = vmatmul.bf16.gmra.mxu0 %v5953
      %v6168 = vpop.f32.mrf.mxu0
      %v6169 = vadd.f32 %v5991, %v6168
      %v6170 = vpop.f32.mrf.mxu0
      %v6171 = vadd.f32 %v5991, %v6170
      %6172 = vmatmul.bf16.gmra.mxu0 %v5955
      %v6173 = vpop.f32.mrf.mxu0
      %v6174 = vadd.f32 %v5991, %v6173
      %v6175 = vpop.f32.mrf.mxu0
      %v6176 = vadd.f32 %v5991, %v6175
      %6177 = vdwg.mxu0
      %6178 = vmatpush.bf16.msra.mxu0 %v6072
      %6179 = vmatpush.bf16.msra.mxu0 %v6071
      %6180 = vmatpush.bf16.msra.mxu0 %v6070
      %6181 = vmatpush.bf16.msra.mxu0 %v6069
      %6182 = vmatpush.bf16.msra.mxu0 %v6068
      %6183 = vmatpush.bf16.msra.mxu0 %v6067
      %6184 = vmatpush.bf16.msra.mxu0 %v6066
      %6185 = vmatpush.bf16.msra.mxu0 %v6065
      %6186 = vmatmul.bf16.gmra.mxu0 %v5926
      %v6187 = vpop.f32.mrf.mxu0
      %v6188 = vadd.f32 %v6099, %v6187
      %v6189 = vpop.f32.mrf.mxu0
      %v6190 = vadd.f32 %v6101, %v6189
      %6191 = vmatmul.bf16.gmra.mxu0 %v5928
      %v6192 = vpop.f32.mrf.mxu0
      %v6193 = vadd.f32 %v6104, %v6192
      %v6194 = vpop.f32.mrf.mxu0
      %v6195 = vadd.f32 %v6106, %v6194
      %6196 = vmatmul.bf16.gmra.mxu0 %v5930
      %v6197 = vpop.f32.mrf.mxu0
      %v6198 = vadd.f32 %v6109, %v6197
      %v6199 = vpop.f32.mrf.mxu0
      %v6200 = vadd.f32 %v6111, %v6199
      %6201 = vmatmul.bf16.gmra.mxu0 %v5932
      %v6202 = vpop.f32.mrf.mxu0
      %v6203 = vadd.f32 %v6114, %v6202
      %v6204 = vpop.f32.mrf.mxu0
      %v6205 = vadd.f32 %v6116, %v6204
      %6206 = vmatmul.bf16.gmra.mxu0 %v5934
      %v6207 = vpop.f32.mrf.mxu0
      %v6208 = vadd.f32 %v6119, %v6207
      %v6209 = vpop.f32.mrf.mxu0
      %v6210 = vadd.f32 %v6121, %v6209
      %6211 = vmatmul.bf16.gmra.mxu0 %v5936
      %v6212 = vpop.f32.mrf.mxu0
      %v6213 = vadd.f32 %v6124, %v6212
      %v6214 = vpop.f32.mrf.mxu0
      %v6215 = vadd.f32 %v6126, %v6214
      %6216 = vmatmul.bf16.gmra.mxu0 %v5938
      %v6217 = vpop.f32.mrf.mxu0
      %v6218 = vadd.f32 %v6129, %v6217
      %v6219 = vpop.f32.mrf.mxu0
      %v6220 = vadd.f32 %v6131, %v6219
      %6221 = vmatmul.bf16.gmra.mxu0 %v5940
      %v6222 = vpop.f32.mrf.mxu0
      %v6223 = vadd.f32 %v6134, %v6222
      %v6224 = vpop.f32.mrf.mxu0
      %v6225 = vadd.f32 %v6136, %v6224
      %6226 = vmatmul.bf16.gmra.mxu0 %v5942
      %v6227 = vpop.f32.mrf.mxu0
      %v6228 = vadd.f32 %v6139, %v6227
      %v6229 = vpop.f32.mrf.mxu0
      %v6230 = vadd.f32 %v6141, %v6229
      %6231 = vmatmul.bf16.gmra.mxu0 %v5944
      %v6232 = vpop.f32.mrf.mxu0
      %v6233 = vadd.f32 %v6144, %v6232
      %v6234 = vpop.f32.mrf.mxu0
      %v6235 = vadd.f32 %v6146, %v6234
      %6236 = vmatmul.bf16.gmra.mxu0 %v5946
      %v6237 = vpop.f32.mrf.mxu0
      %v6238 = vadd.f32 %v6149, %v6237
      %v6239 = vpop.f32.mrf.mxu0
      %v6240 = vadd.f32 %v6151, %v6239
      %6241 = vmatmul.bf16.gmra.mxu0 %v5948
      %v6242 = vpop.f32.mrf.mxu0
      %v6243 = vadd.f32 %v6154, %v6242
      %v6244 = vpop.f32.mrf.mxu0
      %v6245 = vadd.f32 %v6156, %v6244
      %6246 = vmatmul.bf16.gmra.mxu0 %v5950
      %v6247 = vpop.f32.mrf.mxu0
      %v6248 = vadd.f32 %v6159, %v6247
      %v6249 = vpop.f32.mrf.mxu0
      %v6250 = vadd.f32 %v6161, %v6249
      %6251 = vmatmul.bf16.gmra.mxu0 %v5952
      %v6252 = vpop.f32.mrf.mxu0
      %v6253 = vadd.f32 %v6164, %v6252
      %v6254 = vpop.f32.mrf.mxu0
      %v6255 = vadd.f32 %v6166, %v6254
      %6256 = vmatmul.bf16.gmra.mxu0 %v5954
      %v6257 = vpop.f32.mrf.mxu0
      %v6258 = vadd.f32 %v6169, %v6257
      %v6259 = vpop.f32.mrf.mxu0
      %v6260 = vadd.f32 %v6171, %v6259
      %6261 = vmatmul.bf16.gmra.mxu0 %v5956
      %v6262 = vpop.f32.mrf.mxu0
      %v6263 = vadd.f32 %v6174, %v6262
      %v6264 = vpop.f32.mrf.mxu0
      %v6265 = vadd.f32 %v6176, %v6264
      %6266 = vdwg.mxu0
      %6267 = vst [vmem:[%s278] sm:$0xff] %v6188
      %6268 = vst [vmem:[%s278 + $0x8] sm:$0xff] %v6190
      %6269 = vst [vmem:[%s278 + $0x10] sm:$0xff] %v6193
      %6270 = vst [vmem:[%s278 + $0x18] sm:$0xff] %v6195
      %6271 = vst [vmem:[%s278 + $0x20] sm:$0xff] %v6198
      %6272 = vst [vmem:[%s278 + $0x28] sm:$0xff] %v6200
      %6273 = vst [vmem:[%s278 + $0x30] sm:$0xff] %v6203
      %6274 = vst [vmem:[%s278 + $0x38] sm:$0xff] %v6205
      %6275 = vst [vmem:[%s278 + $0x40] sm:$0xff] %v6208
      %6276 = vst [vmem:[%s278 + $0x48] sm:$0xff] %v6210
      %6277 = vst [vmem:[%s278 + $0x50] sm:$0xff] %v6213
      %6278 = vst [vmem:[%s278 + $0x58] sm:$0xff] %v6215
      %6279 = vst [vmem:[%s278 + $0x60] sm:$0xff] %v6218
      %6280 = vst [vmem:[%s278 + $0x68] sm:$0xff] %v6220
      %6281 = vst [vmem:[%s278 + $0x70] sm:$0xff] %v6223
      %6282 = vst [vmem:[%s278 + $0x78] sm:$0xff] %v6225
      %6283 = vst [vmem:[%s278 + $0x80] sm:$0xff] %v6228
      %6284 = vst [vmem:[%s278 + $0x88] sm:$0xff] %v6230
      %6285 = vst [vmem:[%s278 + $0x90] sm:$0xff] %v6233
      %6286 = vst [vmem:[%s278 + $0x98] sm:$0xff] %v6235
      %6287 = vst [vmem:[%s278 + $0xa0] sm:$0xff] %v6238
      %6288 = vst [vmem:[%s278 + $0xa8] sm:$0xff] %v6240
      %6289 = vst [vmem:[%s278 + $0xb0] sm:$0xff] %v6243
      %6290 = vst [vmem:[%s278 + $0xb8] sm:$0xff] %v6245
      %6291 = vst [vmem:[%s278 + $0xc0] sm:$0xff] %v6248
      %6292 = vst [vmem:[%s278 + $0xc8] sm:$0xff] %v6250
      %6293 = vst [vmem:[%s278 + $0xd0] sm:$0xff] %v6253
      %6294 = vst [vmem:[%s278 + $0xd8] sm:$0xff] %v6255
      %6295 = vst [vmem:[%s278 + $0xe0] sm:$0xff] %v6258
      %6296 = vst [vmem:[%s278 + $0xe8] sm:$0xff] %v6260
      %6297 = vst [vmem:[%s278 + $0xf0] sm:$0xff] %v6263
      %6298 = vst [vmem:[%s278 + $0xf8] sm:$0xff] %v6265
      %p6299 = scmp.lt.s32.totalorder %s18, 1
      %s6300 = scalar_select %p6299, %s18, 1
      %s6301 = smul.addr %s6300, 32
      %s6302 = smul.addr %s6301, 8
      %s6303 = scalar_lea.vmem %s7, %s6302
      // Predicated region
      $region49: #{model_builder_forward.1} parent=47 // pred_check
        %p6304 = pneg %p188
      $region50: #{model_builder_forward.1} parent=47 // pred_check_branch
        %6306 = sbr.rel (%p6304) target = $region52
      $region51: #{model_builder_forward.1} parent=47 // pred_region
        _
      $region52: #{model_builder_forward.1} parent=47 // pred_fallthru
        _
    $region48: #{model_builder_forward.1} parent=5 // pred_fallthru
      _
    %p6307 = scmp.le.s32.totalorder 2, %s13
    // Predicated region
    $region53: #{model_builder_forward.1} parent=5 // pred_check
      %p6308 = pneg %p6307
    $region54: #{model_builder_forward.1} parent=5 // pred_check_branch
      %6310 = sbr.rel (%p6308) target = $region56
    $region55: #{model_builder_forward.1} parent=5 // pred_region
      %s6311 = ssub.s32 %s13, 2
      // Predicated region
      $region57: #{model_builder_forward.1} parent=55 // pred_check
        %p6312 = pneg %p194
      $region58: #{model_builder_forward.1} parent=55 // pred_check_branch
        %6314 = sbr.rel (%p6312) target = $region60
      $region59: #{model_builder_forward.1} parent=55 // pred_region
        %p6315 = scmp.lt.s32.totalorder %s19, 1
        %s6316 = scalar_select %p6315, %s19, 1
        %s6317 = smul.addr %s6316, 32
        %s6318 = smul.addr %s6317, 8
        %s6319 = scalar_lea.vmem %s7, %s6318
      $region60: #{model_builder_forward.1} parent=55 // pred_fallthru
        _
    $region56: #{model_builder_forward.1} parent=5 // pred_fallthru
      _
  $region6: #{model_builder_forward.1} parent=0 // loop_footer
    %s17 = sadd.s32 1, %s13
  $region7: #{model_builder_forward.1} parent=0 // loop_footer_branch
    %12 = sbr.rel target = $region3
  $region8: #{model_builder_forward.1} parent=0 // loop_exit
    _

</llo_original>
